<compile_context>
chip_gen: v6e
topology: v6e:2x2x1
jax: 0.10.0
libtpu: 0.0.40
codegen_flags: <defaults>
</compile_context>

<pallas_src>
import jax
import jax.numpy as jnp
from jax.experimental import pallas as pl
from jax.experimental.pallas import tpu as pltpu

D_MODEL = 64
NHEAD = 8
DIM_FF = 64
EPS = 1e-5


def _batchnorm_rows(x, gamma_row, beta_row):
    # x: (N, D); normalize each channel over the N rows (biased variance).
    # Centered tensor computed once and reused for variance + normalization.
    mean = jnp.mean(x, axis=0, keepdims=True)                 # (1, D)
    xc = x - mean                                             # (N, D)
    var = jnp.mean(xc * xc, axis=0, keepdims=True)            # (1, D)
    inv = jax.lax.rsqrt(var + EPS)                            # (1, D)
    return xc * (inv * gamma_row) + beta_row


def encoder_layer_kernel(
    x_ref,              # (S, B*D)  lane-dense input, row s, col b*D+d
    wqkv_ref,           # (D, 3D)   in_proj_weight.T
    bqkv_ref,           # (1, 3D)   in_proj_bias
    wo_ref,             # (D, D)    out_proj.weight.T
    bo_ref,             # (1, D)    out_proj.bias
    g1_ref, b1_ref,     # (1, D)    norm1 gamma / beta
    w1_ref, fb1_ref,    # (D, Dff), (1, Dff)   linear1 (weight.T)
    w2_ref, fb2_ref,    # (Dff, D), (1, D)     linear2 (weight.T)
    g2_ref, b2_ref,     # (1, D)    norm2 gamma / beta
    o_ref,              # (S, B*D)  lane-dense output
):
    S, BD = x_ref.shape
    D = D_MODEL
    B = BD // D
    H = NHEAD
    hd = D // H
    N = S * B

    x2d = x_ref[...].astype(jnp.float32)                      # (S, B*D)
    # Internal row layout is (b, s)-major so B is a leading batch dim for the
    # attention matmuls.  Built from B lane-aligned width-D slices.
    x = jnp.concatenate([x2d[:, b * D:(b + 1) * D] for b in range(B)], axis=0)  # (N, D)

    # --- fused QKV projection: one MXU matmul + one (1,3D) bias broadcast ---
    qkv = jnp.dot(x, wqkv_ref[...], preferred_element_type=jnp.float32) + bqkv_ref[...]  # (N, 3D)

    scale = 1.0 / (float(hd) ** 0.5)
    q3 = (qkv[:, 0:D] * scale).reshape(B, S, D)                # scale applied once
    k3 = qkv[:, D:2 * D].reshape(B, S, D)
    v3 = qkv[:, 2 * D:3 * D].reshape(B, S, D)

    # --- batched scaled dot-product attention over (b, h) as one batch dim ---
    # (B*H, S, hd) operands; batch index n = h*B + b.
    qbh = jnp.concatenate([q3[:, :, h * hd:(h + 1) * hd] for h in range(H)], axis=0)
    kbh = jnp.concatenate([k3[:, :, h * hd:(h + 1) * hd] for h in range(H)], axis=0)
    vbh = jnp.concatenate([v3[:, :, h * hd:(h + 1) * hd] for h in range(H)], axis=0)

    scores = jnp.einsum('nqe,nke->nqk', qbh, kbh,
                        preferred_element_type=jnp.float32)    # (B*H, S, S)
    scores = scores - jnp.max(scores, axis=-1, keepdims=True)
    p = jnp.exp(scores)
    p = p * pl.reciprocal(jnp.sum(p, axis=-1, keepdims=True), approx=True)
    ctxbh = jnp.einsum('nqk,nke->nqe', p, vbh,
                       preferred_element_type=jnp.float32)     # (B*H, S, hd)

    # Re-assemble heads back into (N, D), rows still in (b, s) order.
    ctx = jnp.concatenate([ctxbh[h * B:(h + 1) * B] for h in range(H)], axis=-1)  # (B, S, D)
    ctxf = ctx.reshape(N, D)

    # --- attention output projection ---
    attn_out = jnp.dot(ctxf, wo_ref[...], preferred_element_type=jnp.float32) + bo_ref[...]

    # --- residual + BatchNorm1 ---
    x1 = x + attn_out
    y1 = _batchnorm_rows(x1, g1_ref[...], b1_ref[...])

    # --- feed-forward: linear1 -> relu -> linear2 ---
    h1 = jnp.dot(y1, w1_ref[...], preferred_element_type=jnp.float32) + fb1_ref[...]
    h1 = jnp.maximum(h1, 0.0)
    ff = jnp.dot(h1, w2_ref[...], preferred_element_type=jnp.float32) + fb2_ref[...]

    # --- residual + BatchNorm2 ---
    x2 = y1 + ff
    y2 = _batchnorm_rows(x2, g2_ref[...], b2_ref[...])

    # Back to lane-dense (S, B*D) output: column block b holds batch b.
    y3 = y2.reshape(B, S, D)
    out2d = jnp.concatenate([y3[b] for b in range(B)], axis=-1)  # (S, B*D)
    o_ref[...] = out2d.astype(o_ref.dtype)


def transformer_bn_encoder_layer(src, params):
    S, B, D = src.shape
    assert D == D_MODEL
    # Lane-dense (S, B*D) view of the row-major (S, B, D) input — free reshape.
    x2d = src.reshape(S, B * D)
    args = (
        x2d,
        params['in_proj_w'].T,    # (D, 3D)
        params['in_proj_b'],      # (1, 3D)
        params['out_proj_w'].T,   # (D, D)
        params['out_proj_b'],     # (1, D)
        params['bn1_g'], params['bn1_b'],
        params['lin1_w'].T,       # (D, Dff)
        params['lin1_b'],         # (1, Dff)
        params['lin2_w'].T,       # (Dff, D)
        params['lin2_b'],         # (1, D)
        params['bn2_g'], params['bn2_b'],
    )
    vmem = pl.BlockSpec(memory_space=pltpu.MemorySpace.VMEM)
    out2d = pl.pallas_call(
        encoder_layer_kernel,
        out_shape=jax.ShapeDtypeStruct((S, B * D), jnp.float32),
        in_specs=[vmem] * len(args),
        out_specs=vmem,
    )(*args)
    return out2d.reshape(S, B, D)


def _reference(src, p):
    # Pure-JAX reference for sanity checking (same math, outside Pallas).
    S, B, D = src.shape
    H, hd = NHEAD, D // NHEAD
    xf = src.reshape(S * B, D)
    wq, wk, wv = p['in_proj_w'][:D], p['in_proj_w'][D:2 * D], p['in_proj_w'][2 * D:]
    bq, bk, bv = p['in_proj_b'][0, :D], p['in_proj_b'][0, D:2 * D], p['in_proj_b'][0, 2 * D:]
    q = (xf @ wq.T + bq).reshape(S, B, H, hd)
    k = (xf @ wk.T + bk).reshape(S, B, H, hd)
    v = (xf @ wv.T + bv).reshape(S, B, H, hd)
    scores = jnp.einsum('sbhe,tbhe->bhst', q, k) / jnp.sqrt(jnp.float32(hd))
    attn = jax.nn.softmax(scores, axis=-1)
    ctx = jnp.einsum('bhst,tbhe->sbhe', attn, v).reshape(S * B, D)
    attn_out = ctx @ p['out_proj_w'].T + p['out_proj_b'][0]

    def bn(x, g, b):
        m = jnp.mean(x, axis=0, keepdims=True)
        var = jnp.mean((x - m) ** 2, axis=0, keepdims=True)
        return (x - m) * jax.lax.rsqrt(var + EPS) * g + b

    x1 = bn(xf + attn_out, p['bn1_g'], p['bn1_b'])
    h = jnp.maximum(x1 @ p['lin1_w'].T + p['lin1_b'][0], 0.0)
    ff = h @ p['lin2_w'].T + p['lin2_b'][0]
    x2 = bn(x1 + ff, p['bn2_g'], p['bn2_b'])
    return x2.reshape(S, B, D)


def _init_params(key):
    ks = jax.random.split(key, 8)
    def w(k, shape, scale=0.05):
        return (scale * jax.random.normal(k, shape)).astype(jnp.float32)
    return {
        'in_proj_w': w(ks[0], (3 * D_MODEL, D_MODEL)),
        'in_proj_b': w(ks[1], (1, 3 * D_MODEL)),
        'out_proj_w': w(ks[2], (D_MODEL, D_MODEL)),
        'out_proj_b': w(ks[3], (1, D_MODEL)),
        'bn1_g': jnp.ones((1, D_MODEL), jnp.float32),
        'bn1_b': jnp.zeros((1, D_MODEL), jnp.float32),
        'lin1_w': w(ks[4], (DIM_FF, D_MODEL)),
        'lin1_b': w(ks[5], (1, DIM_FF)),
        'lin2_w': w(ks[6], (D_MODEL, DIM_FF)),
        'lin2_b': w(ks[7], (1, D_MODEL)),
        'bn2_g': jnp.ones((1, D_MODEL), jnp.float32),
        'bn2_b': jnp.zeros((1, D_MODEL), jnp.float32),
    }


if __name__ == "__main__":
    key = jax.random.PRNGKey(0)
    k_src, k_par = jax.random.split(key)

    S, B = 8, 2                                   # seq_len, batch
    src = jax.random.normal(k_src, (S, B, D_MODEL), dtype=jnp.float32)
    params = _init_params(k_par)

    out = transformer_bn_encoder_layer(src, params)
    out = jax.block_until_ready(out)

    ref = _reference(src, params)
    assert out.shape == (S, B, D_MODEL)
    assert jnp.allclose(out, ref, rtol=1e-2, atol=1e-2), "mismatch vs reference"

    print("KERNEL_OK")
</pallas_src>

<mosaic_0001>
module attributes {stable_mosaic.version = 11 : i64} {
  func.func @encoder_layer_kernel(%arg0: memref<8x128xf32, #tpu.memory_space<vmem>>, %arg1: memref<64x192xf32, #tpu.memory_space<vmem>>, %arg2: memref<1x192xf32, #tpu.memory_space<vmem>>, %arg3: memref<64x64xf32, #tpu.memory_space<vmem>>, %arg4: memref<1x64xf32, #tpu.memory_space<vmem>>, %arg5: memref<1x64xf32, #tpu.memory_space<vmem>>, %arg6: memref<1x64xf32, #tpu.memory_space<vmem>>, %arg7: memref<64x64xf32, #tpu.memory_space<vmem>>, %arg8: memref<1x64xf32, #tpu.memory_space<vmem>>, %arg9: memref<64x64xf32, #tpu.memory_space<vmem>>, %arg10: memref<1x64xf32, #tpu.memory_space<vmem>>, %arg11: memref<1x64xf32, #tpu.memory_space<vmem>>, %arg12: memref<1x64xf32, #tpu.memory_space<vmem>>, %arg13: memref<8x128xf32, #tpu.memory_space<vmem>>) attributes {dimension_semantics = [], scalar_prefetch = 0 : i64, scratch_operands = 0 : i64, tpu.core_type = #tpu.core_type<tc>} {
    %c0 = arith.constant 0 : index
    %c0_0 = arith.constant 0 : index
    %0 = vector.load %arg0[%c0, %c0_0] : memref<8x128xf32, #tpu.memory_space<vmem>>, vector<8x128xf32>
    %1 = vector.extract_strided_slice %0 {offsets = [0, 0], sizes = [8, 64], strides = [1, 1]} : vector<8x128xf32> to vector<8x64xf32>
    %2 = vector.extract_strided_slice %0 {offsets = [0, 64], sizes = [8, 64], strides = [1, 1]} : vector<8x128xf32> to vector<8x64xf32>
    %3 = tpu.concatenate %1, %2 in 0 : vector<8x64xf32>, vector<8x64xf32> -> vector<16x64xf32>
    %c0_1 = arith.constant 0 : index
    %c0_2 = arith.constant 0 : index
    %4 = vector.load %arg1[%c0_1, %c0_2] : memref<64x192xf32, #tpu.memory_space<vmem>>, vector<64x192xf32>
    %cst = arith.constant dense<0.000000e+00> : vector<16x192xf32>
    %5 = tpu.matmul %3, %4, %cst {dimension_numbers = #tpu.dot_dimension_numbers<[1], [0], [0], [1], [0, 0, 1, 1], [], []>} : vector<16x64xf32>, vector<64x192xf32>, vector<16x192xf32> -> vector<16x192xf32>
    %c0_3 = arith.constant 0 : index
    %c0_4 = arith.constant 0 : index
    %6 = vector.load %arg2[%c0_3, %c0_4] : memref<1x192xf32, #tpu.memory_space<vmem>>, vector<1x192xf32>
    %7 = vector.broadcast %6 : vector<1x192xf32> to vector<16x192xf32>
    %8 = arith.addf %5, %7 : vector<16x192xf32>
    %9 = vector.extract_strided_slice %8 {offsets = [0, 0], sizes = [16, 64], strides = [1, 1]} : vector<16x192xf32> to vector<16x64xf32>
    %cst_5 = arith.constant 0.353553385 : f32
    %10 = vector.broadcast %cst_5 : f32 to vector<16x64xf32>
    %11 = arith.mulf %9, %10 : vector<16x64xf32>
    %12 = vector.shape_cast %11 : vector<16x64xf32> to vector<2x8x64xf32>
    %13 = vector.extract_strided_slice %8 {offsets = [0, 64], sizes = [16, 64], strides = [1, 1]} : vector<16x192xf32> to vector<16x64xf32>
    %14 = vector.shape_cast %13 : vector<16x64xf32> to vector<2x8x64xf32>
    %15 = vector.extract_strided_slice %8 {offsets = [0, 128], sizes = [16, 64], strides = [1, 1]} : vector<16x192xf32> to vector<16x64xf32>
    %16 = vector.shape_cast %15 : vector<16x64xf32> to vector<2x8x64xf32>
    %17 = vector.extract_strided_slice %12 {offsets = [0, 0, 0], sizes = [2, 8, 8], strides = [1, 1, 1]} : vector<2x8x64xf32> to vector<2x8x8xf32>
    %18 = vector.extract_strided_slice %12 {offsets = [0, 0, 8], sizes = [2, 8, 8], strides = [1, 1, 1]} : vector<2x8x64xf32> to vector<2x8x8xf32>
    %19 = vector.extract_strided_slice %12 {offsets = [0, 0, 16], sizes = [2, 8, 8], strides = [1, 1, 1]} : vector<2x8x64xf32> to vector<2x8x8xf32>
    %20 = vector.extract_strided_slice %12 {offsets = [0, 0, 24], sizes = [2, 8, 8], strides = [1, 1, 1]} : vector<2x8x64xf32> to vector<2x8x8xf32>
    %21 = vector.extract_strided_slice %12 {offsets = [0, 0, 32], sizes = [2, 8, 8], strides = [1, 1, 1]} : vector<2x8x64xf32> to vector<2x8x8xf32>
    %22 = vector.extract_strided_slice %12 {offsets = [0, 0, 40], sizes = [2, 8, 8], strides = [1, 1, 1]} : vector<2x8x64xf32> to vector<2x8x8xf32>
    %23 = vector.extract_strided_slice %12 {offsets = [0, 0, 48], sizes = [2, 8, 8], strides = [1, 1, 1]} : vector<2x8x64xf32> to vector<2x8x8xf32>
    %24 = vector.extract_strided_slice %12 {offsets = [0, 0, 56], sizes = [2, 8, 8], strides = [1, 1, 1]} : vector<2x8x64xf32> to vector<2x8x8xf32>
    %25 = tpu.concatenate %17, %18, %19, %20, %21, %22, %23, %24 in 0 : vector<2x8x8xf32>, vector<2x8x8xf32>, vector<2x8x8xf32>, vector<2x8x8xf32>, vector<2x8x8xf32>, vector<2x8x8xf32>, vector<2x8x8xf32>, vector<2x8x8xf32> -> vector<16x8x8xf32>
    %26 = vector.extract_strided_slice %14 {offsets = [0, 0, 0], sizes = [2, 8, 8], strides = [1, 1, 1]} : vector<2x8x64xf32> to vector<2x8x8xf32>
    %27 = vector.extract_strided_slice %14 {offsets = [0, 0, 8], sizes = [2, 8, 8], strides = [1, 1, 1]} : vector<2x8x64xf32> to vector<2x8x8xf32>
    %28 = vector.extract_strided_slice %14 {offsets = [0, 0, 16], sizes = [2, 8, 8], strides = [1, 1, 1]} : vector<2x8x64xf32> to vector<2x8x8xf32>
    %29 = vector.extract_strided_slice %14 {offsets = [0, 0, 24], sizes = [2, 8, 8], strides = [1, 1, 1]} : vector<2x8x64xf32> to vector<2x8x8xf32>
    %30 = vector.extract_strided_slice %14 {offsets = [0, 0, 32], sizes = [2, 8, 8], strides = [1, 1, 1]} : vector<2x8x64xf32> to vector<2x8x8xf32>
    %31 = vector.extract_strided_slice %14 {offsets = [0, 0, 40], sizes = [2, 8, 8], strides = [1, 1, 1]} : vector<2x8x64xf32> to vector<2x8x8xf32>
    %32 = vector.extract_strided_slice %14 {offsets = [0, 0, 48], sizes = [2, 8, 8], strides = [1, 1, 1]} : vector<2x8x64xf32> to vector<2x8x8xf32>
    %33 = vector.extract_strided_slice %14 {offsets = [0, 0, 56], sizes = [2, 8, 8], strides = [1, 1, 1]} : vector<2x8x64xf32> to vector<2x8x8xf32>
    %34 = tpu.concatenate %26, %27, %28, %29, %30, %31, %32, %33 in 0 : vector<2x8x8xf32>, vector<2x8x8xf32>, vector<2x8x8xf32>, vector<2x8x8xf32>, vector<2x8x8xf32>, vector<2x8x8xf32>, vector<2x8x8xf32>, vector<2x8x8xf32> -> vector<16x8x8xf32>
    %35 = vector.extract_strided_slice %16 {offsets = [0, 0, 0], sizes = [2, 8, 8], strides = [1, 1, 1]} : vector<2x8x64xf32> to vector<2x8x8xf32>
    %36 = vector.extract_strided_slice %16 {offsets = [0, 0, 8], sizes = [2, 8, 8], strides = [1, 1, 1]} : vector<2x8x64xf32> to vector<2x8x8xf32>
    %37 = vector.extract_strided_slice %16 {offsets = [0, 0, 16], sizes = [2, 8, 8], strides = [1, 1, 1]} : vector<2x8x64xf32> to vector<2x8x8xf32>
    %38 = vector.extract_strided_slice %16 {offsets = [0, 0, 24], sizes = [2, 8, 8], strides = [1, 1, 1]} : vector<2x8x64xf32> to vector<2x8x8xf32>
    %39 = vector.extract_strided_slice %16 {offsets = [0, 0, 32], sizes = [2, 8, 8], strides = [1, 1, 1]} : vector<2x8x64xf32> to vector<2x8x8xf32>
    %40 = vector.extract_strided_slice %16 {offsets = [0, 0, 40], sizes = [2, 8, 8], strides = [1, 1, 1]} : vector<2x8x64xf32> to vector<2x8x8xf32>
    %41 = vector.extract_strided_slice %16 {offsets = [0, 0, 48], sizes = [2, 8, 8], strides = [1, 1, 1]} : vector<2x8x64xf32> to vector<2x8x8xf32>
    %42 = vector.extract_strided_slice %16 {offsets = [0, 0, 56], sizes = [2, 8, 8], strides = [1, 1, 1]} : vector<2x8x64xf32> to vector<2x8x8xf32>
    %43 = tpu.concatenate %35, %36, %37, %38, %39, %40, %41, %42 in 0 : vector<2x8x8xf32>, vector<2x8x8xf32>, vector<2x8x8xf32>, vector<2x8x8xf32>, vector<2x8x8xf32>, vector<2x8x8xf32>, vector<2x8x8xf32>, vector<2x8x8xf32> -> vector<16x8x8xf32>
    "tpu.trace_start"() <{level = 10 : i32, message = "nqe,nke->nqk"}> : () -> ()
    %cst_6 = arith.constant dense<0.000000e+00> : vector<16x8x8xf32>
    %44 = tpu.matmul %25, %34, %cst_6 {dimension_numbers = #tpu.dot_dimension_numbers<[2], [2], [1], [1], [0, 0, 0, 1, 1, 1], [0], [0]>} : vector<16x8x8xf32>, vector<16x8x8xf32>, vector<16x8x8xf32> -> vector<16x8x8xf32>
    "tpu.trace_stop"() : () -> ()
    %cst_7 = arith.constant dense<0xFF800000> : vector<16x8xf32>
    %45 = vector.multi_reduction <maximumf>, %44, %cst_7 [2] : vector<16x8x8xf32> to vector<16x8xf32>
    %46 = vector.shape_cast %45 : vector<16x8xf32> to vector<16x8x1xf32>
    %47 = vector.broadcast %46 : vector<16x8x1xf32> to vector<16x8x8xf32>
    %48 = arith.subf %44, %47 : vector<16x8x8xf32>
    %49 = math.exp %48 : vector<16x8x8xf32>
    %cst_8 = arith.constant dense<0.000000e+00> : vector<16x8xf32>
    %50 = vector.multi_reduction <add>, %49, %cst_8 [2] : vector<16x8x8xf32> to vector<16x8xf32>
    %51 = vector.shape_cast %50 : vector<16x8xf32> to vector<16x8x1xf32>
    %52 = tpu.reciprocal %51 {approx = true} : vector<16x8x1xf32> -> vector<16x8x1xf32>
    %53 = vector.broadcast %52 : vector<16x8x1xf32> to vector<16x8x8xf32>
    %54 = arith.mulf %49, %53 : vector<16x8x8xf32>
    "tpu.trace_start"() <{level = 10 : i32, message = "nqk,nke->nqe"}> : () -> ()
    %cst_9 = arith.constant dense<0.000000e+00> : vector<16x8x8xf32>
    %55 = tpu.matmul %54, %43, %cst_9 {dimension_numbers = #tpu.dot_dimension_numbers<[2], [1], [1], [2], [0, 0, 0, 1, 1, 2], [0], [0]>} : vector<16x8x8xf32>, vector<16x8x8xf32>, vector<16x8x8xf32> -> vector<16x8x8xf32>
    "tpu.trace_stop"() : () -> ()
    %56 = vector.extract_strided_slice %55 {offsets = [0, 0, 0], sizes = [2, 8, 8], strides = [1, 1, 1]} : vector<16x8x8xf32> to vector<2x8x8xf32>
    %57 = vector.extract_strided_slice %55 {offsets = [2, 0, 0], sizes = [2, 8, 8], strides = [1, 1, 1]} : vector<16x8x8xf32> to vector<2x8x8xf32>
    %58 = vector.extract_strided_slice %55 {offsets = [4, 0, 0], sizes = [2, 8, 8], strides = [1, 1, 1]} : vector<16x8x8xf32> to vector<2x8x8xf32>
    %59 = vector.extract_strided_slice %55 {offsets = [6, 0, 0], sizes = [2, 8, 8], strides = [1, 1, 1]} : vector<16x8x8xf32> to vector<2x8x8xf32>
    %60 = vector.extract_strided_slice %55 {offsets = [8, 0, 0], sizes = [2, 8, 8], strides = [1, 1, 1]} : vector<16x8x8xf32> to vector<2x8x8xf32>
    %61 = vector.extract_strided_slice %55 {offsets = [10, 0, 0], sizes = [2, 8, 8], strides = [1, 1, 1]} : vector<16x8x8xf32> to vector<2x8x8xf32>
    %62 = vector.extract_strided_slice %55 {offsets = [12, 0, 0], sizes = [2, 8, 8], strides = [1, 1, 1]} : vector<16x8x8xf32> to vector<2x8x8xf32>
    %63 = vector.extract_strided_slice %55 {offsets = [14, 0, 0], sizes = [2, 8, 8], strides = [1, 1, 1]} : vector<16x8x8xf32> to vector<2x8x8xf32>
    %64 = tpu.concatenate %56, %57, %58, %59, %60, %61, %62, %63 in 2 : vector<2x8x8xf32>, vector<2x8x8xf32>, vector<2x8x8xf32>, vector<2x8x8xf32>, vector<2x8x8xf32>, vector<2x8x8xf32>, vector<2x8x8xf32>, vector<2x8x8xf32> -> vector<2x8x64xf32>
    %65 = vector.shape_cast %64 : vector<2x8x64xf32> to vector<16x64xf32>
    %c0_10 = arith.constant 0 : index
    %c0_11 = arith.constant 0 : index
    %66 = vector.load %arg3[%c0_10, %c0_11] : memref<64x64xf32, #tpu.memory_space<vmem>>, vector<64x64xf32>
    %cst_12 = arith.constant dense<0.000000e+00> : vector<16x64xf32>
    %67 = tpu.matmul %65, %66, %cst_12 {dimension_numbers = #tpu.dot_dimension_numbers<[1], [0], [0], [1], [0, 0, 1, 1], [], []>} : vector<16x64xf32>, vector<64x64xf32>, vector<16x64xf32> -> vector<16x64xf32>
    %c0_13 = arith.constant 0 : index
    %c0_14 = arith.constant 0 : index
    %68 = vector.load %arg4[%c0_13, %c0_14] : memref<1x64xf32, #tpu.memory_space<vmem>>, vector<1x64xf32>
    %69 = vector.broadcast %68 : vector<1x64xf32> to vector<16x64xf32>
    %70 = arith.addf %67, %69 : vector<16x64xf32>
    %71 = arith.addf %3, %70 : vector<16x64xf32>
    %c0_15 = arith.constant 0 : index
    %c0_16 = arith.constant 0 : index
    %72 = vector.load %arg5[%c0_15, %c0_16] : memref<1x64xf32, #tpu.memory_space<vmem>>, vector<1x64xf32>
    %c0_17 = arith.constant 0 : index
    %c0_18 = arith.constant 0 : index
    %73 = vector.load %arg6[%c0_17, %c0_18] : memref<1x64xf32, #tpu.memory_space<vmem>>, vector<1x64xf32>
    %cst_19 = arith.constant dense<0.000000e+00> : vector<64xf32>
    %74 = vector.multi_reduction <add>, %71, %cst_19 [0] : vector<16x64xf32> to vector<64xf32>
    %75 = vector.shape_cast %74 : vector<64xf32> to vector<1x64xf32>
    %cst_20 = arith.constant 1.600000e+01 : f32
    %76 = vector.broadcast %cst_20 : f32 to vector<1x64xf32>
    %77 = arith.divf %75, %76 : vector<1x64xf32>
    %78 = vector.broadcast %77 : vector<1x64xf32> to vector<16x64xf32>
    %79 = arith.subf %71, %78 : vector<16x64xf32>
    %80 = arith.mulf %79, %79 : vector<16x64xf32>
    %cst_21 = arith.constant dense<0.000000e+00> : vector<64xf32>
    %81 = vector.multi_reduction <add>, %80, %cst_21 [0] : vector<16x64xf32> to vector<64xf32>
    %82 = vector.shape_cast %81 : vector<64xf32> to vector<1x64xf32>
    %cst_22 = arith.constant 1.600000e+01 : f32
    %83 = vector.broadcast %cst_22 : f32 to vector<1x64xf32>
    %84 = arith.divf %82, %83 : vector<1x64xf32>
    %cst_23 = arith.constant 9.99999974E-6 : f32
    %85 = vector.broadcast %cst_23 : f32 to vector<1x64xf32>
    %86 = arith.addf %84, %85 : vector<1x64xf32>
    %87 = math.rsqrt %86 : vector<1x64xf32>
    %88 = arith.mulf %87, %72 : vector<1x64xf32>
    %89 = vector.broadcast %88 : vector<1x64xf32> to vector<16x64xf32>
    %90 = arith.mulf %79, %89 : vector<16x64xf32>
    %91 = vector.broadcast %73 : vector<1x64xf32> to vector<16x64xf32>
    %92 = arith.addf %90, %91 : vector<16x64xf32>
    %c0_24 = arith.constant 0 : index
    %c0_25 = arith.constant 0 : index
    %93 = vector.load %arg7[%c0_24, %c0_25] : memref<64x64xf32, #tpu.memory_space<vmem>>, vector<64x64xf32>
    %cst_26 = arith.constant dense<0.000000e+00> : vector<16x64xf32>
    %94 = tpu.matmul %92, %93, %cst_26 {dimension_numbers = #tpu.dot_dimension_numbers<[1], [0], [0], [1], [0, 0, 1, 1], [], []>} : vector<16x64xf32>, vector<64x64xf32>, vector<16x64xf32> -> vector<16x64xf32>
    %c0_27 = arith.constant 0 : index
    %c0_28 = arith.constant 0 : index
    %95 = vector.load %arg8[%c0_27, %c0_28] : memref<1x64xf32, #tpu.memory_space<vmem>>, vector<1x64xf32>
    %96 = vector.broadcast %95 : vector<1x64xf32> to vector<16x64xf32>
    %97 = arith.addf %94, %96 : vector<16x64xf32>
    %cst_29 = arith.constant 0.000000e+00 : f32
    %98 = vector.broadcast %cst_29 : f32 to vector<16x64xf32>
    %99 = arith.maximumf %97, %98 : vector<16x64xf32>
    %c0_30 = arith.constant 0 : index
    %c0_31 = arith.constant 0 : index
    %100 = vector.load %arg9[%c0_30, %c0_31] : memref<64x64xf32, #tpu.memory_space<vmem>>, vector<64x64xf32>
    %cst_32 = arith.constant dense<0.000000e+00> : vector<16x64xf32>
    %101 = tpu.matmul %99, %100, %cst_32 {dimension_numbers = #tpu.dot_dimension_numbers<[1], [0], [0], [1], [0, 0, 1, 1], [], []>} : vector<16x64xf32>, vector<64x64xf32>, vector<16x64xf32> -> vector<16x64xf32>
    %c0_33 = arith.constant 0 : index
    %c0_34 = arith.constant 0 : index
    %102 = vector.load %arg10[%c0_33, %c0_34] : memref<1x64xf32, #tpu.memory_space<vmem>>, vector<1x64xf32>
    %103 = vector.broadcast %102 : vector<1x64xf32> to vector<16x64xf32>
    %104 = arith.addf %101, %103 : vector<16x64xf32>
    %105 = arith.addf %92, %104 : vector<16x64xf32>
    %c0_35 = arith.constant 0 : index
    %c0_36 = arith.constant 0 : index
    %106 = vector.load %arg11[%c0_35, %c0_36] : memref<1x64xf32, #tpu.memory_space<vmem>>, vector<1x64xf32>
    %c0_37 = arith.constant 0 : index
    %c0_38 = arith.constant 0 : index
    %107 = vector.load %arg12[%c0_37, %c0_38] : memref<1x64xf32, #tpu.memory_space<vmem>>, vector<1x64xf32>
    %cst_39 = arith.constant dense<0.000000e+00> : vector<64xf32>
    %108 = vector.multi_reduction <add>, %105, %cst_39 [0] : vector<16x64xf32> to vector<64xf32>
    %109 = vector.shape_cast %108 : vector<64xf32> to vector<1x64xf32>
    %cst_40 = arith.constant 1.600000e+01 : f32
    %110 = vector.broadcast %cst_40 : f32 to vector<1x64xf32>
    %111 = arith.divf %109, %110 : vector<1x64xf32>
    %112 = vector.broadcast %111 : vector<1x64xf32> to vector<16x64xf32>
    %113 = arith.subf %105, %112 : vector<16x64xf32>
    %114 = arith.mulf %113, %113 : vector<16x64xf32>
    %cst_41 = arith.constant dense<0.000000e+00> : vector<64xf32>
    %115 = vector.multi_reduction <add>, %114, %cst_41 [0] : vector<16x64xf32> to vector<64xf32>
    %116 = vector.shape_cast %115 : vector<64xf32> to vector<1x64xf32>
    %cst_42 = arith.constant 1.600000e+01 : f32
    %117 = vector.broadcast %cst_42 : f32 to vector<1x64xf32>
    %118 = arith.divf %116, %117 : vector<1x64xf32>
    %cst_43 = arith.constant 9.99999974E-6 : f32
    %119 = vector.broadcast %cst_43 : f32 to vector<1x64xf32>
    %120 = arith.addf %118, %119 : vector<1x64xf32>
    %121 = math.rsqrt %120 : vector<1x64xf32>
    %122 = arith.mulf %121, %106 : vector<1x64xf32>
    %123 = vector.broadcast %122 : vector<1x64xf32> to vector<16x64xf32>
    %124 = arith.mulf %113, %123 : vector<16x64xf32>
    %125 = vector.broadcast %107 : vector<1x64xf32> to vector<16x64xf32>
    %126 = arith.addf %124, %125 : vector<16x64xf32>
    %127 = vector.shape_cast %126 : vector<16x64xf32> to vector<2x8x64xf32>
    %128 = vector.extract_strided_slice %127 {offsets = [0, 0, 0], sizes = [1, 8, 64], strides = [1, 1, 1]} : vector<2x8x64xf32> to vector<1x8x64xf32>
    %129 = vector.shape_cast %128 : vector<1x8x64xf32> to vector<8x64xf32>
    %130 = vector.extract_strided_slice %127 {offsets = [1, 0, 0], sizes = [1, 8, 64], strides = [1, 1, 1]} : vector<2x8x64xf32> to vector<1x8x64xf32>
    %131 = vector.shape_cast %130 : vector<1x8x64xf32> to vector<8x64xf32>
    %132 = tpu.concatenate %129, %131 in 1 : vector<8x64xf32>, vector<8x64xf32> -> vector<8x128xf32>
    %c0_44 = arith.constant 0 : index
    %c0_45 = arith.constant 0 : index
    %133 = vector.load %arg13[%c0_44, %c0_45] : memref<8x128xf32, #tpu.memory_space<vmem>>, vector<8x128xf32>
    tpu.vector_store %arg13[%c0_44, %c0_45], %132 {strides = array<i32>} : memref<8x128xf32, #tpu.memory_space<vmem>>, vector<8x128xf32>,
    return
  }
}

</mosaic_0001>

<llo_original>
// kernel: tpu_custom_call.1
$region0: #{tpu_custom_call.1}
  #allocation0 [shape = 'u32[]', space=smem, size = 0x4, offset = 0x4, fixed_abs, tag = 'smem constant byte address 0x4 - core index']
  #allocation1 [shape = 'u32[144,128]{1,0:T(1,128)}', space=vmem, size = 0x12000, scoped, tag = 'internal scratch']
  %s0 = inlined_call_operand.hbm [shape: f32[8,128], index: 0, kind: input, shape index: {}]
  %s1 = inlined_call_operand.hbm [shape: f32[64,192], index: 1, kind: input, shape index: {}]
  %s2 = inlined_call_operand.vmem [shape: f32[1,192], index: 2, kind: input, shape index: {}]
  %s3 = inlined_call_operand.hbm [shape: f32[64,64], index: 3, kind: input, shape index: {}]
  %s4 = inlined_call_operand.vmem [shape: f32[1,64], index: 4, kind: input, shape index: {}]
  %s5 = inlined_call_operand.vmem [shape: f32[1,64], index: 5, kind: input, shape index: {}]
  %s6 = inlined_call_operand.vmem [shape: f32[1,64], index: 6, kind: input, shape index: {}]
  %s7 = inlined_call_operand.hbm [shape: f32[64,64], index: 7, kind: input, shape index: {}]
  %s8 = inlined_call_operand.vmem [shape: f32[1,64], index: 8, kind: input, shape index: {}]
  %s9 = inlined_call_operand.hbm [shape: f32[64,64], index: 9, kind: input, shape index: {}]
  %s10 = inlined_call_operand.vmem [shape: f32[1,64], index: 10, kind: input, shape index: {}]
  %s11 = inlined_call_operand.vmem [shape: f32[1,64], index: 11, kind: input, shape index: {}]
  %s12 = inlined_call_operand.vmem [shape: f32[1,64], index: 12, kind: input, shape index: {}]
  %s13 = inlined_call_operand.hbm [shape: f32[8,128], index: 13, kind: output, shape index: {}]
  %s14 = sld [smem:[#allocation0]]
  $region82: #{tpu_custom_call.1} parent=0
    _
  %s16 = ssub.s32 1, %s14
  %s17 = scalar_select 0, %s16, %s14
  $region1: #{tpu_custom_call.1} parent=0
    #allocation2 [shape = 'u8[4096]{0}', space=vmem, size = 0x1000, scoped, tag = 'input window, operand 0, single buffered']
    #allocation3 [shape = 's32[1]{0}', space=sflag, size = 0x4, scoped, tag = 'scoped memory for tpu_custom_call.1']
    #allocation4 [shape = 's32[1]{0}', space=sflag, size = 0x4, scoped, tag = 'scoped memory for tpu_custom_call.1']
    #allocation5 [shape = 'u8[65536]{0}', space=vmem, size = 0x10000, scoped, tag = 'input window, operand 1, single buffered']
    #allocation6 [shape = 's32[1]{0}', space=sflag, size = 0x4, scoped, tag = 'scoped memory for tpu_custom_call.1']
    #allocation7 [shape = 'u8[32768]{0}', space=vmem, size = 0x8000, scoped, tag = 'input window, operand 3, single buffered']
    #allocation8 [shape = 'u8[32768]{0}', space=vmem, size = 0x8000, scoped, tag = 'input window, operand 7, single buffered']
    #allocation9 [shape = 's32[1]{0}', space=sflag, size = 0x4, scoped, tag = 'scoped memory for tpu_custom_call.1']
    #allocation10 [shape = 'u8[32768]{0}', space=vmem, size = 0x8000, scoped, tag = 'input window, operand 9, single buffered']
    #allocation11 [shape = 'u8[4096]{0}', space=vmem, size = 0x1000, scoped, tag = 'output window, operand 0, single buffered']
    %18 = vsyncpa [#allocation3], 0
    %19 = vsyncpa [#allocation6], 0
    %20 = vsyncpa [#allocation9], 0
    %21 = vsyncpa [#allocation4], 0
    // Predicated region
    $region2: #{tpu_custom_call.1} parent=1 // pred_check
      _
    $region3: #{tpu_custom_call.1} parent=1 // pred_check_branch
      %23 = sbr.rel (0) target = $region5
    $region4: #{tpu_custom_call.1} parent=1 // pred_region
      %s25 = ssub.s32 128, 128
      %26 = vsyncadd [#allocation3], %s25
      %s28 = sshll.u32 [#allocation2], 4
      %s29 = int_to_ptr.vmem [resolvable:$true] %s28
      %31 = dma.hbm_to_vmem [thread:$0]  %s0, 128, %s29, [#allocation3]
    $region5: #{tpu_custom_call.1} parent=1 // pred_fallthru
      _
    // Predicated region
    $region6: #{tpu_custom_call.1} parent=1 // pred_check
      _
    $region7: #{tpu_custom_call.1} parent=1 // pred_check_branch
      %33 = sbr.rel (0) target = $region9
    $region8: #{tpu_custom_call.1} parent=1 // pred_region
      %s35 = ssub.s32 2048, 2048
      %36 = vsyncadd [#allocation6], %s35
      %s37 = sshll.u32 [#allocation5], 4
      %s38 = int_to_ptr.vmem [resolvable:$true] %s37
      %43 = dma.hbm_to_vmem [thread:$0]  %s1, 2048, %s38, [#allocation6], 256, 256, 16
    $region9: #{tpu_custom_call.1} parent=1 // pred_fallthru
      _
    // Predicated region
    $region10: #{tpu_custom_call.1} parent=1 // pred_check
      _
    $region11: #{tpu_custom_call.1} parent=1 // pred_check_branch
      %45 = sbr.rel (0) target = $region13
    $region12: #{tpu_custom_call.1} parent=1 // pred_region
      _
    $region13: #{tpu_custom_call.1} parent=1 // pred_fallthru
      _
    // Predicated region
    $region14: #{tpu_custom_call.1} parent=1 // pred_check
      _
    $region15: #{tpu_custom_call.1} parent=1 // pred_check_branch
      %47 = sbr.rel (0) target = $region17
    $region16: #{tpu_custom_call.1} parent=1 // pred_region
      %s49 = ssub.s32 1024, 1024
      %50 = vsyncadd [#allocation6], %s49
      %s51 = sshll.u32 [#allocation7], 4
      %s52 = int_to_ptr.vmem [resolvable:$true] %s51
      %57 = dma.hbm_to_vmem [thread:$0]  %s3, 1024, %s52, [#allocation6], 128, 128, 8
    $region17: #{tpu_custom_call.1} parent=1 // pred_fallthru
      _
    // Predicated region
    $region18: #{tpu_custom_call.1} parent=1 // pred_check
      _
    $region19: #{tpu_custom_call.1} parent=1 // pred_check_branch
      %59 = sbr.rel (0) target = $region21
    $region20: #{tpu_custom_call.1} parent=1 // pred_region
      _
    $region21: #{tpu_custom_call.1} parent=1 // pred_fallthru
      _
    // Predicated region
    $region22: #{tpu_custom_call.1} parent=1 // pred_check
      _
    $region23: #{tpu_custom_call.1} parent=1 // pred_check_branch
      %61 = sbr.rel (0) target = $region25
    $region24: #{tpu_custom_call.1} parent=1 // pred_region
      _
    $region25: #{tpu_custom_call.1} parent=1 // pred_fallthru
      _
    // Predicated region
    $region26: #{tpu_custom_call.1} parent=1 // pred_check
      _
    $region27: #{tpu_custom_call.1} parent=1 // pred_check_branch
      %63 = sbr.rel (0) target = $region29
    $region28: #{tpu_custom_call.1} parent=1 // pred_region
      _
    $region29: #{tpu_custom_call.1} parent=1 // pred_fallthru
      _
    // Predicated region
    $region30: #{tpu_custom_call.1} parent=1 // pred_check
      _
    $region31: #{tpu_custom_call.1} parent=1 // pred_check_branch
      %65 = sbr.rel (0) target = $region33
    $region32: #{tpu_custom_call.1} parent=1 // pred_region
      %s67 = ssub.s32 1024, 1024
      %68 = vsyncadd [#allocation9], %s67
      %s69 = sshll.u32 [#allocation8], 4
      %s70 = int_to_ptr.vmem [resolvable:$true] %s69
      %75 = dma.hbm_to_vmem [thread:$0]  %s7, 1024, %s70, [#allocation9], 128, 128, 8
    $region33: #{tpu_custom_call.1} parent=1 // pred_fallthru
      _
    // Predicated region
    $region34: #{tpu_custom_call.1} parent=1 // pred_check
      _
    $region35: #{tpu_custom_call.1} parent=1 // pred_check_branch
      %77 = sbr.rel (0) target = $region37
    $region36: #{tpu_custom_call.1} parent=1 // pred_region
      _
    $region37: #{tpu_custom_call.1} parent=1 // pred_fallthru
      _
    // Predicated region
    $region38: #{tpu_custom_call.1} parent=1 // pred_check
      _
    $region39: #{tpu_custom_call.1} parent=1 // pred_check_branch
      %79 = sbr.rel (0) target = $region41
    $region40: #{tpu_custom_call.1} parent=1 // pred_region
      %s81 = ssub.s32 1024, 1024
      %82 = vsyncadd [#allocation9], %s81
      %s83 = sshll.u32 [#allocation10], 4
      %s84 = int_to_ptr.vmem [resolvable:$true] %s83
      %89 = dma.hbm_to_vmem [thread:$0]  %s9, 1024, %s84, [#allocation9], 128, 128, 8
    $region41: #{tpu_custom_call.1} parent=1 // pred_fallthru
      _
    // Predicated region
    $region42: #{tpu_custom_call.1} parent=1 // pred_check
      _
    $region43: #{tpu_custom_call.1} parent=1 // pred_check_branch
      %91 = sbr.rel (0) target = $region45
    $region44: #{tpu_custom_call.1} parent=1 // pred_region
      _
    $region45: #{tpu_custom_call.1} parent=1 // pred_fallthru
      _
    // Predicated region
    $region46: #{tpu_custom_call.1} parent=1 // pred_check
      _
    $region47: #{tpu_custom_call.1} parent=1 // pred_check_branch
      %93 = sbr.rel (0) target = $region49
    $region48: #{tpu_custom_call.1} parent=1 // pred_region
      _
    $region49: #{tpu_custom_call.1} parent=1 // pred_fallthru
      _
    // Predicated region
    $region50: #{tpu_custom_call.1} parent=1 // pred_check
      _
    $region51: #{tpu_custom_call.1} parent=1 // pred_check_branch
      %95 = sbr.rel (0) target = $region53
    $region52: #{tpu_custom_call.1} parent=1 // pred_region
      _
    $region53: #{tpu_custom_call.1} parent=1 // pred_fallthru
      _
    // Predicated region
    $region54: #{tpu_custom_call.1} parent=1 // pred_check
      _
    $region55: #{tpu_custom_call.1} parent=1 // pred_check_branch
      %97 = sbr.rel (0) target = $region57
    $region56: #{tpu_custom_call.1} parent=1 // pred_region
      %98 = dma.done [#allocation3], 128
    $region57: #{tpu_custom_call.1} parent=1 // pred_fallthru
      _
    // Predicated region
    $region58: #{tpu_custom_call.1} parent=1 // pred_check
      _
    $region59: #{tpu_custom_call.1} parent=1 // pred_check_branch
      %100 = sbr.rel (0) target = $region61
    $region60: #{tpu_custom_call.1} parent=1 // pred_region
      %101 = dma.done [#allocation6], 2048
    $region61: #{tpu_custom_call.1} parent=1 // pred_fallthru
      _
    // Predicated region
    $region62: #{tpu_custom_call.1} parent=1 // pred_check
      _
    $region63: #{tpu_custom_call.1} parent=1 // pred_check_branch
      %103 = sbr.rel (0) target = $region65
    $region64: #{tpu_custom_call.1} parent=1 // pred_region
      %104 = dma.done [#allocation6], 1024
    $region65: #{tpu_custom_call.1} parent=1 // pred_fallthru
      _
    // Predicated region
    $region66: #{tpu_custom_call.1} parent=1 // pred_check
      _
    $region67: #{tpu_custom_call.1} parent=1 // pred_check_branch
      %106 = sbr.rel (0) target = $region69
    $region68: #{tpu_custom_call.1} parent=1 // pred_region
      %107 = dma.done [#allocation9], 1024
    $region69: #{tpu_custom_call.1} parent=1 // pred_fallthru
      _
    // Predicated region
    $region70: #{tpu_custom_call.1} parent=1 // pred_check
      _
    $region71: #{tpu_custom_call.1} parent=1 // pred_check_branch
      %109 = sbr.rel (0) target = $region73
    $region72: #{tpu_custom_call.1} parent=1 // pred_region
      %110 = dma.done [#allocation9], 1024
    $region73: #{tpu_custom_call.1} parent=1 // pred_fallthru
      _
    %v111 = vld [vmem:[#allocation2] sm:$0xff]
    %113 = vrot.lane.b32.xlu0 %v111, 64
    %v114 = vpop.permute.xlu0 %113
    %v116 = vld [vmem:[#allocation5] sm:$0xff]
    %v117 = vld [vmem:[#allocation5 + $0x8] sm:$0xff]
    %v118 = vld [vmem:[#allocation5 + $0x10] sm:$0xff]
    %v119 = vld [vmem:[#allocation5 + $0x18] sm:$0xff]
    %v120 = vld [vmem:[#allocation5 + $0x20] sm:$0xff]
    %v121 = vld [vmem:[#allocation5 + $0x28] sm:$0xff]
    %v122 = vld [vmem:[#allocation5 + $0x30] sm:$0xff]
    %v123 = vld [vmem:[#allocation5 + $0x38] sm:$0xff]
    %v124 = vld [vmem:[#allocation5 + $0x40] sm:$0xff]
    %v125 = vld [vmem:[#allocation5 + $0x48] sm:$0xff]
    %v126 = vld [vmem:[#allocation5 + $0x50] sm:$0xff]
    %v127 = vld [vmem:[#allocation5 + $0x58] sm:$0xff]
    %v128 = vld [vmem:[#allocation5 + $0x60] sm:$0xff]
    %v129 = vld [vmem:[#allocation5 + $0x68] sm:$0xff]
    %v130 = vld [vmem:[#allocation5 + $0x70] sm:$0xff]
    %v131 = vld [vmem:[#allocation5 + $0x78] sm:$0xff]
    %v132 = vld [vmem:[%s2] sm:$0x3]
    %v134 = vlaneseq
    %v135 = vshrl.u32 %v134, 7
    %v136 = vsub.s32 0, %v135
    %v137 = vrot.slane %v132, %v136
    %v138 = vlaneseq
    %v139 = vshrl.u32 %v138, 7
    %v140 = vsub.s32 1, %v139
    %v141 = vrot.slane %v132, %v140
    %vm144 = vcmask 523264
    %v145 = vsel %vm144, %v111, 0
    %v147 = vsel %vm144, %v114, 0
    %149 = vmatprep.subr.mxu0 0.0
    %150 = vmatpush1.msra.mxu0 0.0
    %151 = vmatprep.subr.mxu0 0.0
    %152 = vmatpush1.msra.mxu0 0.0
    %153 = vmatprep.subr.mxu0 0.0
    %154 = vmatpush1.msra.mxu0 0.0
    %155 = vmatprep.subr.mxu0 0.0
    %156 = vmatpush1.msra.mxu0 0.0
    %157 = vmatprep.subr.mxu0 0.0
    %158 = vmatpush1.msra.mxu0 0.0
    %159 = vmatprep.subr.mxu0 0.0
    %160 = vmatpush1.msra.mxu0 0.0
    %161 = vmatprep.subr.mxu0 0.0
    %162 = vmatpush1.msra.mxu0 0.0
    %163 = vmatprep.subr.mxu0 0.0
    %164 = vmatpush1.msra.mxu0 0.0
    %165 = vmatprep.subr.mxu0 %v131
    %166 = vmatpush1.msra.mxu0 %v130
    %167 = vmatprep.subr.mxu0 %v129
    %168 = vmatpush1.msra.mxu0 %v128
    %169 = vmatprep.subr.mxu0 %v127
    %170 = vmatpush1.msra.mxu0 %v126
    %171 = vmatprep.subr.mxu0 %v125
    %172 = vmatpush1.msra.mxu0 %v124
    %173 = vmatprep.subr.mxu0 %v123
    %174 = vmatpush1.msra.mxu0 %v122
    %175 = vmatprep.subr.mxu0 %v121
    %176 = vmatpush1.msra.mxu0 %v120
    %177 = vmatprep.subr.mxu0 %v119
    %178 = vmatpush1.msra.mxu0 %v118
    %179 = vmatprep.subr.mxu0 %v117
    %180 = vmatpush1.msra.mxu0 %v116
    %181 = vmatprep.subr.mxu0 0.0
    %182 = vmatpush2.msra.mxu0 0.0
    %183 = vmatprep.subr.mxu0 0.0
    %184 = vmatpush2.msra.mxu0 0.0
    %185 = vmatprep.subr.mxu0 0.0
    %186 = vmatpush2.msra.mxu0 0.0
    %187 = vmatprep.subr.mxu0 0.0
    %188 = vmatpush2.msra.mxu0 0.0
    %189 = vmatprep.subr.mxu0 0.0
    %190 = vmatpush2.msra.mxu0 0.0
    %191 = vmatprep.subr.mxu0 0.0
    %192 = vmatpush2.msra.mxu0 0.0
    %193 = vmatprep.subr.mxu0 0.0
    %194 = vmatpush2.msra.mxu0 0.0
    %195 = vmatprep.subr.mxu0 0.0
    %196 = vmatpush2.msra.mxu0 0.0
    %197 = vmatprep.subr.mxu0 0.0
    %198 = vmatpush2.msra.mxu0 0.0
    %199 = vmatprep.subr.mxu0 0.0
    %200 = vmatpush2.msra.mxu0 0.0
    %201 = vmatprep.subr.mxu0 0.0
    %202 = vmatpush2.msra.mxu0 0.0
    %203 = vmatprep.subr.mxu0 0.0
    %204 = vmatpush2.msra.mxu0 0.0
    %205 = vmatprep.subr.mxu0 0.0
    %206 = vmatpush2.msra.mxu0 0.0
    %207 = vmatprep.subr.mxu0 0.0
    %208 = vmatpush2.msra.mxu0 0.0
    %209 = vmatprep.subr.mxu0 0.0
    %210 = vmatpush2.msra.mxu0 0.0
    %211 = vmatprep.subr.mxu0 0.0
    %212 = vmatpush2.msra.mxu0 0.0
    %213 = vmatprep.mubr.f32.mxu0 0.0
    %214 = vmatmul.mubr.f32.gmra.mxu0 %v145
    %v215 = vpop.f32.mrf.mxu0
    %v216 = vadd.f32 %v137, %v215
    %v217 = vpop.f32.mrf.mxu0
    %v218 = vadd.f32 %v141, %v217
    %219 = vmatprep.mubr.f32.mxu0 0.0
    %220 = vmatmul.mubr.f32.gmra.mxu0 %v147
    %v221 = vpop.f32.mrf.mxu0
    %v222 = vadd.f32 %v137, %v221
    %v223 = vpop.f32.mrf.mxu0
    %v224 = vadd.f32 %v141, %v223
    %225 = vdwg.mxu0
    %v226 = vmul.f32 %v216, 0.35355338
    %v227 = vmul.f32 %v222, 0.35355338
    %230 = vrot.lane.b32.xlu0 %v226, 120
    %v231 = vpop.permute.xlu0 %230
    %232 = vrot.lane.b32.xlu0 %v227, 120
    %v233 = vpop.permute.xlu0 %232
    %234 = vrot.lane.b32.xlu0 %v226, 112
    %v235 = vpop.permute.xlu0 %234
    %236 = vrot.lane.b32.xlu0 %v227, 112
    %v237 = vpop.permute.xlu0 %236
    %238 = vrot.lane.b32.xlu0 %v226, 104
    %v239 = vpop.permute.xlu0 %238
    %240 = vrot.lane.b32.xlu0 %v227, 104
    %v241 = vpop.permute.xlu0 %240
    %242 = vrot.lane.b32.xlu0 %v226, 96
    %v243 = vpop.permute.xlu0 %242
    %244 = vrot.lane.b32.xlu0 %v227, 96
    %v245 = vpop.permute.xlu0 %244
    %246 = vrot.lane.b32.xlu0 %v226, 88
    %v247 = vpop.permute.xlu0 %246
    %248 = vrot.lane.b32.xlu0 %v227, 88
    %v249 = vpop.permute.xlu0 %248
    %250 = vrot.lane.b32.xlu0 %v226, 80
    %v251 = vpop.permute.xlu0 %250
    %252 = vrot.lane.b32.xlu0 %v227, 80
    %v253 = vpop.permute.xlu0 %252
    %254 = vrot.lane.b32.xlu0 %v226, 72
    %v255 = vpop.permute.xlu0 %254
    %256 = vrot.lane.b32.xlu0 %v227, 72
    %v257 = vpop.permute.xlu0 %256
    %260 = vrot.lane.b32.xlu0 %v216, 120
    %v261 = vpop.permute.xlu0 %260
    %262 = vrot.lane.b32.xlu0 %v222, 120
    %v263 = vpop.permute.xlu0 %262
    %264 = vrot.lane.b32.xlu0 %v216, 112
    %v265 = vpop.permute.xlu0 %264
    %266 = vrot.lane.b32.xlu0 %v222, 112
    %v267 = vpop.permute.xlu0 %266
    %268 = vrot.lane.b32.xlu0 %v216, 104
    %v269 = vpop.permute.xlu0 %268
    %270 = vrot.lane.b32.xlu0 %v222, 104
    %v271 = vpop.permute.xlu0 %270
    %272 = vrot.lane.b32.xlu0 %v216, 96
    %v273 = vpop.permute.xlu0 %272
    %274 = vrot.lane.b32.xlu0 %v222, 96
    %v275 = vpop.permute.xlu0 %274
    %276 = vrot.lane.b32.xlu0 %v216, 88
    %v277 = vpop.permute.xlu0 %276
    %278 = vrot.lane.b32.xlu0 %v222, 88
    %v279 = vpop.permute.xlu0 %278
    %280 = vrot.lane.b32.xlu0 %v216, 80
    %v281 = vpop.permute.xlu0 %280
    %282 = vrot.lane.b32.xlu0 %v222, 80
    %v283 = vpop.permute.xlu0 %282
    %284 = vrot.lane.b32.xlu0 %v216, 72
    %v285 = vpop.permute.xlu0 %284
    %286 = vrot.lane.b32.xlu0 %v222, 72
    %v287 = vpop.permute.xlu0 %286
    %290 = vrot.lane.b32.xlu0 %v218, 120
    %v291 = vpop.permute.xlu0 %290
    %292 = vrot.lane.b32.xlu0 %v224, 120
    %v293 = vpop.permute.xlu0 %292
    %296 = vrot.lane.b32.xlu0 %v218, 112
    %v297 = vpop.permute.xlu0 %296
    %298 = vrot.lane.b32.xlu0 %v224, 112
    %v299 = vpop.permute.xlu0 %298
    %302 = vrot.lane.b32.xlu0 %v218, 104
    %v303 = vpop.permute.xlu0 %302
    %304 = vrot.lane.b32.xlu0 %v224, 104
    %v305 = vpop.permute.xlu0 %304
    %308 = vrot.lane.b32.xlu0 %v218, 96
    %v309 = vpop.permute.xlu0 %308
    %310 = vrot.lane.b32.xlu0 %v224, 96
    %v311 = vpop.permute.xlu0 %310
    %314 = vrot.lane.b32.xlu0 %v218, 88
    %v315 = vpop.permute.xlu0 %314
    %316 = vrot.lane.b32.xlu0 %v224, 88
    %v317 = vpop.permute.xlu0 %316
    %320 = vrot.lane.b32.xlu0 %v218, 80
    %v321 = vpop.permute.xlu0 %320
    %322 = vrot.lane.b32.xlu0 %v224, 80
    %v323 = vpop.permute.xlu0 %322
    %326 = vrot.lane.b32.xlu0 %v218, 72
    %v327 = vpop.permute.xlu0 %326
    %328 = vrot.lane.b32.xlu0 %v224, 72
    %v329 = vpop.permute.xlu0 %328
    %332 = vrot.lane.b32.xlu0 %v216, 64
    %v333 = vpop.permute.xlu0 %332
    %vm334 = vcmask 64512
    %v335 = vsel %vm334, %v226, 0
    %v337 = vsel %vm334, %v333, 0
    %339 = vmatprep.subr.mxu0 0.0
    %340 = vmatpush1.xpose.msra.mxu0 0.0
    %341 = vmatprep.subr.mxu0 0.0
    %342 = vmatpush1.xpose.msra.mxu0 0.0
    %343 = vmatprep.subr.mxu0 0.0
    %344 = vmatpush1.xpose.msra.mxu0 0.0
    %345 = vmatprep.subr.mxu0 0.0
    %346 = vmatpush1.xpose.msra.mxu0 0.0
    %347 = vmatprep.subr.mxu0 0.0
    %348 = vmatpush1.xpose.msra.mxu0 0.0
    %349 = vmatprep.subr.mxu0 0.0
    %350 = vmatpush1.xpose.msra.mxu0 0.0
    %351 = vmatprep.subr.mxu0 0.0
    %352 = vmatpush1.xpose.msra.mxu0 0.0
    %353 = vmatprep.subr.mxu0 0.0
    %354 = vmatpush1.xpose.msra.mxu0 0.0
    %355 = vmatprep.subr.mxu0 0.0
    %356 = vmatpush1.xpose.msra.mxu0 0.0
    %357 = vmatprep.subr.mxu0 0.0
    %358 = vmatpush1.xpose.msra.mxu0 0.0
    %359 = vmatprep.subr.mxu0 0.0
    %360 = vmatpush1.xpose.msra.mxu0 0.0
    %361 = vmatprep.subr.mxu0 0.0
    %362 = vmatpush1.xpose.msra.mxu0 0.0
    %363 = vmatprep.subr.mxu0 0.0
    %364 = vmatpush1.xpose.msra.mxu0 0.0
    %365 = vmatprep.subr.mxu0 0.0
    %366 = vmatpush1.xpose.msra.mxu0 0.0
    %367 = vmatprep.subr.mxu0 0.0
    %368 = vmatpush1.xpose.msra.mxu0 0.0
    %369 = vmatprep.subr.mxu0 0.0
    %370 = vmatpush1.xpose.msra.mxu0 %v337
    %371 = vmatprep.subr.mxu0 0.0
    %372 = vmatpush2.xpose.msra.mxu0 0.0
    %373 = vmatprep.subr.mxu0 0.0
    %374 = vmatpush2.xpose.msra.mxu0 0.0
    %375 = vmatprep.subr.mxu0 0.0
    %376 = vmatpush2.xpose.msra.mxu0 0.0
    %377 = vmatprep.subr.mxu0 0.0
    %378 = vmatpush2.xpose.msra.mxu0 0.0
    %379 = vmatprep.subr.mxu0 0.0
    %380 = vmatpush2.xpose.msra.mxu0 0.0
    %381 = vmatprep.subr.mxu0 0.0
    %382 = vmatpush2.xpose.msra.mxu0 0.0
    %383 = vmatprep.subr.mxu0 0.0
    %384 = vmatpush2.xpose.msra.mxu0 0.0
    %385 = vmatprep.subr.mxu0 0.0
    %386 = vmatpush2.xpose.msra.mxu0 0.0
    %387 = vmatprep.subr.mxu0 0.0
    %388 = vmatpush2.xpose.msra.mxu0 0.0
    %389 = vmatprep.subr.mxu0 0.0
    %390 = vmatpush2.xpose.msra.mxu0 0.0
    %391 = vmatprep.subr.mxu0 0.0
    %392 = vmatpush2.xpose.msra.mxu0 0.0
    %393 = vmatprep.subr.mxu0 0.0
    %394 = vmatpush2.xpose.msra.mxu0 0.0
    %395 = vmatprep.subr.mxu0 0.0
    %396 = vmatpush2.xpose.msra.mxu0 0.0
    %397 = vmatprep.subr.mxu0 0.0
    %398 = vmatpush2.xpose.msra.mxu0 0.0
    %399 = vmatprep.subr.mxu0 0.0
    %400 = vmatpush2.xpose.msra.mxu0 0.0
    %401 = vmatprep.subr.mxu0 0.0
    %402 = vmatpush2.xpose.msra.mxu0 0.0
    %403 = vmatprep.mubr.f32.mxu0 0.0
    %404 = vmatmul.mubr.f32.gmra.mxu0 %v335
    %v405 = vpop.f32.mrf.mxu0
    %v406 = vadd.f32 0.0, %v405
    %v407 = vpop.f32.mrf.mxu0
    %408 = vdwg.mxu0
    %409 = vrot.lane.b32.xlu0 %v222, 64
    %v410 = vpop.permute.xlu0 %409
    %v411 = vsel %vm334, %v227, 0
    %v413 = vsel %vm334, %v410, 0
    %415 = vmatprep.subr.mxu0 0.0
    %416 = vmatpush1.xpose.msra.mxu0 0.0
    %417 = vmatprep.subr.mxu0 0.0
    %418 = vmatpush1.xpose.msra.mxu0 0.0
    %419 = vmatprep.subr.mxu0 0.0
    %420 = vmatpush1.xpose.msra.mxu0 0.0
    %421 = vmatprep.subr.mxu0 0.0
    %422 = vmatpush1.xpose.msra.mxu0 0.0
    %423 = vmatprep.subr.mxu0 0.0
    %424 = vmatpush1.xpose.msra.mxu0 0.0
    %425 = vmatprep.subr.mxu0 0.0
    %426 = vmatpush1.xpose.msra.mxu0 0.0
    %427 = vmatprep.subr.mxu0 0.0
    %428 = vmatpush1.xpose.msra.mxu0 0.0
    %429 = vmatprep.subr.mxu0 0.0
    %430 = vmatpush1.xpose.msra.mxu0 0.0
    %431 = vmatprep.subr.mxu0 0.0
    %432 = vmatpush1.xpose.msra.mxu0 0.0
    %433 = vmatprep.subr.mxu0 0.0
    %434 = vmatpush1.xpose.msra.mxu0 0.0
    %435 = vmatprep.subr.mxu0 0.0
    %436 = vmatpush1.xpose.msra.mxu0 0.0
    %437 = vmatprep.subr.mxu0 0.0
    %438 = vmatpush1.xpose.msra.mxu0 0.0
    %439 = vmatprep.subr.mxu0 0.0
    %440 = vmatpush1.xpose.msra.mxu0 0.0
    %441 = vmatprep.subr.mxu0 0.0
    %442 = vmatpush1.xpose.msra.mxu0 0.0
    %443 = vmatprep.subr.mxu0 0.0
    %444 = vmatpush1.xpose.msra.mxu0 0.0
    %445 = vmatprep.subr.mxu0 0.0
    %446 = vmatpush1.xpose.msra.mxu0 %v413
    %447 = vmatprep.subr.mxu0 0.0
    %448 = vmatpush2.xpose.msra.mxu0 0.0
    %449 = vmatprep.subr.mxu0 0.0
    %450 = vmatpush2.xpose.msra.mxu0 0.0
    %451 = vmatprep.subr.mxu0 0.0
    %452 = vmatpush2.xpose.msra.mxu0 0.0
    %453 = vmatprep.subr.mxu0 0.0
    %454 = vmatpush2.xpose.msra.mxu0 0.0
    %455 = vmatprep.subr.mxu0 0.0
    %456 = vmatpush2.xpose.msra.mxu0 0.0
    %457 = vmatprep.subr.mxu0 0.0
    %458 = vmatpush2.xpose.msra.mxu0 0.0
    %459 = vmatprep.subr.mxu0 0.0
    %460 = vmatpush2.xpose.msra.mxu0 0.0
    %461 = vmatprep.subr.mxu0 0.0
    %462 = vmatpush2.xpose.msra.mxu0 0.0
    %463 = vmatprep.subr.mxu0 0.0
    %464 = vmatpush2.xpose.msra.mxu0 0.0
    %465 = vmatprep.subr.mxu0 0.0
    %466 = vmatpush2.xpose.msra.mxu0 0.0
    %467 = vmatprep.subr.mxu0 0.0
    %468 = vmatpush2.xpose.msra.mxu0 0.0
    %469 = vmatprep.subr.mxu0 0.0
    %470 = vmatpush2.xpose.msra.mxu0 0.0
    %471 = vmatprep.subr.mxu0 0.0
    %472 = vmatpush2.xpose.msra.mxu0 0.0
    %473 = vmatprep.subr.mxu0 0.0
    %474 = vmatpush2.xpose.msra.mxu0 0.0
    %475 = vmatprep.subr.mxu0 0.0
    %476 = vmatpush2.xpose.msra.mxu0 0.0
    %477 = vmatprep.subr.mxu0 0.0
    %478 = vmatpush2.xpose.msra.mxu0 0.0
    %479 = vmatprep.mubr.f32.mxu0 0.0
    %480 = vmatmul.mubr.f32.gmra.mxu0 %v411
    %v481 = vpop.f32.mrf.mxu0
    %v482 = vadd.f32 0.0, %v481
    %v483 = vpop.f32.mrf.mxu0
    %484 = vdwg.mxu0
    %485 = vrot.lane.b32.xlu0 %v261, 64
    %v486 = vpop.permute.xlu0 %485
    %v487 = vsel %vm334, %v231, 0
    %v489 = vsel %vm334, %v486, 0
    %491 = vmatprep.subr.mxu0 0.0
    %492 = vmatpush1.xpose.msra.mxu0 0.0
    %493 = vmatprep.subr.mxu0 0.0
    %494 = vmatpush1.xpose.msra.mxu0 0.0
    %495 = vmatprep.subr.mxu0 0.0
    %496 = vmatpush1.xpose.msra.mxu0 0.0
    %497 = vmatprep.subr.mxu0 0.0
    %498 = vmatpush1.xpose.msra.mxu0 0.0
    %499 = vmatprep.subr.mxu0 0.0
    %500 = vmatpush1.xpose.msra.mxu0 0.0
    %501 = vmatprep.subr.mxu0 0.0
    %502 = vmatpush1.xpose.msra.mxu0 0.0
    %503 = vmatprep.subr.mxu0 0.0
    %504 = vmatpush1.xpose.msra.mxu0 0.0
    %505 = vmatprep.subr.mxu0 0.0
    %506 = vmatpush1.xpose.msra.mxu0 0.0
    %507 = vmatprep.subr.mxu0 0.0
    %508 = vmatpush1.xpose.msra.mxu0 0.0
    %509 = vmatprep.subr.mxu0 0.0
    %510 = vmatpush1.xpose.msra.mxu0 0.0
    %511 = vmatprep.subr.mxu0 0.0
    %512 = vmatpush1.xpose.msra.mxu0 0.0
    %513 = vmatprep.subr.mxu0 0.0
    %514 = vmatpush1.xpose.msra.mxu0 0.0
    %515 = vmatprep.subr.mxu0 0.0
    %516 = vmatpush1.xpose.msra.mxu0 0.0
    %517 = vmatprep.subr.mxu0 0.0
    %518 = vmatpush1.xpose.msra.mxu0 0.0
    %519 = vmatprep.subr.mxu0 0.0
    %520 = vmatpush1.xpose.msra.mxu0 0.0
    %521 = vmatprep.subr.mxu0 0.0
    %522 = vmatpush1.xpose.msra.mxu0 %v489
    %523 = vmatprep.subr.mxu0 0.0
    %524 = vmatpush2.xpose.msra.mxu0 0.0
    %525 = vmatprep.subr.mxu0 0.0
    %526 = vmatpush2.xpose.msra.mxu0 0.0
    %527 = vmatprep.subr.mxu0 0.0
    %528 = vmatpush2.xpose.msra.mxu0 0.0
    %529 = vmatprep.subr.mxu0 0.0
    %530 = vmatpush2.xpose.msra.mxu0 0.0
    %531 = vmatprep.subr.mxu0 0.0
    %532 = vmatpush2.xpose.msra.mxu0 0.0
    %533 = vmatprep.subr.mxu0 0.0
    %534 = vmatpush2.xpose.msra.mxu0 0.0
    %535 = vmatprep.subr.mxu0 0.0
    %536 = vmatpush2.xpose.msra.mxu0 0.0
    %537 = vmatprep.subr.mxu0 0.0
    %538 = vmatpush2.xpose.msra.mxu0 0.0
    %539 = vmatprep.subr.mxu0 0.0
    %540 = vmatpush2.xpose.msra.mxu0 0.0
    %541 = vmatprep.subr.mxu0 0.0
    %542 = vmatpush2.xpose.msra.mxu0 0.0
    %543 = vmatprep.subr.mxu0 0.0
    %544 = vmatpush2.xpose.msra.mxu0 0.0
    %545 = vmatprep.subr.mxu0 0.0
    %546 = vmatpush2.xpose.msra.mxu0 0.0
    %547 = vmatprep.subr.mxu0 0.0
    %548 = vmatpush2.xpose.msra.mxu0 0.0
    %549 = vmatprep.subr.mxu0 0.0
    %550 = vmatpush2.xpose.msra.mxu0 0.0
    %551 = vmatprep.subr.mxu0 0.0
    %552 = vmatpush2.xpose.msra.mxu0 0.0
    %553 = vmatprep.subr.mxu0 0.0
    %554 = vmatpush2.xpose.msra.mxu0 0.0
    %555 = vmatprep.mubr.f32.mxu0 0.0
    %556 = vmatmul.mubr.f32.gmra.mxu0 %v487
    %v557 = vpop.f32.mrf.mxu0
    %v558 = vadd.f32 0.0, %v557
    %v559 = vpop.f32.mrf.mxu0
    %560 = vdwg.mxu0
    %561 = vrot.lane.b32.xlu0 %v263, 64
    %v562 = vpop.permute.xlu0 %561
    %v563 = vsel %vm334, %v233, 0
    %v565 = vsel %vm334, %v562, 0
    %567 = vmatprep.subr.mxu0 0.0
    %568 = vmatpush1.xpose.msra.mxu0 0.0
    %569 = vmatprep.subr.mxu0 0.0
    %570 = vmatpush1.xpose.msra.mxu0 0.0
    %571 = vmatprep.subr.mxu0 0.0
    %572 = vmatpush1.xpose.msra.mxu0 0.0
    %573 = vmatprep.subr.mxu0 0.0
    %574 = vmatpush1.xpose.msra.mxu0 0.0
    %575 = vmatprep.subr.mxu0 0.0
    %576 = vmatpush1.xpose.msra.mxu0 0.0
    %577 = vmatprep.subr.mxu0 0.0
    %578 = vmatpush1.xpose.msra.mxu0 0.0
    %579 = vmatprep.subr.mxu0 0.0
    %580 = vmatpush1.xpose.msra.mxu0 0.0
    %581 = vmatprep.subr.mxu0 0.0
    %582 = vmatpush1.xpose.msra.mxu0 0.0
    %583 = vmatprep.subr.mxu0 0.0
    %584 = vmatpush1.xpose.msra.mxu0 0.0
    %585 = vmatprep.subr.mxu0 0.0
    %586 = vmatpush1.xpose.msra.mxu0 0.0
    %587 = vmatprep.subr.mxu0 0.0
    %588 = vmatpush1.xpose.msra.mxu0 0.0
    %589 = vmatprep.subr.mxu0 0.0
    %590 = vmatpush1.xpose.msra.mxu0 0.0
    %591 = vmatprep.subr.mxu0 0.0
    %592 = vmatpush1.xpose.msra.mxu0 0.0
    %593 = vmatprep.subr.mxu0 0.0
    %594 = vmatpush1.xpose.msra.mxu0 0.0
    %595 = vmatprep.subr.mxu0 0.0
    %596 = vmatpush1.xpose.msra.mxu0 0.0
    %597 = vmatprep.subr.mxu0 0.0
    %598 = vmatpush1.xpose.msra.mxu0 %v565
    %599 = vmatprep.subr.mxu0 0.0
    %600 = vmatpush2.xpose.msra.mxu0 0.0
    %601 = vmatprep.subr.mxu0 0.0
    %602 = vmatpush2.xpose.msra.mxu0 0.0
    %603 = vmatprep.subr.mxu0 0.0
    %604 = vmatpush2.xpose.msra.mxu0 0.0
    %605 = vmatprep.subr.mxu0 0.0
    %606 = vmatpush2.xpose.msra.mxu0 0.0
    %607 = vmatprep.subr.mxu0 0.0
    %608 = vmatpush2.xpose.msra.mxu0 0.0
    %609 = vmatprep.subr.mxu0 0.0
    %610 = vmatpush2.xpose.msra.mxu0 0.0
    %611 = vmatprep.subr.mxu0 0.0
    %612 = vmatpush2.xpose.msra.mxu0 0.0
    %613 = vmatprep.subr.mxu0 0.0
    %614 = vmatpush2.xpose.msra.mxu0 0.0
    %615 = vmatprep.subr.mxu0 0.0
    %616 = vmatpush2.xpose.msra.mxu0 0.0
    %617 = vmatprep.subr.mxu0 0.0
    %618 = vmatpush2.xpose.msra.mxu0 0.0
    %619 = vmatprep.subr.mxu0 0.0
    %620 = vmatpush2.xpose.msra.mxu0 0.0
    %621 = vmatprep.subr.mxu0 0.0
    %622 = vmatpush2.xpose.msra.mxu0 0.0
    %623 = vmatprep.subr.mxu0 0.0
    %624 = vmatpush2.xpose.msra.mxu0 0.0
    %625 = vmatprep.subr.mxu0 0.0
    %626 = vmatpush2.xpose.msra.mxu0 0.0
    %627 = vmatprep.subr.mxu0 0.0
    %628 = vmatpush2.xpose.msra.mxu0 0.0
    %629 = vmatprep.subr.mxu0 0.0
    %630 = vmatpush2.xpose.msra.mxu0 0.0
    %631 = vmatprep.mubr.f32.mxu0 0.0
    %632 = vmatmul.mubr.f32.gmra.mxu0 %v563
    %v633 = vpop.f32.mrf.mxu0
    %v634 = vadd.f32 0.0, %v633
    %v635 = vpop.f32.mrf.mxu0
    %636 = vdwg.mxu0
    %637 = vrot.lane.b32.xlu0 %v265, 64
    %v638 = vpop.permute.xlu0 %637
    %v639 = vsel %vm334, %v235, 0
    %v641 = vsel %vm334, %v638, 0
    %643 = vmatprep.subr.mxu0 0.0
    %644 = vmatpush1.xpose.msra.mxu0 0.0
    %645 = vmatprep.subr.mxu0 0.0
    %646 = vmatpush1.xpose.msra.mxu0 0.0
    %647 = vmatprep.subr.mxu0 0.0
    %648 = vmatpush1.xpose.msra.mxu0 0.0
    %649 = vmatprep.subr.mxu0 0.0
    %650 = vmatpush1.xpose.msra.mxu0 0.0
    %651 = vmatprep.subr.mxu0 0.0
    %652 = vmatpush1.xpose.msra.mxu0 0.0
    %653 = vmatprep.subr.mxu0 0.0
    %654 = vmatpush1.xpose.msra.mxu0 0.0
    %655 = vmatprep.subr.mxu0 0.0
    %656 = vmatpush1.xpose.msra.mxu0 0.0
    %657 = vmatprep.subr.mxu0 0.0
    %658 = vmatpush1.xpose.msra.mxu0 0.0
    %659 = vmatprep.subr.mxu0 0.0
    %660 = vmatpush1.xpose.msra.mxu0 0.0
    %661 = vmatprep.subr.mxu0 0.0
    %662 = vmatpush1.xpose.msra.mxu0 0.0
    %663 = vmatprep.subr.mxu0 0.0
    %664 = vmatpush1.xpose.msra.mxu0 0.0
    %665 = vmatprep.subr.mxu0 0.0
    %666 = vmatpush1.xpose.msra.mxu0 0.0
    %667 = vmatprep.subr.mxu0 0.0
    %668 = vmatpush1.xpose.msra.mxu0 0.0
    %669 = vmatprep.subr.mxu0 0.0
    %670 = vmatpush1.xpose.msra.mxu0 0.0
    %671 = vmatprep.subr.mxu0 0.0
    %672 = vmatpush1.xpose.msra.mxu0 0.0
    %673 = vmatprep.subr.mxu0 0.0
    %674 = vmatpush1.xpose.msra.mxu0 %v641
    %675 = vmatprep.subr.mxu0 0.0
    %676 = vmatpush2.xpose.msra.mxu0 0.0
    %677 = vmatprep.subr.mxu0 0.0
    %678 = vmatpush2.xpose.msra.mxu0 0.0
    %679 = vmatprep.subr.mxu0 0.0
    %680 = vmatpush2.xpose.msra.mxu0 0.0
    %681 = vmatprep.subr.mxu0 0.0
    %682 = vmatpush2.xpose.msra.mxu0 0.0
    %683 = vmatprep.subr.mxu0 0.0
    %684 = vmatpush2.xpose.msra.mxu0 0.0
    %685 = vmatprep.subr.mxu0 0.0
    %686 = vmatpush2.xpose.msra.mxu0 0.0
    %687 = vmatprep.subr.mxu0 0.0
    %688 = vmatpush2.xpose.msra.mxu0 0.0
    %689 = vmatprep.subr.mxu0 0.0
    %690 = vmatpush2.xpose.msra.mxu0 0.0
    %691 = vmatprep.subr.mxu0 0.0
    %692 = vmatpush2.xpose.msra.mxu0 0.0
    %693 = vmatprep.subr.mxu0 0.0
    %694 = vmatpush2.xpose.msra.mxu0 0.0
    %695 = vmatprep.subr.mxu0 0.0
    %696 = vmatpush2.xpose.msra.mxu0 0.0
    %697 = vmatprep.subr.mxu0 0.0
    %698 = vmatpush2.xpose.msra.mxu0 0.0
    %699 = vmatprep.subr.mxu0 0.0
    %700 = vmatpush2.xpose.msra.mxu0 0.0
    %701 = vmatprep.subr.mxu0 0.0
    %702 = vmatpush2.xpose.msra.mxu0 0.0
    %703 = vmatprep.subr.mxu0 0.0
    %704 = vmatpush2.xpose.msra.mxu0 0.0
    %705 = vmatprep.subr.mxu0 0.0
    %706 = vmatpush2.xpose.msra.mxu0 0.0
    %707 = vmatprep.mubr.f32.mxu0 0.0
    %708 = vmatmul.mubr.f32.gmra.mxu0 %v639
    %v709 = vpop.f32.mrf.mxu0
    %v710 = vadd.f32 0.0, %v709
    %v711 = vpop.f32.mrf.mxu0
    %712 = vdwg.mxu0
    %713 = vrot.lane.b32.xlu0 %v267, 64
    %v714 = vpop.permute.xlu0 %713
    %v715 = vsel %vm334, %v237, 0
    %v717 = vsel %vm334, %v714, 0
    %719 = vmatprep.subr.mxu0 0.0
    %720 = vmatpush1.xpose.msra.mxu0 0.0
    %721 = vmatprep.subr.mxu0 0.0
    %722 = vmatpush1.xpose.msra.mxu0 0.0
    %723 = vmatprep.subr.mxu0 0.0
    %724 = vmatpush1.xpose.msra.mxu0 0.0
    %725 = vmatprep.subr.mxu0 0.0
    %726 = vmatpush1.xpose.msra.mxu0 0.0
    %727 = vmatprep.subr.mxu0 0.0
    %728 = vmatpush1.xpose.msra.mxu0 0.0
    %729 = vmatprep.subr.mxu0 0.0
    %730 = vmatpush1.xpose.msra.mxu0 0.0
    %731 = vmatprep.subr.mxu0 0.0
    %732 = vmatpush1.xpose.msra.mxu0 0.0
    %733 = vmatprep.subr.mxu0 0.0
    %734 = vmatpush1.xpose.msra.mxu0 0.0
    %735 = vmatprep.subr.mxu0 0.0
    %736 = vmatpush1.xpose.msra.mxu0 0.0
    %737 = vmatprep.subr.mxu0 0.0
    %738 = vmatpush1.xpose.msra.mxu0 0.0
    %739 = vmatprep.subr.mxu0 0.0
    %740 = vmatpush1.xpose.msra.mxu0 0.0
    %741 = vmatprep.subr.mxu0 0.0
    %742 = vmatpush1.xpose.msra.mxu0 0.0
    %743 = vmatprep.subr.mxu0 0.0
    %744 = vmatpush1.xpose.msra.mxu0 0.0
    %745 = vmatprep.subr.mxu0 0.0
    %746 = vmatpush1.xpose.msra.mxu0 0.0
    %747 = vmatprep.subr.mxu0 0.0
    %748 = vmatpush1.xpose.msra.mxu0 0.0
    %749 = vmatprep.subr.mxu0 0.0
    %750 = vmatpush1.xpose.msra.mxu0 %v717
    %751 = vmatprep.subr.mxu0 0.0
    %752 = vmatpush2.xpose.msra.mxu0 0.0
    %753 = vmatprep.subr.mxu0 0.0
    %754 = vmatpush2.xpose.msra.mxu0 0.0
    %755 = vmatprep.subr.mxu0 0.0
    %756 = vmatpush2.xpose.msra.mxu0 0.0
    %757 = vmatprep.subr.mxu0 0.0
    %758 = vmatpush2.xpose.msra.mxu0 0.0
    %759 = vmatprep.subr.mxu0 0.0
    %760 = vmatpush2.xpose.msra.mxu0 0.0
    %761 = vmatprep.subr.mxu0 0.0
    %762 = vmatpush2.xpose.msra.mxu0 0.0
    %763 = vmatprep.subr.mxu0 0.0
    %764 = vmatpush2.xpose.msra.mxu0 0.0
    %765 = vmatprep.subr.mxu0 0.0
    %766 = vmatpush2.xpose.msra.mxu0 0.0
    %767 = vmatprep.subr.mxu0 0.0
    %768 = vmatpush2.xpose.msra.mxu0 0.0
    %769 = vmatprep.subr.mxu0 0.0
    %770 = vmatpush2.xpose.msra.mxu0 0.0
    %771 = vmatprep.subr.mxu0 0.0
    %772 = vmatpush2.xpose.msra.mxu0 0.0
    %773 = vmatprep.subr.mxu0 0.0
    %774 = vmatpush2.xpose.msra.mxu0 0.0
    %775 = vmatprep.subr.mxu0 0.0
    %776 = vmatpush2.xpose.msra.mxu0 0.0
    %777 = vmatprep.subr.mxu0 0.0
    %778 = vmatpush2.xpose.msra.mxu0 0.0
    %779 = vmatprep.subr.mxu0 0.0
    %780 = vmatpush2.xpose.msra.mxu0 0.0
    %781 = vmatprep.subr.mxu0 0.0
    %782 = vmatpush2.xpose.msra.mxu0 0.0
    %783 = vmatprep.mubr.f32.mxu0 0.0
    %784 = vmatmul.mubr.f32.gmra.mxu0 %v715
    %v785 = vpop.f32.mrf.mxu0
    %v786 = vadd.f32 0.0, %v785
    %v787 = vpop.f32.mrf.mxu0
    %788 = vdwg.mxu0
    %789 = vrot.lane.b32.xlu0 %v269, 64
    %v790 = vpop.permute.xlu0 %789
    %v791 = vsel %vm334, %v239, 0
    %v793 = vsel %vm334, %v790, 0
    %795 = vmatprep.subr.mxu0 0.0
    %796 = vmatpush1.xpose.msra.mxu0 0.0
    %797 = vmatprep.subr.mxu0 0.0
    %798 = vmatpush1.xpose.msra.mxu0 0.0
    %799 = vmatprep.subr.mxu0 0.0
    %800 = vmatpush1.xpose.msra.mxu0 0.0
    %801 = vmatprep.subr.mxu0 0.0
    %802 = vmatpush1.xpose.msra.mxu0 0.0
    %803 = vmatprep.subr.mxu0 0.0
    %804 = vmatpush1.xpose.msra.mxu0 0.0
    %805 = vmatprep.subr.mxu0 0.0
    %806 = vmatpush1.xpose.msra.mxu0 0.0
    %807 = vmatprep.subr.mxu0 0.0
    %808 = vmatpush1.xpose.msra.mxu0 0.0
    %809 = vmatprep.subr.mxu0 0.0
    %810 = vmatpush1.xpose.msra.mxu0 0.0
    %811 = vmatprep.subr.mxu0 0.0
    %812 = vmatpush1.xpose.msra.mxu0 0.0
    %813 = vmatprep.subr.mxu0 0.0
    %814 = vmatpush1.xpose.msra.mxu0 0.0
    %815 = vmatprep.subr.mxu0 0.0
    %816 = vmatpush1.xpose.msra.mxu0 0.0
    %817 = vmatprep.subr.mxu0 0.0
    %818 = vmatpush1.xpose.msra.mxu0 0.0
    %819 = vmatprep.subr.mxu0 0.0
    %820 = vmatpush1.xpose.msra.mxu0 0.0
    %821 = vmatprep.subr.mxu0 0.0
    %822 = vmatpush1.xpose.msra.mxu0 0.0
    %823 = vmatprep.subr.mxu0 0.0
    %824 = vmatpush1.xpose.msra.mxu0 0.0
    %825 = vmatprep.subr.mxu0 0.0
    %826 = vmatpush1.xpose.msra.mxu0 %v793
    %827 = vmatprep.subr.mxu0 0.0
    %828 = vmatpush2.xpose.msra.mxu0 0.0
    %829 = vmatprep.subr.mxu0 0.0
    %830 = vmatpush2.xpose.msra.mxu0 0.0
    %831 = vmatprep.subr.mxu0 0.0
    %832 = vmatpush2.xpose.msra.mxu0 0.0
    %833 = vmatprep.subr.mxu0 0.0
    %834 = vmatpush2.xpose.msra.mxu0 0.0
    %835 = vmatprep.subr.mxu0 0.0
    %836 = vmatpush2.xpose.msra.mxu0 0.0
    %837 = vmatprep.subr.mxu0 0.0
    %838 = vmatpush2.xpose.msra.mxu0 0.0
    %839 = vmatprep.subr.mxu0 0.0
    %840 = vmatpush2.xpose.msra.mxu0 0.0
    %841 = vmatprep.subr.mxu0 0.0
    %842 = vmatpush2.xpose.msra.mxu0 0.0
    %843 = vmatprep.subr.mxu0 0.0
    %844 = vmatpush2.xpose.msra.mxu0 0.0
    %845 = vmatprep.subr.mxu0 0.0
    %846 = vmatpush2.xpose.msra.mxu0 0.0
    %847 = vmatprep.subr.mxu0 0.0
    %848 = vmatpush2.xpose.msra.mxu0 0.0
    %849 = vmatprep.subr.mxu0 0.0
    %850 = vmatpush2.xpose.msra.mxu0 0.0
    %851 = vmatprep.subr.mxu0 0.0
    %852 = vmatpush2.xpose.msra.mxu0 0.0
    %853 = vmatprep.subr.mxu0 0.0
    %854 = vmatpush2.xpose.msra.mxu0 0.0
    %855 = vmatprep.subr.mxu0 0.0
    %856 = vmatpush2.xpose.msra.mxu0 0.0
    %857 = vmatprep.subr.mxu0 0.0
    %858 = vmatpush2.xpose.msra.mxu0 0.0
    %859 = vmatprep.mubr.f32.mxu0 0.0
    %860 = vmatmul.mubr.f32.gmra.mxu0 %v791
    %v861 = vpop.f32.mrf.mxu0
    %v862 = vadd.f32 0.0, %v861
    %v863 = vpop.f32.mrf.mxu0
    %864 = vdwg.mxu0
    %865 = vrot.lane.b32.xlu0 %v271, 64
    %v866 = vpop.permute.xlu0 %865
    %v867 = vsel %vm334, %v241, 0
    %v869 = vsel %vm334, %v866, 0
    %871 = vmatprep.subr.mxu0 0.0
    %872 = vmatpush1.xpose.msra.mxu0 0.0
    %873 = vmatprep.subr.mxu0 0.0
    %874 = vmatpush1.xpose.msra.mxu0 0.0
    %875 = vmatprep.subr.mxu0 0.0
    %876 = vmatpush1.xpose.msra.mxu0 0.0
    %877 = vmatprep.subr.mxu0 0.0
    %878 = vmatpush1.xpose.msra.mxu0 0.0
    %879 = vmatprep.subr.mxu0 0.0
    %880 = vmatpush1.xpose.msra.mxu0 0.0
    %881 = vmatprep.subr.mxu0 0.0
    %882 = vmatpush1.xpose.msra.mxu0 0.0
    %883 = vmatprep.subr.mxu0 0.0
    %884 = vmatpush1.xpose.msra.mxu0 0.0
    %885 = vmatprep.subr.mxu0 0.0
    %886 = vmatpush1.xpose.msra.mxu0 0.0
    %887 = vmatprep.subr.mxu0 0.0
    %888 = vmatpush1.xpose.msra.mxu0 0.0
    %889 = vmatprep.subr.mxu0 0.0
    %890 = vmatpush1.xpose.msra.mxu0 0.0
    %891 = vmatprep.subr.mxu0 0.0
    %892 = vmatpush1.xpose.msra.mxu0 0.0
    %893 = vmatprep.subr.mxu0 0.0
    %894 = vmatpush1.xpose.msra.mxu0 0.0
    %895 = vmatprep.subr.mxu0 0.0
    %896 = vmatpush1.xpose.msra.mxu0 0.0
    %897 = vmatprep.subr.mxu0 0.0
    %898 = vmatpush1.xpose.msra.mxu0 0.0
    %899 = vmatprep.subr.mxu0 0.0
    %900 = vmatpush1.xpose.msra.mxu0 0.0
    %901 = vmatprep.subr.mxu0 0.0
    %902 = vmatpush1.xpose.msra.mxu0 %v869
    %903 = vmatprep.subr.mxu0 0.0
    %904 = vmatpush2.xpose.msra.mxu0 0.0
    %905 = vmatprep.subr.mxu0 0.0
    %906 = vmatpush2.xpose.msra.mxu0 0.0
    %907 = vmatprep.subr.mxu0 0.0
    %908 = vmatpush2.xpose.msra.mxu0 0.0
    %909 = vmatprep.subr.mxu0 0.0
    %910 = vmatpush2.xpose.msra.mxu0 0.0
    %911 = vmatprep.subr.mxu0 0.0
    %912 = vmatpush2.xpose.msra.mxu0 0.0
    %913 = vmatprep.subr.mxu0 0.0
    %914 = vmatpush2.xpose.msra.mxu0 0.0
    %915 = vmatprep.subr.mxu0 0.0
    %916 = vmatpush2.xpose.msra.mxu0 0.0
    %917 = vmatprep.subr.mxu0 0.0
    %918 = vmatpush2.xpose.msra.mxu0 0.0
    %919 = vmatprep.subr.mxu0 0.0
    %920 = vmatpush2.xpose.msra.mxu0 0.0
    %921 = vmatprep.subr.mxu0 0.0
    %922 = vmatpush2.xpose.msra.mxu0 0.0
    %923 = vmatprep.subr.mxu0 0.0
    %924 = vmatpush2.xpose.msra.mxu0 0.0
    %925 = vmatprep.subr.mxu0 0.0
    %926 = vmatpush2.xpose.msra.mxu0 0.0
    %927 = vmatprep.subr.mxu0 0.0
    %928 = vmatpush2.xpose.msra.mxu0 0.0
    %929 = vmatprep.subr.mxu0 0.0
    %930 = vmatpush2.xpose.msra.mxu0 0.0
    %931 = vmatprep.subr.mxu0 0.0
    %932 = vmatpush2.xpose.msra.mxu0 0.0
    %933 = vmatprep.subr.mxu0 0.0
    %934 = vmatpush2.xpose.msra.mxu0 0.0
    %935 = vmatprep.mubr.f32.mxu0 0.0
    %936 = vmatmul.mubr.f32.gmra.mxu0 %v867
    %v937 = vpop.f32.mrf.mxu0
    %v938 = vadd.f32 0.0, %v937
    %v939 = vpop.f32.mrf.mxu0
    %940 = vdwg.mxu0
    %941 = vrot.lane.b32.xlu0 %v273, 64
    %v942 = vpop.permute.xlu0 %941
    %v943 = vsel %vm334, %v243, 0
    %v945 = vsel %vm334, %v942, 0
    %947 = vmatprep.subr.mxu0 0.0
    %948 = vmatpush1.xpose.msra.mxu0 0.0
    %949 = vmatprep.subr.mxu0 0.0
    %950 = vmatpush1.xpose.msra.mxu0 0.0
    %951 = vmatprep.subr.mxu0 0.0
    %952 = vmatpush1.xpose.msra.mxu0 0.0
    %953 = vmatprep.subr.mxu0 0.0
    %954 = vmatpush1.xpose.msra.mxu0 0.0
    %955 = vmatprep.subr.mxu0 0.0
    %956 = vmatpush1.xpose.msra.mxu0 0.0
    %957 = vmatprep.subr.mxu0 0.0
    %958 = vmatpush1.xpose.msra.mxu0 0.0
    %959 = vmatprep.subr.mxu0 0.0
    %960 = vmatpush1.xpose.msra.mxu0 0.0
    %961 = vmatprep.subr.mxu0 0.0
    %962 = vmatpush1.xpose.msra.mxu0 0.0
    %963 = vmatprep.subr.mxu0 0.0
    %964 = vmatpush1.xpose.msra.mxu0 0.0
    %965 = vmatprep.subr.mxu0 0.0
    %966 = vmatpush1.xpose.msra.mxu0 0.0
    %967 = vmatprep.subr.mxu0 0.0
    %968 = vmatpush1.xpose.msra.mxu0 0.0
    %969 = vmatprep.subr.mxu0 0.0
    %970 = vmatpush1.xpose.msra.mxu0 0.0
    %971 = vmatprep.subr.mxu0 0.0
    %972 = vmatpush1.xpose.msra.mxu0 0.0
    %973 = vmatprep.subr.mxu0 0.0
    %974 = vmatpush1.xpose.msra.mxu0 0.0
    %975 = vmatprep.subr.mxu0 0.0
    %976 = vmatpush1.xpose.msra.mxu0 0.0
    %977 = vmatprep.subr.mxu0 0.0
    %978 = vmatpush1.xpose.msra.mxu0 %v945
    %979 = vmatprep.subr.mxu0 0.0
    %980 = vmatpush2.xpose.msra.mxu0 0.0
    %981 = vmatprep.subr.mxu0 0.0
    %982 = vmatpush2.xpose.msra.mxu0 0.0
    %983 = vmatprep.subr.mxu0 0.0
    %984 = vmatpush2.xpose.msra.mxu0 0.0
    %985 = vmatprep.subr.mxu0 0.0
    %986 = vmatpush2.xpose.msra.mxu0 0.0
    %987 = vmatprep.subr.mxu0 0.0
    %988 = vmatpush2.xpose.msra.mxu0 0.0
    %989 = vmatprep.subr.mxu0 0.0
    %990 = vmatpush2.xpose.msra.mxu0 0.0
    %991 = vmatprep.subr.mxu0 0.0
    %992 = vmatpush2.xpose.msra.mxu0 0.0
    %993 = vmatprep.subr.mxu0 0.0
    %994 = vmatpush2.xpose.msra.mxu0 0.0
    %995 = vmatprep.subr.mxu0 0.0
    %996 = vmatpush2.xpose.msra.mxu0 0.0
    %997 = vmatprep.subr.mxu0 0.0
    %998 = vmatpush2.xpose.msra.mxu0 0.0
    %999 = vmatprep.subr.mxu0 0.0
    %1000 = vmatpush2.xpose.msra.mxu0 0.0
    %1001 = vmatprep.subr.mxu0 0.0
    %1002 = vmatpush2.xpose.msra.mxu0 0.0
    %1003 = vmatprep.subr.mxu0 0.0
    %1004 = vmatpush2.xpose.msra.mxu0 0.0
    %1005 = vmatprep.subr.mxu0 0.0
    %1006 = vmatpush2.xpose.msra.mxu0 0.0
    %1007 = vmatprep.subr.mxu0 0.0
    %1008 = vmatpush2.xpose.msra.mxu0 0.0
    %1009 = vmatprep.subr.mxu0 0.0
    %1010 = vmatpush2.xpose.msra.mxu0 0.0
    %1011 = vmatprep.mubr.f32.mxu0 0.0
    %1012 = vmatmul.mubr.f32.gmra.mxu0 %v943
    %v1013 = vpop.f32.mrf.mxu0
    %v1014 = vadd.f32 0.0, %v1013
    %v1015 = vpop.f32.mrf.mxu0
    %1016 = vdwg.mxu0
    %1017 = vrot.lane.b32.xlu0 %v275, 64
    %v1018 = vpop.permute.xlu0 %1017
    %v1019 = vsel %vm334, %v245, 0
    %v1021 = vsel %vm334, %v1018, 0
    %1023 = vmatprep.subr.mxu0 0.0
    %1024 = vmatpush1.xpose.msra.mxu0 0.0
    %1025 = vmatprep.subr.mxu0 0.0
    %1026 = vmatpush1.xpose.msra.mxu0 0.0
    %1027 = vmatprep.subr.mxu0 0.0
    %1028 = vmatpush1.xpose.msra.mxu0 0.0
    %1029 = vmatprep.subr.mxu0 0.0
    %1030 = vmatpush1.xpose.msra.mxu0 0.0
    %1031 = vmatprep.subr.mxu0 0.0
    %1032 = vmatpush1.xpose.msra.mxu0 0.0
    %1033 = vmatprep.subr.mxu0 0.0
    %1034 = vmatpush1.xpose.msra.mxu0 0.0
    %1035 = vmatprep.subr.mxu0 0.0
    %1036 = vmatpush1.xpose.msra.mxu0 0.0
    %1037 = vmatprep.subr.mxu0 0.0
    %1038 = vmatpush1.xpose.msra.mxu0 0.0
    %1039 = vmatprep.subr.mxu0 0.0
    %1040 = vmatpush1.xpose.msra.mxu0 0.0
    %1041 = vmatprep.subr.mxu0 0.0
    %1042 = vmatpush1.xpose.msra.mxu0 0.0
    %1043 = vmatprep.subr.mxu0 0.0
    %1044 = vmatpush1.xpose.msra.mxu0 0.0
    %1045 = vmatprep.subr.mxu0 0.0
    %1046 = vmatpush1.xpose.msra.mxu0 0.0
    %1047 = vmatprep.subr.mxu0 0.0
    %1048 = vmatpush1.xpose.msra.mxu0 0.0
    %1049 = vmatprep.subr.mxu0 0.0
    %1050 = vmatpush1.xpose.msra.mxu0 0.0
    %1051 = vmatprep.subr.mxu0 0.0
    %1052 = vmatpush1.xpose.msra.mxu0 0.0
    %1053 = vmatprep.subr.mxu0 0.0
    %1054 = vmatpush1.xpose.msra.mxu0 %v1021
    %1055 = vmatprep.subr.mxu0 0.0
    %1056 = vmatpush2.xpose.msra.mxu0 0.0
    %1057 = vmatprep.subr.mxu0 0.0
    %1058 = vmatpush2.xpose.msra.mxu0 0.0
    %1059 = vmatprep.subr.mxu0 0.0
    %1060 = vmatpush2.xpose.msra.mxu0 0.0
    %1061 = vmatprep.subr.mxu0 0.0
    %1062 = vmatpush2.xpose.msra.mxu0 0.0
    %1063 = vmatprep.subr.mxu0 0.0
    %1064 = vmatpush2.xpose.msra.mxu0 0.0
    %1065 = vmatprep.subr.mxu0 0.0
    %1066 = vmatpush2.xpose.msra.mxu0 0.0
    %1067 = vmatprep.subr.mxu0 0.0
    %1068 = vmatpush2.xpose.msra.mxu0 0.0
    %1069 = vmatprep.subr.mxu0 0.0
    %1070 = vmatpush2.xpose.msra.mxu0 0.0
    %1071 = vmatprep.subr.mxu0 0.0
    %1072 = vmatpush2.xpose.msra.mxu0 0.0
    %1073 = vmatprep.subr.mxu0 0.0
    %1074 = vmatpush2.xpose.msra.mxu0 0.0
    %1075 = vmatprep.subr.mxu0 0.0
    %1076 = vmatpush2.xpose.msra.mxu0 0.0
    %1077 = vmatprep.subr.mxu0 0.0
    %1078 = vmatpush2.xpose.msra.mxu0 0.0
    %1079 = vmatprep.subr.mxu0 0.0
    %1080 = vmatpush2.xpose.msra.mxu0 0.0
    %1081 = vmatprep.subr.mxu0 0.0
    %1082 = vmatpush2.xpose.msra.mxu0 0.0
    %1083 = vmatprep.subr.mxu0 0.0
    %1084 = vmatpush2.xpose.msra.mxu0 0.0
    %1085 = vmatprep.subr.mxu0 0.0
    %1086 = vmatpush2.xpose.msra.mxu0 0.0
    %1087 = vmatprep.mubr.f32.mxu0 0.0
    %1088 = vmatmul.mubr.f32.gmra.mxu0 %v1019
    %v1089 = vpop.f32.mrf.mxu0
    %v1090 = vadd.f32 0.0, %v1089
    %v1091 = vpop.f32.mrf.mxu0
    %1092 = vdwg.mxu0
    %1093 = vrot.lane.b32.xlu0 %v277, 64
    %v1094 = vpop.permute.xlu0 %1093
    %v1095 = vsel %vm334, %v247, 0
    %v1097 = vsel %vm334, %v1094, 0
    %1099 = vmatprep.subr.mxu0 0.0
    %1100 = vmatpush1.xpose.msra.mxu0 0.0
    %1101 = vmatprep.subr.mxu0 0.0
    %1102 = vmatpush1.xpose.msra.mxu0 0.0
    %1103 = vmatprep.subr.mxu0 0.0
    %1104 = vmatpush1.xpose.msra.mxu0 0.0
    %1105 = vmatprep.subr.mxu0 0.0
    %1106 = vmatpush1.xpose.msra.mxu0 0.0
    %1107 = vmatprep.subr.mxu0 0.0
    %1108 = vmatpush1.xpose.msra.mxu0 0.0
    %1109 = vmatprep.subr.mxu0 0.0
    %1110 = vmatpush1.xpose.msra.mxu0 0.0
    %1111 = vmatprep.subr.mxu0 0.0
    %1112 = vmatpush1.xpose.msra.mxu0 0.0
    %1113 = vmatprep.subr.mxu0 0.0
    %1114 = vmatpush1.xpose.msra.mxu0 0.0
    %1115 = vmatprep.subr.mxu0 0.0
    %1116 = vmatpush1.xpose.msra.mxu0 0.0
    %1117 = vmatprep.subr.mxu0 0.0
    %1118 = vmatpush1.xpose.msra.mxu0 0.0
    %1119 = vmatprep.subr.mxu0 0.0
    %1120 = vmatpush1.xpose.msra.mxu0 0.0
    %1121 = vmatprep.subr.mxu0 0.0
    %1122 = vmatpush1.xpose.msra.mxu0 0.0
    %1123 = vmatprep.subr.mxu0 0.0
    %1124 = vmatpush1.xpose.msra.mxu0 0.0
    %1125 = vmatprep.subr.mxu0 0.0
    %1126 = vmatpush1.xpose.msra.mxu0 0.0
    %1127 = vmatprep.subr.mxu0 0.0
    %1128 = vmatpush1.xpose.msra.mxu0 0.0
    %1129 = vmatprep.subr.mxu0 0.0
    %1130 = vmatpush1.xpose.msra.mxu0 %v1097
    %1131 = vmatprep.subr.mxu0 0.0
    %1132 = vmatpush2.xpose.msra.mxu0 0.0
    %1133 = vmatprep.subr.mxu0 0.0
    %1134 = vmatpush2.xpose.msra.mxu0 0.0
    %1135 = vmatprep.subr.mxu0 0.0
    %1136 = vmatpush2.xpose.msra.mxu0 0.0
    %1137 = vmatprep.subr.mxu0 0.0
    %1138 = vmatpush2.xpose.msra.mxu0 0.0
    %1139 = vmatprep.subr.mxu0 0.0
    %1140 = vmatpush2.xpose.msra.mxu0 0.0
    %1141 = vmatprep.subr.mxu0 0.0
    %1142 = vmatpush2.xpose.msra.mxu0 0.0
    %1143 = vmatprep.subr.mxu0 0.0
    %1144 = vmatpush2.xpose.msra.mxu0 0.0
    %1145 = vmatprep.subr.mxu0 0.0
    %1146 = vmatpush2.xpose.msra.mxu0 0.0
    %1147 = vmatprep.subr.mxu0 0.0
    %1148 = vmatpush2.xpose.msra.mxu0 0.0
    %1149 = vmatprep.subr.mxu0 0.0
    %1150 = vmatpush2.xpose.msra.mxu0 0.0
    %1151 = vmatprep.subr.mxu0 0.0
    %1152 = vmatpush2.xpose.msra.mxu0 0.0
    %1153 = vmatprep.subr.mxu0 0.0
    %1154 = vmatpush2.xpose.msra.mxu0 0.0
    %1155 = vmatprep.subr.mxu0 0.0
    %1156 = vmatpush2.xpose.msra.mxu0 0.0
    %1157 = vmatprep.subr.mxu0 0.0
    %1158 = vmatpush2.xpose.msra.mxu0 0.0
    %1159 = vmatprep.subr.mxu0 0.0
    %1160 = vmatpush2.xpose.msra.mxu0 0.0
    %1161 = vmatprep.subr.mxu0 0.0
    %1162 = vmatpush2.xpose.msra.mxu0 0.0
    %1163 = vmatprep.mubr.f32.mxu0 0.0
    %1164 = vmatmul.mubr.f32.gmra.mxu0 %v1095
    %v1165 = vpop.f32.mrf.mxu0
    %v1166 = vadd.f32 0.0, %v1165
    %v1167 = vpop.f32.mrf.mxu0
    %1168 = vdwg.mxu0
    %1169 = vrot.lane.b32.xlu0 %v279, 64
    %v1170 = vpop.permute.xlu0 %1169
    %v1171 = vsel %vm334, %v249, 0
    %v1173 = vsel %vm334, %v1170, 0
    %1175 = vmatprep.subr.mxu0 0.0
    %1176 = vmatpush1.xpose.msra.mxu0 0.0
    %1177 = vmatprep.subr.mxu0 0.0
    %1178 = vmatpush1.xpose.msra.mxu0 0.0
    %1179 = vmatprep.subr.mxu0 0.0
    %1180 = vmatpush1.xpose.msra.mxu0 0.0
    %1181 = vmatprep.subr.mxu0 0.0
    %1182 = vmatpush1.xpose.msra.mxu0 0.0
    %1183 = vmatprep.subr.mxu0 0.0
    %1184 = vmatpush1.xpose.msra.mxu0 0.0
    %1185 = vmatprep.subr.mxu0 0.0
    %1186 = vmatpush1.xpose.msra.mxu0 0.0
    %1187 = vmatprep.subr.mxu0 0.0
    %1188 = vmatpush1.xpose.msra.mxu0 0.0
    %1189 = vmatprep.subr.mxu0 0.0
    %1190 = vmatpush1.xpose.msra.mxu0 0.0
    %1191 = vmatprep.subr.mxu0 0.0
    %1192 = vmatpush1.xpose.msra.mxu0 0.0
    %1193 = vmatprep.subr.mxu0 0.0
    %1194 = vmatpush1.xpose.msra.mxu0 0.0
    %1195 = vmatprep.subr.mxu0 0.0
    %1196 = vmatpush1.xpose.msra.mxu0 0.0
    %1197 = vmatprep.subr.mxu0 0.0
    %1198 = vmatpush1.xpose.msra.mxu0 0.0
    %1199 = vmatprep.subr.mxu0 0.0
    %1200 = vmatpush1.xpose.msra.mxu0 0.0
    %1201 = vmatprep.subr.mxu0 0.0
    %1202 = vmatpush1.xpose.msra.mxu0 0.0
    %1203 = vmatprep.subr.mxu0 0.0
    %1204 = vmatpush1.xpose.msra.mxu0 0.0
    %1205 = vmatprep.subr.mxu0 0.0
    %1206 = vmatpush1.xpose.msra.mxu0 %v1173
    %1207 = vmatprep.subr.mxu0 0.0
    %1208 = vmatpush2.xpose.msra.mxu0 0.0
    %1209 = vmatprep.subr.mxu0 0.0
    %1210 = vmatpush2.xpose.msra.mxu0 0.0
    %1211 = vmatprep.subr.mxu0 0.0
    %1212 = vmatpush2.xpose.msra.mxu0 0.0
    %1213 = vmatprep.subr.mxu0 0.0
    %1214 = vmatpush2.xpose.msra.mxu0 0.0
    %1215 = vmatprep.subr.mxu0 0.0
    %1216 = vmatpush2.xpose.msra.mxu0 0.0
    %1217 = vmatprep.subr.mxu0 0.0
    %1218 = vmatpush2.xpose.msra.mxu0 0.0
    %1219 = vmatprep.subr.mxu0 0.0
    %1220 = vmatpush2.xpose.msra.mxu0 0.0
    %1221 = vmatprep.subr.mxu0 0.0
    %1222 = vmatpush2.xpose.msra.mxu0 0.0
    %1223 = vmatprep.subr.mxu0 0.0
    %1224 = vmatpush2.xpose.msra.mxu0 0.0
    %1225 = vmatprep.subr.mxu0 0.0
    %1226 = vmatpush2.xpose.msra.mxu0 0.0
    %1227 = vmatprep.subr.mxu0 0.0
    %1228 = vmatpush2.xpose.msra.mxu0 0.0
    %1229 = vmatprep.subr.mxu0 0.0
    %1230 = vmatpush2.xpose.msra.mxu0 0.0
    %1231 = vmatprep.subr.mxu0 0.0
    %1232 = vmatpush2.xpose.msra.mxu0 0.0
    %1233 = vmatprep.subr.mxu0 0.0
    %1234 = vmatpush2.xpose.msra.mxu0 0.0
    %1235 = vmatprep.subr.mxu0 0.0
    %1236 = vmatpush2.xpose.msra.mxu0 0.0
    %1237 = vmatprep.subr.mxu0 0.0
    %1238 = vmatpush2.xpose.msra.mxu0 0.0
    %1239 = vmatprep.mubr.f32.mxu0 0.0
    %1240 = vmatmul.mubr.f32.gmra.mxu0 %v1171
    %v1241 = vpop.f32.mrf.mxu0
    %v1242 = vadd.f32 0.0, %v1241
    %v1243 = vpop.f32.mrf.mxu0
    %1244 = vdwg.mxu0
    %1245 = vrot.lane.b32.xlu0 %v281, 64
    %v1246 = vpop.permute.xlu0 %1245
    %v1247 = vsel %vm334, %v251, 0
    %v1249 = vsel %vm334, %v1246, 0
    %1251 = vmatprep.subr.mxu0 0.0
    %1252 = vmatpush1.xpose.msra.mxu0 0.0
    %1253 = vmatprep.subr.mxu0 0.0
    %1254 = vmatpush1.xpose.msra.mxu0 0.0
    %1255 = vmatprep.subr.mxu0 0.0
    %1256 = vmatpush1.xpose.msra.mxu0 0.0
    %1257 = vmatprep.subr.mxu0 0.0
    %1258 = vmatpush1.xpose.msra.mxu0 0.0
    %1259 = vmatprep.subr.mxu0 0.0
    %1260 = vmatpush1.xpose.msra.mxu0 0.0
    %1261 = vmatprep.subr.mxu0 0.0
    %1262 = vmatpush1.xpose.msra.mxu0 0.0
    %1263 = vmatprep.subr.mxu0 0.0
    %1264 = vmatpush1.xpose.msra.mxu0 0.0
    %1265 = vmatprep.subr.mxu0 0.0
    %1266 = vmatpush1.xpose.msra.mxu0 0.0
    %1267 = vmatprep.subr.mxu0 0.0
    %1268 = vmatpush1.xpose.msra.mxu0 0.0
    %1269 = vmatprep.subr.mxu0 0.0
    %1270 = vmatpush1.xpose.msra.mxu0 0.0
    %1271 = vmatprep.subr.mxu0 0.0
    %1272 = vmatpush1.xpose.msra.mxu0 0.0
    %1273 = vmatprep.subr.mxu0 0.0
    %1274 = vmatpush1.xpose.msra.mxu0 0.0
    %1275 = vmatprep.subr.mxu0 0.0
    %1276 = vmatpush1.xpose.msra.mxu0 0.0
    %1277 = vmatprep.subr.mxu0 0.0
    %1278 = vmatpush1.xpose.msra.mxu0 0.0
    %1279 = vmatprep.subr.mxu0 0.0
    %1280 = vmatpush1.xpose.msra.mxu0 0.0
    %1281 = vmatprep.subr.mxu0 0.0
    %1282 = vmatpush1.xpose.msra.mxu0 %v1249
    %1283 = vmatprep.subr.mxu0 0.0
    %1284 = vmatpush2.xpose.msra.mxu0 0.0
    %1285 = vmatprep.subr.mxu0 0.0
    %1286 = vmatpush2.xpose.msra.mxu0 0.0
    %1287 = vmatprep.subr.mxu0 0.0
    %1288 = vmatpush2.xpose.msra.mxu0 0.0
    %1289 = vmatprep.subr.mxu0 0.0
    %1290 = vmatpush2.xpose.msra.mxu0 0.0
    %1291 = vmatprep.subr.mxu0 0.0
    %1292 = vmatpush2.xpose.msra.mxu0 0.0
    %1293 = vmatprep.subr.mxu0 0.0
    %1294 = vmatpush2.xpose.msra.mxu0 0.0
    %1295 = vmatprep.subr.mxu0 0.0
    %1296 = vmatpush2.xpose.msra.mxu0 0.0
    %1297 = vmatprep.subr.mxu0 0.0
    %1298 = vmatpush2.xpose.msra.mxu0 0.0
    %1299 = vmatprep.subr.mxu0 0.0
    %1300 = vmatpush2.xpose.msra.mxu0 0.0
    %1301 = vmatprep.subr.mxu0 0.0
    %1302 = vmatpush2.xpose.msra.mxu0 0.0
    %1303 = vmatprep.subr.mxu0 0.0
    %1304 = vmatpush2.xpose.msra.mxu0 0.0
    %1305 = vmatprep.subr.mxu0 0.0
    %1306 = vmatpush2.xpose.msra.mxu0 0.0
    %1307 = vmatprep.subr.mxu0 0.0
    %1308 = vmatpush2.xpose.msra.mxu0 0.0
    %1309 = vmatprep.subr.mxu0 0.0
    %1310 = vmatpush2.xpose.msra.mxu0 0.0
    %1311 = vmatprep.subr.mxu0 0.0
    %1312 = vmatpush2.xpose.msra.mxu0 0.0
    %1313 = vmatprep.subr.mxu0 0.0
    %1314 = vmatpush2.xpose.msra.mxu0 0.0
    %1315 = vmatprep.mubr.f32.mxu0 0.0
    %1316 = vmatmul.mubr.f32.gmra.mxu0 %v1247
    %v1317 = vpop.f32.mrf.mxu0
    %v1318 = vadd.f32 0.0, %v1317
    %v1319 = vpop.f32.mrf.mxu0
    %1320 = vdwg.mxu0
    %1321 = vrot.lane.b32.xlu0 %v283, 64
    %v1322 = vpop.permute.xlu0 %1321
    %v1323 = vsel %vm334, %v253, 0
    %v1325 = vsel %vm334, %v1322, 0
    %1327 = vmatprep.subr.mxu0 0.0
    %1328 = vmatpush1.xpose.msra.mxu0 0.0
    %1329 = vmatprep.subr.mxu0 0.0
    %1330 = vmatpush1.xpose.msra.mxu0 0.0
    %1331 = vmatprep.subr.mxu0 0.0
    %1332 = vmatpush1.xpose.msra.mxu0 0.0
    %1333 = vmatprep.subr.mxu0 0.0
    %1334 = vmatpush1.xpose.msra.mxu0 0.0
    %1335 = vmatprep.subr.mxu0 0.0
    %1336 = vmatpush1.xpose.msra.mxu0 0.0
    %1337 = vmatprep.subr.mxu0 0.0
    %1338 = vmatpush1.xpose.msra.mxu0 0.0
    %1339 = vmatprep.subr.mxu0 0.0
    %1340 = vmatpush1.xpose.msra.mxu0 0.0
    %1341 = vmatprep.subr.mxu0 0.0
    %1342 = vmatpush1.xpose.msra.mxu0 0.0
    %1343 = vmatprep.subr.mxu0 0.0
    %1344 = vmatpush1.xpose.msra.mxu0 0.0
    %1345 = vmatprep.subr.mxu0 0.0
    %1346 = vmatpush1.xpose.msra.mxu0 0.0
    %1347 = vmatprep.subr.mxu0 0.0
    %1348 = vmatpush1.xpose.msra.mxu0 0.0
    %1349 = vmatprep.subr.mxu0 0.0
    %1350 = vmatpush1.xpose.msra.mxu0 0.0
    %1351 = vmatprep.subr.mxu0 0.0
    %1352 = vmatpush1.xpose.msra.mxu0 0.0
    %1353 = vmatprep.subr.mxu0 0.0
    %1354 = vmatpush1.xpose.msra.mxu0 0.0
    %1355 = vmatprep.subr.mxu0 0.0
    %1356 = vmatpush1.xpose.msra.mxu0 0.0
    %1357 = vmatprep.subr.mxu0 0.0
    %1358 = vmatpush1.xpose.msra.mxu0 %v1325
    %1359 = vmatprep.subr.mxu0 0.0
    %1360 = vmatpush2.xpose.msra.mxu0 0.0
    %1361 = vmatprep.subr.mxu0 0.0
    %1362 = vmatpush2.xpose.msra.mxu0 0.0
    %1363 = vmatprep.subr.mxu0 0.0
    %1364 = vmatpush2.xpose.msra.mxu0 0.0
    %1365 = vmatprep.subr.mxu0 0.0
    %1366 = vmatpush2.xpose.msra.mxu0 0.0
    %1367 = vmatprep.subr.mxu0 0.0
    %1368 = vmatpush2.xpose.msra.mxu0 0.0
    %1369 = vmatprep.subr.mxu0 0.0
    %1370 = vmatpush2.xpose.msra.mxu0 0.0
    %1371 = vmatprep.subr.mxu0 0.0
    %1372 = vmatpush2.xpose.msra.mxu0 0.0
    %1373 = vmatprep.subr.mxu0 0.0
    %1374 = vmatpush2.xpose.msra.mxu0 0.0
    %1375 = vmatprep.subr.mxu0 0.0
    %1376 = vmatpush2.xpose.msra.mxu0 0.0
    %1377 = vmatprep.subr.mxu0 0.0
    %1378 = vmatpush2.xpose.msra.mxu0 0.0
    %1379 = vmatprep.subr.mxu0 0.0
    %1380 = vmatpush2.xpose.msra.mxu0 0.0
    %1381 = vmatprep.subr.mxu0 0.0
    %1382 = vmatpush2.xpose.msra.mxu0 0.0
    %1383 = vmatprep.subr.mxu0 0.0
    %1384 = vmatpush2.xpose.msra.mxu0 0.0
    %1385 = vmatprep.subr.mxu0 0.0
    %1386 = vmatpush2.xpose.msra.mxu0 0.0
    %1387 = vmatprep.subr.mxu0 0.0
    %1388 = vmatpush2.xpose.msra.mxu0 0.0
    %1389 = vmatprep.subr.mxu0 0.0
    %1390 = vmatpush2.xpose.msra.mxu0 0.0
    %1391 = vmatprep.mubr.f32.mxu0 0.0
    %1392 = vmatmul.mubr.f32.gmra.mxu0 %v1323
    %v1393 = vpop.f32.mrf.mxu0
    %v1394 = vadd.f32 0.0, %v1393
    %v1395 = vpop.f32.mrf.mxu0
    %1396 = vdwg.mxu0
    %1397 = vrot.lane.b32.xlu0 %v285, 64
    %v1398 = vpop.permute.xlu0 %1397
    %v1399 = vsel %vm334, %v255, 0
    %v1401 = vsel %vm334, %v1398, 0
    %1403 = vmatprep.subr.mxu0 0.0
    %1404 = vmatpush1.xpose.msra.mxu0 0.0
    %1405 = vmatprep.subr.mxu0 0.0
    %1406 = vmatpush1.xpose.msra.mxu0 0.0
    %1407 = vmatprep.subr.mxu0 0.0
    %1408 = vmatpush1.xpose.msra.mxu0 0.0
    %1409 = vmatprep.subr.mxu0 0.0
    %1410 = vmatpush1.xpose.msra.mxu0 0.0
    %1411 = vmatprep.subr.mxu0 0.0
    %1412 = vmatpush1.xpose.msra.mxu0 0.0
    %1413 = vmatprep.subr.mxu0 0.0
    %1414 = vmatpush1.xpose.msra.mxu0 0.0
    %1415 = vmatprep.subr.mxu0 0.0
    %1416 = vmatpush1.xpose.msra.mxu0 0.0
    %1417 = vmatprep.subr.mxu0 0.0
    %1418 = vmatpush1.xpose.msra.mxu0 0.0
    %1419 = vmatprep.subr.mxu0 0.0
    %1420 = vmatpush1.xpose.msra.mxu0 0.0
    %1421 = vmatprep.subr.mxu0 0.0
    %1422 = vmatpush1.xpose.msra.mxu0 0.0
    %1423 = vmatprep.subr.mxu0 0.0
    %1424 = vmatpush1.xpose.msra.mxu0 0.0
    %1425 = vmatprep.subr.mxu0 0.0
    %1426 = vmatpush1.xpose.msra.mxu0 0.0
    %1427 = vmatprep.subr.mxu0 0.0
    %1428 = vmatpush1.xpose.msra.mxu0 0.0
    %1429 = vmatprep.subr.mxu0 0.0
    %1430 = vmatpush1.xpose.msra.mxu0 0.0
    %1431 = vmatprep.subr.mxu0 0.0
    %1432 = vmatpush1.xpose.msra.mxu0 0.0
    %1433 = vmatprep.subr.mxu0 0.0
    %1434 = vmatpush1.xpose.msra.mxu0 %v1401
    %1435 = vmatprep.subr.mxu0 0.0
    %1436 = vmatpush2.xpose.msra.mxu0 0.0
    %1437 = vmatprep.subr.mxu0 0.0
    %1438 = vmatpush2.xpose.msra.mxu0 0.0
    %1439 = vmatprep.subr.mxu0 0.0
    %1440 = vmatpush2.xpose.msra.mxu0 0.0
    %1441 = vmatprep.subr.mxu0 0.0
    %1442 = vmatpush2.xpose.msra.mxu0 0.0
    %1443 = vmatprep.subr.mxu0 0.0
    %1444 = vmatpush2.xpose.msra.mxu0 0.0
    %1445 = vmatprep.subr.mxu0 0.0
    %1446 = vmatpush2.xpose.msra.mxu0 0.0
    %1447 = vmatprep.subr.mxu0 0.0
    %1448 = vmatpush2.xpose.msra.mxu0 0.0
    %1449 = vmatprep.subr.mxu0 0.0
    %1450 = vmatpush2.xpose.msra.mxu0 0.0
    %1451 = vmatprep.subr.mxu0 0.0
    %1452 = vmatpush2.xpose.msra.mxu0 0.0
    %1453 = vmatprep.subr.mxu0 0.0
    %1454 = vmatpush2.xpose.msra.mxu0 0.0
    %1455 = vmatprep.subr.mxu0 0.0
    %1456 = vmatpush2.xpose.msra.mxu0 0.0
    %1457 = vmatprep.subr.mxu0 0.0
    %1458 = vmatpush2.xpose.msra.mxu0 0.0
    %1459 = vmatprep.subr.mxu0 0.0
    %1460 = vmatpush2.xpose.msra.mxu0 0.0
    %1461 = vmatprep.subr.mxu0 0.0
    %1462 = vmatpush2.xpose.msra.mxu0 0.0
    %1463 = vmatprep.subr.mxu0 0.0
    %1464 = vmatpush2.xpose.msra.mxu0 0.0
    %1465 = vmatprep.subr.mxu0 0.0
    %1466 = vmatpush2.xpose.msra.mxu0 0.0
    %1467 = vmatprep.mubr.f32.mxu0 0.0
    %1468 = vmatmul.mubr.f32.gmra.mxu0 %v1399
    %v1469 = vpop.f32.mrf.mxu0
    %v1470 = vadd.f32 0.0, %v1469
    %v1471 = vpop.f32.mrf.mxu0
    %1472 = vdwg.mxu0
    %1473 = vrot.lane.b32.xlu0 %v287, 64
    %v1474 = vpop.permute.xlu0 %1473
    %v1475 = vsel %vm334, %v257, 0
    %v1477 = vsel %vm334, %v1474, 0
    %1479 = vmatprep.subr.mxu0 0.0
    %1480 = vmatpush1.xpose.msra.mxu0 0.0
    %1481 = vmatprep.subr.mxu0 0.0
    %1482 = vmatpush1.xpose.msra.mxu0 0.0
    %1483 = vmatprep.subr.mxu0 0.0
    %1484 = vmatpush1.xpose.msra.mxu0 0.0
    %1485 = vmatprep.subr.mxu0 0.0
    %1486 = vmatpush1.xpose.msra.mxu0 0.0
    %1487 = vmatprep.subr.mxu0 0.0
    %1488 = vmatpush1.xpose.msra.mxu0 0.0
    %1489 = vmatprep.subr.mxu0 0.0
    %1490 = vmatpush1.xpose.msra.mxu0 0.0
    %1491 = vmatprep.subr.mxu0 0.0
    %1492 = vmatpush1.xpose.msra.mxu0 0.0
    %1493 = vmatprep.subr.mxu0 0.0
    %1494 = vmatpush1.xpose.msra.mxu0 0.0
    %1495 = vmatprep.subr.mxu0 0.0
    %1496 = vmatpush1.xpose.msra.mxu0 0.0
    %1497 = vmatprep.subr.mxu0 0.0
    %1498 = vmatpush1.xpose.msra.mxu0 0.0
    %1499 = vmatprep.subr.mxu0 0.0
    %1500 = vmatpush1.xpose.msra.mxu0 0.0
    %1501 = vmatprep.subr.mxu0 0.0
    %1502 = vmatpush1.xpose.msra.mxu0 0.0
    %1503 = vmatprep.subr.mxu0 0.0
    %1504 = vmatpush1.xpose.msra.mxu0 0.0
    %1505 = vmatprep.subr.mxu0 0.0
    %1506 = vmatpush1.xpose.msra.mxu0 0.0
    %1507 = vmatprep.subr.mxu0 0.0
    %1508 = vmatpush1.xpose.msra.mxu0 0.0
    %1509 = vmatprep.subr.mxu0 0.0
    %1510 = vmatpush1.xpose.msra.mxu0 %v1477
    %1511 = vmatprep.subr.mxu0 0.0
    %1512 = vmatpush2.xpose.msra.mxu0 0.0
    %1513 = vmatprep.subr.mxu0 0.0
    %1514 = vmatpush2.xpose.msra.mxu0 0.0
    %1515 = vmatprep.subr.mxu0 0.0
    %1516 = vmatpush2.xpose.msra.mxu0 0.0
    %1517 = vmatprep.subr.mxu0 0.0
    %1518 = vmatpush2.xpose.msra.mxu0 0.0
    %1519 = vmatprep.subr.mxu0 0.0
    %1520 = vmatpush2.xpose.msra.mxu0 0.0
    %1521 = vmatprep.subr.mxu0 0.0
    %1522 = vmatpush2.xpose.msra.mxu0 0.0
    %1523 = vmatprep.subr.mxu0 0.0
    %1524 = vmatpush2.xpose.msra.mxu0 0.0
    %1525 = vmatprep.subr.mxu0 0.0
    %1526 = vmatpush2.xpose.msra.mxu0 0.0
    %1527 = vmatprep.subr.mxu0 0.0
    %1528 = vmatpush2.xpose.msra.mxu0 0.0
    %1529 = vmatprep.subr.mxu0 0.0
    %1530 = vmatpush2.xpose.msra.mxu0 0.0
    %1531 = vmatprep.subr.mxu0 0.0
    %1532 = vmatpush2.xpose.msra.mxu0 0.0
    %1533 = vmatprep.subr.mxu0 0.0
    %1534 = vmatpush2.xpose.msra.mxu0 0.0
    %1535 = vmatprep.subr.mxu0 0.0
    %1536 = vmatpush2.xpose.msra.mxu0 0.0
    %1537 = vmatprep.subr.mxu0 0.0
    %1538 = vmatpush2.xpose.msra.mxu0 0.0
    %1539 = vmatprep.subr.mxu0 0.0
    %1540 = vmatpush2.xpose.msra.mxu0 0.0
    %1541 = vmatprep.subr.mxu0 0.0
    %1542 = vmatpush2.xpose.msra.mxu0 0.0
    %1543 = vmatprep.mubr.f32.mxu0 0.0
    %1544 = vmatmul.mubr.f32.gmra.mxu0 %v1475
    %v1545 = vpop.f32.mrf.mxu0
    %v1546 = vadd.f32 0.0, %v1545
    %v1547 = vpop.f32.mrf.mxu0
    %1548 = vdwg.mxu0
    %v1549 = vsel %vm334, %v406, -inf
    %1550 = vmax.xlane.f32.xlu0 %v1549
    %v1551 = vpop.xlane.xlu0 %1550
    %v1552 = vsel %vm334, %v482, -inf
    %1553 = vmax.xlane.f32.xlu0 %v1552
    %v1554 = vpop.xlane.xlu0 %1553
    %v1555 = vsel %vm334, %v558, -inf
    %1556 = vmax.xlane.f32.xlu0 %v1555
    %v1557 = vpop.xlane.xlu0 %1556
    %v1558 = vsel %vm334, %v634, -inf
    %1559 = vmax.xlane.f32.xlu0 %v1558
    %v1560 = vpop.xlane.xlu0 %1559
    %v1561 = vsel %vm334, %v710, -inf
    %1562 = vmax.xlane.f32.xlu0 %v1561
    %v1563 = vpop.xlane.xlu0 %1562
    %v1564 = vsel %vm334, %v786, -inf
    %1565 = vmax.xlane.f32.xlu0 %v1564
    %v1566 = vpop.xlane.xlu0 %1565
    %v1567 = vsel %vm334, %v862, -inf
    %1568 = vmax.xlane.f32.xlu0 %v1567
    %v1569 = vpop.xlane.xlu0 %1568
    %v1570 = vsel %vm334, %v938, -inf
    %1571 = vmax.xlane.f32.xlu0 %v1570
    %v1572 = vpop.xlane.xlu0 %1571
    %v1573 = vsel %vm334, %v1014, -inf
    %1574 = vmax.xlane.f32.xlu0 %v1573
    %v1575 = vpop.xlane.xlu0 %1574
    %v1576 = vsel %vm334, %v1090, -inf
    %1577 = vmax.xlane.f32.xlu0 %v1576
    %v1578 = vpop.xlane.xlu0 %1577
    %v1579 = vsel %vm334, %v1166, -inf
    %1580 = vmax.xlane.f32.xlu0 %v1579
    %v1581 = vpop.xlane.xlu0 %1580
    %v1582 = vsel %vm334, %v1242, -inf
    %1583 = vmax.xlane.f32.xlu0 %v1582
    %v1584 = vpop.xlane.xlu0 %1583
    %v1585 = vsel %vm334, %v1318, -inf
    %1586 = vmax.xlane.f32.xlu0 %v1585
    %v1587 = vpop.xlane.xlu0 %1586
    %v1588 = vsel %vm334, %v1394, -inf
    %1589 = vmax.xlane.f32.xlu0 %v1588
    %v1590 = vpop.xlane.xlu0 %1589
    %v1591 = vsel %vm334, %v1470, -inf
    %1592 = vmax.xlane.f32.xlu0 %v1591
    %v1593 = vpop.xlane.xlu0 %1592
    %v1594 = vsel %vm334, %v1546, -inf
    %1595 = vmax.xlane.f32.xlu0 %v1594
    %v1596 = vpop.xlane.xlu0 %1595
    %v1597 = vsub.f32 %v406, %v1551
    %v1598 = vsub.f32 %v482, %v1554
    %v1599 = vsub.f32 %v558, %v1557
    %v1600 = vsub.f32 %v634, %v1560
    %v1601 = vsub.f32 %v710, %v1563
    %v1602 = vsub.f32 %v786, %v1566
    %v1603 = vsub.f32 %v862, %v1569
    %v1604 = vsub.f32 %v938, %v1572
    %v1605 = vsub.f32 %v1014, %v1575
    %v1606 = vsub.f32 %v1090, %v1578
    %v1607 = vsub.f32 %v1166, %v1581
    %v1608 = vsub.f32 %v1242, %v1584
    %v1609 = vsub.f32 %v1318, %v1587
    %v1610 = vsub.f32 %v1394, %v1590
    %v1611 = vsub.f32 %v1470, %v1593
    %v1612 = vsub.f32 %v1546, %v1596
    %v1613 = vmul.f32 %v1597, 1.442695
    %v1614 = vpow.pop %v1613
    %v1615 = vmul.f32 %v1598, 1.442695
    %v1616 = vpow.pop %v1615
    %v1617 = vmul.f32 %v1599, 1.442695
    %v1618 = vpow.pop %v1617
    %v1619 = vmul.f32 %v1600, 1.442695
    %v1620 = vpow.pop %v1619
    %v1621 = vmul.f32 %v1601, 1.442695
    %v1622 = vpow.pop %v1621
    %v1623 = vmul.f32 %v1602, 1.442695
    %v1624 = vpow.pop %v1623
    %v1625 = vmul.f32 %v1603, 1.442695
    %v1626 = vpow.pop %v1625
    %v1627 = vmul.f32 %v1604, 1.442695
    %v1628 = vpow.pop %v1627
    %v1629 = vmul.f32 %v1605, 1.442695
    %v1630 = vpow.pop %v1629
    %v1631 = vmul.f32 %v1606, 1.442695
    %v1632 = vpow.pop %v1631
    %v1633 = vmul.f32 %v1607, 1.442695
    %v1634 = vpow.pop %v1633
    %v1635 = vmul.f32 %v1608, 1.442695
    %v1636 = vpow.pop %v1635
    %v1637 = vmul.f32 %v1609, 1.442695
    %v1638 = vpow.pop %v1637
    %v1639 = vmul.f32 %v1610, 1.442695
    %v1640 = vpow.pop %v1639
    %v1641 = vmul.f32 %v1611, 1.442695
    %v1642 = vpow.pop %v1641
    %v1643 = vmul.f32 %v1612, 1.442695
    %v1644 = vpow.pop %v1643
    %v1645 = vsel %vm334, %v1614, 0.0
    %1646 = vadd.xlane.f32.xlu0 %v1645
    %v1647 = vpop.xlane.xlu0 %1646
    %v1648 = vsel %vm334, %v1616, 0.0
    %1649 = vadd.xlane.f32.xlu0 %v1648
    %v1650 = vpop.xlane.xlu0 %1649
    %v1651 = vsel %vm334, %v1618, 0.0
    %1652 = vadd.xlane.f32.xlu0 %v1651
    %v1653 = vpop.xlane.xlu0 %1652
    %v1654 = vsel %vm334, %v1620, 0.0
    %1655 = vadd.xlane.f32.xlu0 %v1654
    %v1656 = vpop.xlane.xlu0 %1655
    %v1657 = vsel %vm334, %v1622, 0.0
    %1658 = vadd.xlane.f32.xlu0 %v1657
    %v1659 = vpop.xlane.xlu0 %1658
    %v1660 = vsel %vm334, %v1624, 0.0
    %1661 = vadd.xlane.f32.xlu0 %v1660
    %v1662 = vpop.xlane.xlu0 %1661
    %v1663 = vsel %vm334, %v1626, 0.0
    %1664 = vadd.xlane.f32.xlu0 %v1663
    %v1665 = vpop.xlane.xlu0 %1664
    %v1666 = vsel %vm334, %v1628, 0.0
    %1667 = vadd.xlane.f32.xlu0 %v1666
    %v1668 = vpop.xlane.xlu0 %1667
    %v1669 = vsel %vm334, %v1630, 0.0
    %1670 = vadd.xlane.f32.xlu0 %v1669
    %v1671 = vpop.xlane.xlu0 %1670
    %v1672 = vsel %vm334, %v1632, 0.0
    %1673 = vadd.xlane.f32.xlu0 %v1672
    %v1674 = vpop.xlane.xlu0 %1673
    %v1675 = vsel %vm334, %v1634, 0.0
    %1676 = vadd.xlane.f32.xlu0 %v1675
    %v1677 = vpop.xlane.xlu0 %1676
    %v1678 = vsel %vm334, %v1636, 0.0
    %1679 = vadd.xlane.f32.xlu0 %v1678
    %v1680 = vpop.xlane.xlu0 %1679
    %v1681 = vsel %vm334, %v1638, 0.0
    %1682 = vadd.xlane.f32.xlu0 %v1681
    %v1683 = vpop.xlane.xlu0 %1682
    %v1684 = vsel %vm334, %v1640, 0.0
    %1685 = vadd.xlane.f32.xlu0 %v1684
    %v1686 = vpop.xlane.xlu0 %1685
    %v1687 = vsel %vm334, %v1642, 0.0
    %1688 = vadd.xlane.f32.xlu0 %v1687
    %v1689 = vpop.xlane.xlu0 %1688
    %v1690 = vsel %vm334, %v1644, 0.0
    %1691 = vadd.xlane.f32.xlu0 %v1690
    %v1692 = vpop.xlane.xlu0 %1691
    %v1693 = vrcp.pop %v1647
    %v1694 = vrcp.pop %v1650
    %v1695 = vrcp.pop %v1653
    %v1696 = vrcp.pop %v1656
    %v1697 = vrcp.pop %v1659
    %v1698 = vrcp.pop %v1662
    %v1699 = vrcp.pop %v1665
    %v1700 = vrcp.pop %v1668
    %v1701 = vrcp.pop %v1671
    %v1702 = vrcp.pop %v1674
    %v1703 = vrcp.pop %v1677
    %v1704 = vrcp.pop %v1680
    %v1705 = vrcp.pop %v1683
    %v1706 = vrcp.pop %v1686
    %v1707 = vrcp.pop %v1689
    %v1708 = vrcp.pop %v1692
    %v1709 = vmul.f32 %v1614, %v1693
    %v1710 = vmul.f32 %v1616, %v1694
    %v1711 = vmul.f32 %v1618, %v1695
    %v1712 = vmul.f32 %v1620, %v1696
    %v1713 = vmul.f32 %v1622, %v1697
    %v1714 = vmul.f32 %v1624, %v1698
    %v1715 = vmul.f32 %v1626, %v1699
    %v1716 = vmul.f32 %v1628, %v1700
    %v1717 = vmul.f32 %v1630, %v1701
    %v1718 = vmul.f32 %v1632, %v1702
    %v1719 = vmul.f32 %v1634, %v1703
    %v1720 = vmul.f32 %v1636, %v1704
    %v1721 = vmul.f32 %v1638, %v1705
    %v1722 = vmul.f32 %v1640, %v1706
    %v1723 = vmul.f32 %v1642, %v1707
    %v1724 = vmul.f32 %v1644, %v1708
    %v1726 = vsel %vm334, %v1709, 0
    %1728 = vmatprep.subr.mxu0 0.0
    %1729 = vmatpush1.msra.mxu0 0.0
    %1730 = vmatprep.subr.mxu0 0.0
    %1731 = vmatpush1.msra.mxu0 0.0
    %1732 = vmatprep.subr.mxu0 0.0
    %1733 = vmatpush1.msra.mxu0 0.0
    %1734 = vmatprep.subr.mxu0 0.0
    %1735 = vmatpush1.msra.mxu0 0.0
    %1736 = vmatprep.subr.mxu0 0.0
    %1737 = vmatpush1.msra.mxu0 0.0
    %1738 = vmatprep.subr.mxu0 0.0
    %1739 = vmatpush1.msra.mxu0 0.0
    %1740 = vmatprep.subr.mxu0 0.0
    %1741 = vmatpush1.msra.mxu0 0.0
    %1742 = vmatprep.subr.mxu0 0.0
    %1743 = vmatpush1.msra.mxu0 0.0
    %1744 = vmatprep.subr.mxu0 0.0
    %1745 = vmatpush1.msra.mxu0 0.0
    %1746 = vmatprep.subr.mxu0 0.0
    %1747 = vmatpush1.msra.mxu0 0.0
    %1748 = vmatprep.subr.mxu0 0.0
    %1749 = vmatpush1.msra.mxu0 0.0
    %1750 = vmatprep.subr.mxu0 0.0
    %1751 = vmatpush1.msra.mxu0 0.0
    %1752 = vmatprep.subr.mxu0 0.0
    %1753 = vmatpush1.msra.mxu0 0.0
    %1754 = vmatprep.subr.mxu0 0.0
    %1755 = vmatpush1.msra.mxu0 0.0
    %1756 = vmatprep.subr.mxu0 0.0
    %1757 = vmatpush1.msra.mxu0 0.0
    %1758 = vmatprep.subr.mxu0 0.0
    %1759 = vmatpush1.msra.mxu0 %v218
    %1760 = vmatprep.subr.mxu0 0.0
    %1761 = vmatpush2.msra.mxu0 0.0
    %1762 = vmatprep.subr.mxu0 0.0
    %1763 = vmatpush2.msra.mxu0 0.0
    %1764 = vmatprep.subr.mxu0 0.0
    %1765 = vmatpush2.msra.mxu0 0.0
    %1766 = vmatprep.subr.mxu0 0.0
    %1767 = vmatpush2.msra.mxu0 0.0
    %1768 = vmatprep.subr.mxu0 0.0
    %1769 = vmatpush2.msra.mxu0 0.0
    %1770 = vmatprep.subr.mxu0 0.0
    %1771 = vmatpush2.msra.mxu0 0.0
    %1772 = vmatprep.subr.mxu0 0.0
    %1773 = vmatpush2.msra.mxu0 0.0
    %1774 = vmatprep.subr.mxu0 0.0
    %1775 = vmatpush2.msra.mxu0 0.0
    %1776 = vmatprep.subr.mxu0 0.0
    %1777 = vmatpush2.msra.mxu0 0.0
    %1778 = vmatprep.subr.mxu0 0.0
    %1779 = vmatpush2.msra.mxu0 0.0
    %1780 = vmatprep.subr.mxu0 0.0
    %1781 = vmatpush2.msra.mxu0 0.0
    %1782 = vmatprep.subr.mxu0 0.0
    %1783 = vmatpush2.msra.mxu0 0.0
    %1784 = vmatprep.subr.mxu0 0.0
    %1785 = vmatpush2.msra.mxu0 0.0
    %1786 = vmatprep.subr.mxu0 0.0
    %1787 = vmatpush2.msra.mxu0 0.0
    %1788 = vmatprep.subr.mxu0 0.0
    %1789 = vmatpush2.msra.mxu0 0.0
    %1790 = vmatprep.subr.mxu0 0.0
    %1791 = vmatpush2.msra.mxu0 0.0
    %1792 = vmatprep.mubr.f32.mxu0 0.0
    %1793 = vmatmul.mubr.f32.gmra.mxu0 %v1726
    %v1794 = vpop.f32.mrf.mxu0
    %v1795 = vadd.f32 0.0, %v1794
    %v1796 = vpop.f32.mrf.mxu0
    %1797 = vdwg.mxu0
    %v1799 = vsel %vm334, %v1710, 0
    %1801 = vmatprep.subr.mxu0 0.0
    %1802 = vmatpush1.msra.mxu0 0.0
    %1803 = vmatprep.subr.mxu0 0.0
    %1804 = vmatpush1.msra.mxu0 0.0
    %1805 = vmatprep.subr.mxu0 0.0
    %1806 = vmatpush1.msra.mxu0 0.0
    %1807 = vmatprep.subr.mxu0 0.0
    %1808 = vmatpush1.msra.mxu0 0.0
    %1809 = vmatprep.subr.mxu0 0.0
    %1810 = vmatpush1.msra.mxu0 0.0
    %1811 = vmatprep.subr.mxu0 0.0
    %1812 = vmatpush1.msra.mxu0 0.0
    %1813 = vmatprep.subr.mxu0 0.0
    %1814 = vmatpush1.msra.mxu0 0.0
    %1815 = vmatprep.subr.mxu0 0.0
    %1816 = vmatpush1.msra.mxu0 0.0
    %1817 = vmatprep.subr.mxu0 0.0
    %1818 = vmatpush1.msra.mxu0 0.0
    %1819 = vmatprep.subr.mxu0 0.0
    %1820 = vmatpush1.msra.mxu0 0.0
    %1821 = vmatprep.subr.mxu0 0.0
    %1822 = vmatpush1.msra.mxu0 0.0
    %1823 = vmatprep.subr.mxu0 0.0
    %1824 = vmatpush1.msra.mxu0 0.0
    %1825 = vmatprep.subr.mxu0 0.0
    %1826 = vmatpush1.msra.mxu0 0.0
    %1827 = vmatprep.subr.mxu0 0.0
    %1828 = vmatpush1.msra.mxu0 0.0
    %1829 = vmatprep.subr.mxu0 0.0
    %1830 = vmatpush1.msra.mxu0 0.0
    %1831 = vmatprep.subr.mxu0 0.0
    %1832 = vmatpush1.msra.mxu0 %v224
    %1833 = vmatprep.subr.mxu0 0.0
    %1834 = vmatpush2.msra.mxu0 0.0
    %1835 = vmatprep.subr.mxu0 0.0
    %1836 = vmatpush2.msra.mxu0 0.0
    %1837 = vmatprep.subr.mxu0 0.0
    %1838 = vmatpush2.msra.mxu0 0.0
    %1839 = vmatprep.subr.mxu0 0.0
    %1840 = vmatpush2.msra.mxu0 0.0
    %1841 = vmatprep.subr.mxu0 0.0
    %1842 = vmatpush2.msra.mxu0 0.0
    %1843 = vmatprep.subr.mxu0 0.0
    %1844 = vmatpush2.msra.mxu0 0.0
    %1845 = vmatprep.subr.mxu0 0.0
    %1846 = vmatpush2.msra.mxu0 0.0
    %1847 = vmatprep.subr.mxu0 0.0
    %1848 = vmatpush2.msra.mxu0 0.0
    %1849 = vmatprep.subr.mxu0 0.0
    %1850 = vmatpush2.msra.mxu0 0.0
    %1851 = vmatprep.subr.mxu0 0.0
    %1852 = vmatpush2.msra.mxu0 0.0
    %1853 = vmatprep.subr.mxu0 0.0
    %1854 = vmatpush2.msra.mxu0 0.0
    %1855 = vmatprep.subr.mxu0 0.0
    %1856 = vmatpush2.msra.mxu0 0.0
    %1857 = vmatprep.subr.mxu0 0.0
    %1858 = vmatpush2.msra.mxu0 0.0
    %1859 = vmatprep.subr.mxu0 0.0
    %1860 = vmatpush2.msra.mxu0 0.0
    %1861 = vmatprep.subr.mxu0 0.0
    %1862 = vmatpush2.msra.mxu0 0.0
    %1863 = vmatprep.subr.mxu0 0.0
    %1864 = vmatpush2.msra.mxu0 0.0
    %1865 = vmatprep.mubr.f32.mxu0 0.0
    %1866 = vmatmul.mubr.f32.gmra.mxu0 %v1799
    %v1867 = vpop.f32.mrf.mxu0
    %v1868 = vadd.f32 0.0, %v1867
    %v1869 = vpop.f32.mrf.mxu0
    %1870 = vdwg.mxu0
    %v1872 = vsel %vm334, %v1711, 0
    %1874 = vmatprep.subr.mxu0 0.0
    %1875 = vmatpush1.msra.mxu0 0.0
    %1876 = vmatprep.subr.mxu0 0.0
    %1877 = vmatpush1.msra.mxu0 0.0
    %1878 = vmatprep.subr.mxu0 0.0
    %1879 = vmatpush1.msra.mxu0 0.0
    %1880 = vmatprep.subr.mxu0 0.0
    %1881 = vmatpush1.msra.mxu0 0.0
    %1882 = vmatprep.subr.mxu0 0.0
    %1883 = vmatpush1.msra.mxu0 0.0
    %1884 = vmatprep.subr.mxu0 0.0
    %1885 = vmatpush1.msra.mxu0 0.0
    %1886 = vmatprep.subr.mxu0 0.0
    %1887 = vmatpush1.msra.mxu0 0.0
    %1888 = vmatprep.subr.mxu0 0.0
    %1889 = vmatpush1.msra.mxu0 0.0
    %1890 = vmatprep.subr.mxu0 0.0
    %1891 = vmatpush1.msra.mxu0 0.0
    %1892 = vmatprep.subr.mxu0 0.0
    %1893 = vmatpush1.msra.mxu0 0.0
    %1894 = vmatprep.subr.mxu0 0.0
    %1895 = vmatpush1.msra.mxu0 0.0
    %1896 = vmatprep.subr.mxu0 0.0
    %1897 = vmatpush1.msra.mxu0 0.0
    %1898 = vmatprep.subr.mxu0 0.0
    %1899 = vmatpush1.msra.mxu0 0.0
    %1900 = vmatprep.subr.mxu0 0.0
    %1901 = vmatpush1.msra.mxu0 0.0
    %1902 = vmatprep.subr.mxu0 0.0
    %1903 = vmatpush1.msra.mxu0 0.0
    %1904 = vmatprep.subr.mxu0 0.0
    %1905 = vmatpush1.msra.mxu0 %v291
    %1906 = vmatprep.subr.mxu0 0.0
    %1907 = vmatpush2.msra.mxu0 0.0
    %1908 = vmatprep.subr.mxu0 0.0
    %1909 = vmatpush2.msra.mxu0 0.0
    %1910 = vmatprep.subr.mxu0 0.0
    %1911 = vmatpush2.msra.mxu0 0.0
    %1912 = vmatprep.subr.mxu0 0.0
    %1913 = vmatpush2.msra.mxu0 0.0
    %1914 = vmatprep.subr.mxu0 0.0
    %1915 = vmatpush2.msra.mxu0 0.0
    %1916 = vmatprep.subr.mxu0 0.0
    %1917 = vmatpush2.msra.mxu0 0.0
    %1918 = vmatprep.subr.mxu0 0.0
    %1919 = vmatpush2.msra.mxu0 0.0
    %1920 = vmatprep.subr.mxu0 0.0
    %1921 = vmatpush2.msra.mxu0 0.0
    %1922 = vmatprep.subr.mxu0 0.0
    %1923 = vmatpush2.msra.mxu0 0.0
    %1924 = vmatprep.subr.mxu0 0.0
    %1925 = vmatpush2.msra.mxu0 0.0
    %1926 = vmatprep.subr.mxu0 0.0
    %1927 = vmatpush2.msra.mxu0 0.0
    %1928 = vmatprep.subr.mxu0 0.0
    %1929 = vmatpush2.msra.mxu0 0.0
    %1930 = vmatprep.subr.mxu0 0.0
    %1931 = vmatpush2.msra.mxu0 0.0
    %1932 = vmatprep.subr.mxu0 0.0
    %1933 = vmatpush2.msra.mxu0 0.0
    %1934 = vmatprep.subr.mxu0 0.0
    %1935 = vmatpush2.msra.mxu0 0.0
    %1936 = vmatprep.subr.mxu0 0.0
    %1937 = vmatpush2.msra.mxu0 0.0
    %1938 = vmatprep.mubr.f32.mxu0 0.0
    %1939 = vmatmul.mubr.f32.gmra.mxu0 %v1872
    %v1940 = vpop.f32.mrf.mxu0
    %v1941 = vadd.f32 0.0, %v1940
    %v1942 = vpop.f32.mrf.mxu0
    %1943 = vdwg.mxu0
    %v1945 = vsel %vm334, %v1712, 0
    %1947 = vmatprep.subr.mxu0 0.0
    %1948 = vmatpush1.msra.mxu0 0.0
    %1949 = vmatprep.subr.mxu0 0.0
    %1950 = vmatpush1.msra.mxu0 0.0
    %1951 = vmatprep.subr.mxu0 0.0
    %1952 = vmatpush1.msra.mxu0 0.0
    %1953 = vmatprep.subr.mxu0 0.0
    %1954 = vmatpush1.msra.mxu0 0.0
    %1955 = vmatprep.subr.mxu0 0.0
    %1956 = vmatpush1.msra.mxu0 0.0
    %1957 = vmatprep.subr.mxu0 0.0
    %1958 = vmatpush1.msra.mxu0 0.0
    %1959 = vmatprep.subr.mxu0 0.0
    %1960 = vmatpush1.msra.mxu0 0.0
    %1961 = vmatprep.subr.mxu0 0.0
    %1962 = vmatpush1.msra.mxu0 0.0
    %1963 = vmatprep.subr.mxu0 0.0
    %1964 = vmatpush1.msra.mxu0 0.0
    %1965 = vmatprep.subr.mxu0 0.0
    %1966 = vmatpush1.msra.mxu0 0.0
    %1967 = vmatprep.subr.mxu0 0.0
    %1968 = vmatpush1.msra.mxu0 0.0
    %1969 = vmatprep.subr.mxu0 0.0
    %1970 = vmatpush1.msra.mxu0 0.0
    %1971 = vmatprep.subr.mxu0 0.0
    %1972 = vmatpush1.msra.mxu0 0.0
    %1973 = vmatprep.subr.mxu0 0.0
    %1974 = vmatpush1.msra.mxu0 0.0
    %1975 = vmatprep.subr.mxu0 0.0
    %1976 = vmatpush1.msra.mxu0 0.0
    %1977 = vmatprep.subr.mxu0 0.0
    %1978 = vmatpush1.msra.mxu0 %v293
    %1979 = vmatprep.subr.mxu0 0.0
    %1980 = vmatpush2.msra.mxu0 0.0
    %1981 = vmatprep.subr.mxu0 0.0
    %1982 = vmatpush2.msra.mxu0 0.0
    %1983 = vmatprep.subr.mxu0 0.0
    %1984 = vmatpush2.msra.mxu0 0.0
    %1985 = vmatprep.subr.mxu0 0.0
    %1986 = vmatpush2.msra.mxu0 0.0
    %1987 = vmatprep.subr.mxu0 0.0
    %1988 = vmatpush2.msra.mxu0 0.0
    %1989 = vmatprep.subr.mxu0 0.0
    %1990 = vmatpush2.msra.mxu0 0.0
    %1991 = vmatprep.subr.mxu0 0.0
    %1992 = vmatpush2.msra.mxu0 0.0
    %1993 = vmatprep.subr.mxu0 0.0
    %1994 = vmatpush2.msra.mxu0 0.0
    %1995 = vmatprep.subr.mxu0 0.0
    %1996 = vmatpush2.msra.mxu0 0.0
    %1997 = vmatprep.subr.mxu0 0.0
    %1998 = vmatpush2.msra.mxu0 0.0
    %1999 = vmatprep.subr.mxu0 0.0
    %2000 = vmatpush2.msra.mxu0 0.0
    %2001 = vmatprep.subr.mxu0 0.0
    %2002 = vmatpush2.msra.mxu0 0.0
    %2003 = vmatprep.subr.mxu0 0.0
    %2004 = vmatpush2.msra.mxu0 0.0
    %2005 = vmatprep.subr.mxu0 0.0
    %2006 = vmatpush2.msra.mxu0 0.0
    %2007 = vmatprep.subr.mxu0 0.0
    %2008 = vmatpush2.msra.mxu0 0.0
    %2009 = vmatprep.subr.mxu0 0.0
    %2010 = vmatpush2.msra.mxu0 0.0
    %2011 = vmatprep.mubr.f32.mxu0 0.0
    %2012 = vmatmul.mubr.f32.gmra.mxu0 %v1945
    %v2013 = vpop.f32.mrf.mxu0
    %v2014 = vadd.f32 0.0, %v2013
    %v2015 = vpop.f32.mrf.mxu0
    %2016 = vdwg.mxu0
    %v2018 = vsel %vm334, %v1713, 0
    %2020 = vmatprep.subr.mxu0 0.0
    %2021 = vmatpush1.msra.mxu0 0.0
    %2022 = vmatprep.subr.mxu0 0.0
    %2023 = vmatpush1.msra.mxu0 0.0
    %2024 = vmatprep.subr.mxu0 0.0
    %2025 = vmatpush1.msra.mxu0 0.0
    %2026 = vmatprep.subr.mxu0 0.0
    %2027 = vmatpush1.msra.mxu0 0.0
    %2028 = vmatprep.subr.mxu0 0.0
    %2029 = vmatpush1.msra.mxu0 0.0
    %2030 = vmatprep.subr.mxu0 0.0
    %2031 = vmatpush1.msra.mxu0 0.0
    %2032 = vmatprep.subr.mxu0 0.0
    %2033 = vmatpush1.msra.mxu0 0.0
    %2034 = vmatprep.subr.mxu0 0.0
    %2035 = vmatpush1.msra.mxu0 0.0
    %2036 = vmatprep.subr.mxu0 0.0
    %2037 = vmatpush1.msra.mxu0 0.0
    %2038 = vmatprep.subr.mxu0 0.0
    %2039 = vmatpush1.msra.mxu0 0.0
    %2040 = vmatprep.subr.mxu0 0.0
    %2041 = vmatpush1.msra.mxu0 0.0
    %2042 = vmatprep.subr.mxu0 0.0
    %2043 = vmatpush1.msra.mxu0 0.0
    %2044 = vmatprep.subr.mxu0 0.0
    %2045 = vmatpush1.msra.mxu0 0.0
    %2046 = vmatprep.subr.mxu0 0.0
    %2047 = vmatpush1.msra.mxu0 0.0
    %2048 = vmatprep.subr.mxu0 0.0
    %2049 = vmatpush1.msra.mxu0 0.0
    %2050 = vmatprep.subr.mxu0 0.0
    %2051 = vmatpush1.msra.mxu0 %v297
    %2052 = vmatprep.subr.mxu0 0.0
    %2053 = vmatpush2.msra.mxu0 0.0
    %2054 = vmatprep.subr.mxu0 0.0
    %2055 = vmatpush2.msra.mxu0 0.0
    %2056 = vmatprep.subr.mxu0 0.0
    %2057 = vmatpush2.msra.mxu0 0.0
    %2058 = vmatprep.subr.mxu0 0.0
    %2059 = vmatpush2.msra.mxu0 0.0
    %2060 = vmatprep.subr.mxu0 0.0
    %2061 = vmatpush2.msra.mxu0 0.0
    %2062 = vmatprep.subr.mxu0 0.0
    %2063 = vmatpush2.msra.mxu0 0.0
    %2064 = vmatprep.subr.mxu0 0.0
    %2065 = vmatpush2.msra.mxu0 0.0
    %2066 = vmatprep.subr.mxu0 0.0
    %2067 = vmatpush2.msra.mxu0 0.0
    %2068 = vmatprep.subr.mxu0 0.0
    %2069 = vmatpush2.msra.mxu0 0.0
    %2070 = vmatprep.subr.mxu0 0.0
    %2071 = vmatpush2.msra.mxu0 0.0
    %2072 = vmatprep.subr.mxu0 0.0
    %2073 = vmatpush2.msra.mxu0 0.0
    %2074 = vmatprep.subr.mxu0 0.0
    %2075 = vmatpush2.msra.mxu0 0.0
    %2076 = vmatprep.subr.mxu0 0.0
    %2077 = vmatpush2.msra.mxu0 0.0
    %2078 = vmatprep.subr.mxu0 0.0
    %2079 = vmatpush2.msra.mxu0 0.0
    %2080 = vmatprep.subr.mxu0 0.0
    %2081 = vmatpush2.msra.mxu0 0.0
    %2082 = vmatprep.subr.mxu0 0.0
    %2083 = vmatpush2.msra.mxu0 0.0
    %2084 = vmatprep.mubr.f32.mxu0 0.0
    %2085 = vmatmul.mubr.f32.gmra.mxu0 %v2018
    %v2086 = vpop.f32.mrf.mxu0
    %v2087 = vadd.f32 0.0, %v2086
    %v2088 = vpop.f32.mrf.mxu0
    %2089 = vdwg.mxu0
    %v2091 = vsel %vm334, %v1714, 0
    %2093 = vmatprep.subr.mxu0 0.0
    %2094 = vmatpush1.msra.mxu0 0.0
    %2095 = vmatprep.subr.mxu0 0.0
    %2096 = vmatpush1.msra.mxu0 0.0
    %2097 = vmatprep.subr.mxu0 0.0
    %2098 = vmatpush1.msra.mxu0 0.0
    %2099 = vmatprep.subr.mxu0 0.0
    %2100 = vmatpush1.msra.mxu0 0.0
    %2101 = vmatprep.subr.mxu0 0.0
    %2102 = vmatpush1.msra.mxu0 0.0
    %2103 = vmatprep.subr.mxu0 0.0
    %2104 = vmatpush1.msra.mxu0 0.0
    %2105 = vmatprep.subr.mxu0 0.0
    %2106 = vmatpush1.msra.mxu0 0.0
    %2107 = vmatprep.subr.mxu0 0.0
    %2108 = vmatpush1.msra.mxu0 0.0
    %2109 = vmatprep.subr.mxu0 0.0
    %2110 = vmatpush1.msra.mxu0 0.0
    %2111 = vmatprep.subr.mxu0 0.0
    %2112 = vmatpush1.msra.mxu0 0.0
    %2113 = vmatprep.subr.mxu0 0.0
    %2114 = vmatpush1.msra.mxu0 0.0
    %2115 = vmatprep.subr.mxu0 0.0
    %2116 = vmatpush1.msra.mxu0 0.0
    %2117 = vmatprep.subr.mxu0 0.0
    %2118 = vmatpush1.msra.mxu0 0.0
    %2119 = vmatprep.subr.mxu0 0.0
    %2120 = vmatpush1.msra.mxu0 0.0
    %2121 = vmatprep.subr.mxu0 0.0
    %2122 = vmatpush1.msra.mxu0 0.0
    %2123 = vmatprep.subr.mxu0 0.0
    %2124 = vmatpush1.msra.mxu0 %v299
    %2125 = vmatprep.subr.mxu0 0.0
    %2126 = vmatpush2.msra.mxu0 0.0
    %2127 = vmatprep.subr.mxu0 0.0
    %2128 = vmatpush2.msra.mxu0 0.0
    %2129 = vmatprep.subr.mxu0 0.0
    %2130 = vmatpush2.msra.mxu0 0.0
    %2131 = vmatprep.subr.mxu0 0.0
    %2132 = vmatpush2.msra.mxu0 0.0
    %2133 = vmatprep.subr.mxu0 0.0
    %2134 = vmatpush2.msra.mxu0 0.0
    %2135 = vmatprep.subr.mxu0 0.0
    %2136 = vmatpush2.msra.mxu0 0.0
    %2137 = vmatprep.subr.mxu0 0.0
    %2138 = vmatpush2.msra.mxu0 0.0
    %2139 = vmatprep.subr.mxu0 0.0
    %2140 = vmatpush2.msra.mxu0 0.0
    %2141 = vmatprep.subr.mxu0 0.0
    %2142 = vmatpush2.msra.mxu0 0.0
    %2143 = vmatprep.subr.mxu0 0.0
    %2144 = vmatpush2.msra.mxu0 0.0
    %2145 = vmatprep.subr.mxu0 0.0
    %2146 = vmatpush2.msra.mxu0 0.0
    %2147 = vmatprep.subr.mxu0 0.0
    %2148 = vmatpush2.msra.mxu0 0.0
    %2149 = vmatprep.subr.mxu0 0.0
    %2150 = vmatpush2.msra.mxu0 0.0
    %2151 = vmatprep.subr.mxu0 0.0
    %2152 = vmatpush2.msra.mxu0 0.0
    %2153 = vmatprep.subr.mxu0 0.0
    %2154 = vmatpush2.msra.mxu0 0.0
    %2155 = vmatprep.subr.mxu0 0.0
    %2156 = vmatpush2.msra.mxu0 0.0
    %2157 = vmatprep.mubr.f32.mxu0 0.0
    %2158 = vmatmul.mubr.f32.gmra.mxu0 %v2091
    %v2159 = vpop.f32.mrf.mxu0
    %v2160 = vadd.f32 0.0, %v2159
    %v2161 = vpop.f32.mrf.mxu0
    %2162 = vdwg.mxu0
    %v2164 = vsel %vm334, %v1715, 0
    %2166 = vmatprep.subr.mxu0 0.0
    %2167 = vmatpush1.msra.mxu0 0.0
    %2168 = vmatprep.subr.mxu0 0.0
    %2169 = vmatpush1.msra.mxu0 0.0
    %2170 = vmatprep.subr.mxu0 0.0
    %2171 = vmatpush1.msra.mxu0 0.0
    %2172 = vmatprep.subr.mxu0 0.0
    %2173 = vmatpush1.msra.mxu0 0.0
    %2174 = vmatprep.subr.mxu0 0.0
    %2175 = vmatpush1.msra.mxu0 0.0
    %2176 = vmatprep.subr.mxu0 0.0
    %2177 = vmatpush1.msra.mxu0 0.0
    %2178 = vmatprep.subr.mxu0 0.0
    %2179 = vmatpush1.msra.mxu0 0.0
    %2180 = vmatprep.subr.mxu0 0.0
    %2181 = vmatpush1.msra.mxu0 0.0
    %2182 = vmatprep.subr.mxu0 0.0
    %2183 = vmatpush1.msra.mxu0 0.0
    %2184 = vmatprep.subr.mxu0 0.0
    %2185 = vmatpush1.msra.mxu0 0.0
    %2186 = vmatprep.subr.mxu0 0.0
    %2187 = vmatpush1.msra.mxu0 0.0
    %2188 = vmatprep.subr.mxu0 0.0
    %2189 = vmatpush1.msra.mxu0 0.0
    %2190 = vmatprep.subr.mxu0 0.0
    %2191 = vmatpush1.msra.mxu0 0.0
    %2192 = vmatprep.subr.mxu0 0.0
    %2193 = vmatpush1.msra.mxu0 0.0
    %2194 = vmatprep.subr.mxu0 0.0
    %2195 = vmatpush1.msra.mxu0 0.0
    %2196 = vmatprep.subr.mxu0 0.0
    %2197 = vmatpush1.msra.mxu0 %v303
    %2198 = vmatprep.subr.mxu0 0.0
    %2199 = vmatpush2.msra.mxu0 0.0
    %2200 = vmatprep.subr.mxu0 0.0
    %2201 = vmatpush2.msra.mxu0 0.0
    %2202 = vmatprep.subr.mxu0 0.0
    %2203 = vmatpush2.msra.mxu0 0.0
    %2204 = vmatprep.subr.mxu0 0.0
    %2205 = vmatpush2.msra.mxu0 0.0
    %2206 = vmatprep.subr.mxu0 0.0
    %2207 = vmatpush2.msra.mxu0 0.0
    %2208 = vmatprep.subr.mxu0 0.0
    %2209 = vmatpush2.msra.mxu0 0.0
    %2210 = vmatprep.subr.mxu0 0.0
    %2211 = vmatpush2.msra.mxu0 0.0
    %2212 = vmatprep.subr.mxu0 0.0
    %2213 = vmatpush2.msra.mxu0 0.0
    %2214 = vmatprep.subr.mxu0 0.0
    %2215 = vmatpush2.msra.mxu0 0.0
    %2216 = vmatprep.subr.mxu0 0.0
    %2217 = vmatpush2.msra.mxu0 0.0
    %2218 = vmatprep.subr.mxu0 0.0
    %2219 = vmatpush2.msra.mxu0 0.0
    %2220 = vmatprep.subr.mxu0 0.0
    %2221 = vmatpush2.msra.mxu0 0.0
    %2222 = vmatprep.subr.mxu0 0.0
    %2223 = vmatpush2.msra.mxu0 0.0
    %2224 = vmatprep.subr.mxu0 0.0
    %2225 = vmatpush2.msra.mxu0 0.0
    %2226 = vmatprep.subr.mxu0 0.0
    %2227 = vmatpush2.msra.mxu0 0.0
    %2228 = vmatprep.subr.mxu0 0.0
    %2229 = vmatpush2.msra.mxu0 0.0
    %2230 = vmatprep.mubr.f32.mxu0 0.0
    %2231 = vmatmul.mubr.f32.gmra.mxu0 %v2164
    %v2232 = vpop.f32.mrf.mxu0
    %v2233 = vadd.f32 0.0, %v2232
    %v2234 = vpop.f32.mrf.mxu0
    %2235 = vdwg.mxu0
    %v2237 = vsel %vm334, %v1716, 0
    %2239 = vmatprep.subr.mxu0 0.0
    %2240 = vmatpush1.msra.mxu0 0.0
    %2241 = vmatprep.subr.mxu0 0.0
    %2242 = vmatpush1.msra.mxu0 0.0
    %2243 = vmatprep.subr.mxu0 0.0
    %2244 = vmatpush1.msra.mxu0 0.0
    %2245 = vmatprep.subr.mxu0 0.0
    %2246 = vmatpush1.msra.mxu0 0.0
    %2247 = vmatprep.subr.mxu0 0.0
    %2248 = vmatpush1.msra.mxu0 0.0
    %2249 = vmatprep.subr.mxu0 0.0
    %2250 = vmatpush1.msra.mxu0 0.0
    %2251 = vmatprep.subr.mxu0 0.0
    %2252 = vmatpush1.msra.mxu0 0.0
    %2253 = vmatprep.subr.mxu0 0.0
    %2254 = vmatpush1.msra.mxu0 0.0
    %2255 = vmatprep.subr.mxu0 0.0
    %2256 = vmatpush1.msra.mxu0 0.0
    %2257 = vmatprep.subr.mxu0 0.0
    %2258 = vmatpush1.msra.mxu0 0.0
    %2259 = vmatprep.subr.mxu0 0.0
    %2260 = vmatpush1.msra.mxu0 0.0
    %2261 = vmatprep.subr.mxu0 0.0
    %2262 = vmatpush1.msra.mxu0 0.0
    %2263 = vmatprep.subr.mxu0 0.0
    %2264 = vmatpush1.msra.mxu0 0.0
    %2265 = vmatprep.subr.mxu0 0.0
    %2266 = vmatpush1.msra.mxu0 0.0
    %2267 = vmatprep.subr.mxu0 0.0
    %2268 = vmatpush1.msra.mxu0 0.0
    %2269 = vmatprep.subr.mxu0 0.0
    %2270 = vmatpush1.msra.mxu0 %v305
    %2271 = vmatprep.subr.mxu0 0.0
    %2272 = vmatpush2.msra.mxu0 0.0
    %2273 = vmatprep.subr.mxu0 0.0
    %2274 = vmatpush2.msra.mxu0 0.0
    %2275 = vmatprep.subr.mxu0 0.0
    %2276 = vmatpush2.msra.mxu0 0.0
    %2277 = vmatprep.subr.mxu0 0.0
    %2278 = vmatpush2.msra.mxu0 0.0
    %2279 = vmatprep.subr.mxu0 0.0
    %2280 = vmatpush2.msra.mxu0 0.0
    %2281 = vmatprep.subr.mxu0 0.0
    %2282 = vmatpush2.msra.mxu0 0.0
    %2283 = vmatprep.subr.mxu0 0.0
    %2284 = vmatpush2.msra.mxu0 0.0
    %2285 = vmatprep.subr.mxu0 0.0
    %2286 = vmatpush2.msra.mxu0 0.0
    %2287 = vmatprep.subr.mxu0 0.0
    %2288 = vmatpush2.msra.mxu0 0.0
    %2289 = vmatprep.subr.mxu0 0.0
    %2290 = vmatpush2.msra.mxu0 0.0
    %2291 = vmatprep.subr.mxu0 0.0
    %2292 = vmatpush2.msra.mxu0 0.0
    %2293 = vmatprep.subr.mxu0 0.0
    %2294 = vmatpush2.msra.mxu0 0.0
    %2295 = vmatprep.subr.mxu0 0.0
    %2296 = vmatpush2.msra.mxu0 0.0
    %2297 = vmatprep.subr.mxu0 0.0
    %2298 = vmatpush2.msra.mxu0 0.0
    %2299 = vmatprep.subr.mxu0 0.0
    %2300 = vmatpush2.msra.mxu0 0.0
    %2301 = vmatprep.subr.mxu0 0.0
    %2302 = vmatpush2.msra.mxu0 0.0
    %2303 = vmatprep.mubr.f32.mxu0 0.0
    %2304 = vmatmul.mubr.f32.gmra.mxu0 %v2237
    %v2305 = vpop.f32.mrf.mxu0
    %v2306 = vadd.f32 0.0, %v2305
    %v2307 = vpop.f32.mrf.mxu0
    %2308 = vdwg.mxu0
    %v2310 = vsel %vm334, %v1717, 0
    %2312 = vmatprep.subr.mxu0 0.0
    %2313 = vmatpush1.msra.mxu0 0.0
    %2314 = vmatprep.subr.mxu0 0.0
    %2315 = vmatpush1.msra.mxu0 0.0
    %2316 = vmatprep.subr.mxu0 0.0
    %2317 = vmatpush1.msra.mxu0 0.0
    %2318 = vmatprep.subr.mxu0 0.0
    %2319 = vmatpush1.msra.mxu0 0.0
    %2320 = vmatprep.subr.mxu0 0.0
    %2321 = vmatpush1.msra.mxu0 0.0
    %2322 = vmatprep.subr.mxu0 0.0
    %2323 = vmatpush1.msra.mxu0 0.0
    %2324 = vmatprep.subr.mxu0 0.0
    %2325 = vmatpush1.msra.mxu0 0.0
    %2326 = vmatprep.subr.mxu0 0.0
    %2327 = vmatpush1.msra.mxu0 0.0
    %2328 = vmatprep.subr.mxu0 0.0
    %2329 = vmatpush1.msra.mxu0 0.0
    %2330 = vmatprep.subr.mxu0 0.0
    %2331 = vmatpush1.msra.mxu0 0.0
    %2332 = vmatprep.subr.mxu0 0.0
    %2333 = vmatpush1.msra.mxu0 0.0
    %2334 = vmatprep.subr.mxu0 0.0
    %2335 = vmatpush1.msra.mxu0 0.0
    %2336 = vmatprep.subr.mxu0 0.0
    %2337 = vmatpush1.msra.mxu0 0.0
    %2338 = vmatprep.subr.mxu0 0.0
    %2339 = vmatpush1.msra.mxu0 0.0
    %2340 = vmatprep.subr.mxu0 0.0
    %2341 = vmatpush1.msra.mxu0 0.0
    %2342 = vmatprep.subr.mxu0 0.0
    %2343 = vmatpush1.msra.mxu0 %v309
    %2344 = vmatprep.subr.mxu0 0.0
    %2345 = vmatpush2.msra.mxu0 0.0
    %2346 = vmatprep.subr.mxu0 0.0
    %2347 = vmatpush2.msra.mxu0 0.0
    %2348 = vmatprep.subr.mxu0 0.0
    %2349 = vmatpush2.msra.mxu0 0.0
    %2350 = vmatprep.subr.mxu0 0.0
    %2351 = vmatpush2.msra.mxu0 0.0
    %2352 = vmatprep.subr.mxu0 0.0
    %2353 = vmatpush2.msra.mxu0 0.0
    %2354 = vmatprep.subr.mxu0 0.0
    %2355 = vmatpush2.msra.mxu0 0.0
    %2356 = vmatprep.subr.mxu0 0.0
    %2357 = vmatpush2.msra.mxu0 0.0
    %2358 = vmatprep.subr.mxu0 0.0
    %2359 = vmatpush2.msra.mxu0 0.0
    %2360 = vmatprep.subr.mxu0 0.0
    %2361 = vmatpush2.msra.mxu0 0.0
    %2362 = vmatprep.subr.mxu0 0.0
    %2363 = vmatpush2.msra.mxu0 0.0
    %2364 = vmatprep.subr.mxu0 0.0
    %2365 = vmatpush2.msra.mxu0 0.0
    %2366 = vmatprep.subr.mxu0 0.0
    %2367 = vmatpush2.msra.mxu0 0.0
    %2368 = vmatprep.subr.mxu0 0.0
    %2369 = vmatpush2.msra.mxu0 0.0
    %2370 = vmatprep.subr.mxu0 0.0
    %2371 = vmatpush2.msra.mxu0 0.0
    %2372 = vmatprep.subr.mxu0 0.0
    %2373 = vmatpush2.msra.mxu0 0.0
    %2374 = vmatprep.subr.mxu0 0.0
    %2375 = vmatpush2.msra.mxu0 0.0
    %2376 = vmatprep.mubr.f32.mxu0 0.0
    %2377 = vmatmul.mubr.f32.gmra.mxu0 %v2310
    %v2378 = vpop.f32.mrf.mxu0
    %v2379 = vadd.f32 0.0, %v2378
    %v2380 = vpop.f32.mrf.mxu0
    %2381 = vdwg.mxu0
    %v2383 = vsel %vm334, %v1718, 0
    %2385 = vmatprep.subr.mxu0 0.0
    %2386 = vmatpush1.msra.mxu0 0.0
    %2387 = vmatprep.subr.mxu0 0.0
    %2388 = vmatpush1.msra.mxu0 0.0
    %2389 = vmatprep.subr.mxu0 0.0
    %2390 = vmatpush1.msra.mxu0 0.0
    %2391 = vmatprep.subr.mxu0 0.0
    %2392 = vmatpush1.msra.mxu0 0.0
    %2393 = vmatprep.subr.mxu0 0.0
    %2394 = vmatpush1.msra.mxu0 0.0
    %2395 = vmatprep.subr.mxu0 0.0
    %2396 = vmatpush1.msra.mxu0 0.0
    %2397 = vmatprep.subr.mxu0 0.0
    %2398 = vmatpush1.msra.mxu0 0.0
    %2399 = vmatprep.subr.mxu0 0.0
    %2400 = vmatpush1.msra.mxu0 0.0
    %2401 = vmatprep.subr.mxu0 0.0
    %2402 = vmatpush1.msra.mxu0 0.0
    %2403 = vmatprep.subr.mxu0 0.0
    %2404 = vmatpush1.msra.mxu0 0.0
    %2405 = vmatprep.subr.mxu0 0.0
    %2406 = vmatpush1.msra.mxu0 0.0
    %2407 = vmatprep.subr.mxu0 0.0
    %2408 = vmatpush1.msra.mxu0 0.0
    %2409 = vmatprep.subr.mxu0 0.0
    %2410 = vmatpush1.msra.mxu0 0.0
    %2411 = vmatprep.subr.mxu0 0.0
    %2412 = vmatpush1.msra.mxu0 0.0
    %2413 = vmatprep.subr.mxu0 0.0
    %2414 = vmatpush1.msra.mxu0 0.0
    %2415 = vmatprep.subr.mxu0 0.0
    %2416 = vmatpush1.msra.mxu0 %v311
    %2417 = vmatprep.subr.mxu0 0.0
    %2418 = vmatpush2.msra.mxu0 0.0
    %2419 = vmatprep.subr.mxu0 0.0
    %2420 = vmatpush2.msra.mxu0 0.0
    %2421 = vmatprep.subr.mxu0 0.0
    %2422 = vmatpush2.msra.mxu0 0.0
    %2423 = vmatprep.subr.mxu0 0.0
    %2424 = vmatpush2.msra.mxu0 0.0
    %2425 = vmatprep.subr.mxu0 0.0
    %2426 = vmatpush2.msra.mxu0 0.0
    %2427 = vmatprep.subr.mxu0 0.0
    %2428 = vmatpush2.msra.mxu0 0.0
    %2429 = vmatprep.subr.mxu0 0.0
    %2430 = vmatpush2.msra.mxu0 0.0
    %2431 = vmatprep.subr.mxu0 0.0
    %2432 = vmatpush2.msra.mxu0 0.0
    %2433 = vmatprep.subr.mxu0 0.0
    %2434 = vmatpush2.msra.mxu0 0.0
    %2435 = vmatprep.subr.mxu0 0.0
    %2436 = vmatpush2.msra.mxu0 0.0
    %2437 = vmatprep.subr.mxu0 0.0
    %2438 = vmatpush2.msra.mxu0 0.0
    %2439 = vmatprep.subr.mxu0 0.0
    %2440 = vmatpush2.msra.mxu0 0.0
    %2441 = vmatprep.subr.mxu0 0.0
    %2442 = vmatpush2.msra.mxu0 0.0
    %2443 = vmatprep.subr.mxu0 0.0
    %2444 = vmatpush2.msra.mxu0 0.0
    %2445 = vmatprep.subr.mxu0 0.0
    %2446 = vmatpush2.msra.mxu0 0.0
    %2447 = vmatprep.subr.mxu0 0.0
    %2448 = vmatpush2.msra.mxu0 0.0
    %2449 = vmatprep.mubr.f32.mxu0 0.0
    %2450 = vmatmul.mubr.f32.gmra.mxu0 %v2383
    %v2451 = vpop.f32.mrf.mxu0
    %v2452 = vadd.f32 0.0, %v2451
    %v2453 = vpop.f32.mrf.mxu0
    %2454 = vdwg.mxu0
    %v2456 = vsel %vm334, %v1719, 0
    %2458 = vmatprep.subr.mxu0 0.0
    %2459 = vmatpush1.msra.mxu0 0.0
    %2460 = vmatprep.subr.mxu0 0.0
    %2461 = vmatpush1.msra.mxu0 0.0
    %2462 = vmatprep.subr.mxu0 0.0
    %2463 = vmatpush1.msra.mxu0 0.0
    %2464 = vmatprep.subr.mxu0 0.0
    %2465 = vmatpush1.msra.mxu0 0.0
    %2466 = vmatprep.subr.mxu0 0.0
    %2467 = vmatpush1.msra.mxu0 0.0
    %2468 = vmatprep.subr.mxu0 0.0
    %2469 = vmatpush1.msra.mxu0 0.0
    %2470 = vmatprep.subr.mxu0 0.0
    %2471 = vmatpush1.msra.mxu0 0.0
    %2472 = vmatprep.subr.mxu0 0.0
    %2473 = vmatpush1.msra.mxu0 0.0
    %2474 = vmatprep.subr.mxu0 0.0
    %2475 = vmatpush1.msra.mxu0 0.0
    %2476 = vmatprep.subr.mxu0 0.0
    %2477 = vmatpush1.msra.mxu0 0.0
    %2478 = vmatprep.subr.mxu0 0.0
    %2479 = vmatpush1.msra.mxu0 0.0
    %2480 = vmatprep.subr.mxu0 0.0
    %2481 = vmatpush1.msra.mxu0 0.0
    %2482 = vmatprep.subr.mxu0 0.0
    %2483 = vmatpush1.msra.mxu0 0.0
    %2484 = vmatprep.subr.mxu0 0.0
    %2485 = vmatpush1.msra.mxu0 0.0
    %2486 = vmatprep.subr.mxu0 0.0
    %2487 = vmatpush1.msra.mxu0 0.0
    %2488 = vmatprep.subr.mxu0 0.0
    %2489 = vmatpush1.msra.mxu0 %v315
    %2490 = vmatprep.subr.mxu0 0.0
    %2491 = vmatpush2.msra.mxu0 0.0
    %2492 = vmatprep.subr.mxu0 0.0
    %2493 = vmatpush2.msra.mxu0 0.0
    %2494 = vmatprep.subr.mxu0 0.0
    %2495 = vmatpush2.msra.mxu0 0.0
    %2496 = vmatprep.subr.mxu0 0.0
    %2497 = vmatpush2.msra.mxu0 0.0
    %2498 = vmatprep.subr.mxu0 0.0
    %2499 = vmatpush2.msra.mxu0 0.0
    %2500 = vmatprep.subr.mxu0 0.0
    %2501 = vmatpush2.msra.mxu0 0.0
    %2502 = vmatprep.subr.mxu0 0.0
    %2503 = vmatpush2.msra.mxu0 0.0
    %2504 = vmatprep.subr.mxu0 0.0
    %2505 = vmatpush2.msra.mxu0 0.0
    %2506 = vmatprep.subr.mxu0 0.0
    %2507 = vmatpush2.msra.mxu0 0.0
    %2508 = vmatprep.subr.mxu0 0.0
    %2509 = vmatpush2.msra.mxu0 0.0
    %2510 = vmatprep.subr.mxu0 0.0
    %2511 = vmatpush2.msra.mxu0 0.0
    %2512 = vmatprep.subr.mxu0 0.0
    %2513 = vmatpush2.msra.mxu0 0.0
    %2514 = vmatprep.subr.mxu0 0.0
    %2515 = vmatpush2.msra.mxu0 0.0
    %2516 = vmatprep.subr.mxu0 0.0
    %2517 = vmatpush2.msra.mxu0 0.0
    %2518 = vmatprep.subr.mxu0 0.0
    %2519 = vmatpush2.msra.mxu0 0.0
    %2520 = vmatprep.subr.mxu0 0.0
    %2521 = vmatpush2.msra.mxu0 0.0
    %2522 = vmatprep.mubr.f32.mxu0 0.0
    %2523 = vmatmul.mubr.f32.gmra.mxu0 %v2456
    %v2524 = vpop.f32.mrf.mxu0
    %v2525 = vadd.f32 0.0, %v2524
    %v2526 = vpop.f32.mrf.mxu0
    %2527 = vdwg.mxu0
    %v2529 = vsel %vm334, %v1720, 0
    %2531 = vmatprep.subr.mxu0 0.0
    %2532 = vmatpush1.msra.mxu0 0.0
    %2533 = vmatprep.subr.mxu0 0.0
    %2534 = vmatpush1.msra.mxu0 0.0
    %2535 = vmatprep.subr.mxu0 0.0
    %2536 = vmatpush1.msra.mxu0 0.0
    %2537 = vmatprep.subr.mxu0 0.0
    %2538 = vmatpush1.msra.mxu0 0.0
    %2539 = vmatprep.subr.mxu0 0.0
    %2540 = vmatpush1.msra.mxu0 0.0
    %2541 = vmatprep.subr.mxu0 0.0
    %2542 = vmatpush1.msra.mxu0 0.0
    %2543 = vmatprep.subr.mxu0 0.0
    %2544 = vmatpush1.msra.mxu0 0.0
    %2545 = vmatprep.subr.mxu0 0.0
    %2546 = vmatpush1.msra.mxu0 0.0
    %2547 = vmatprep.subr.mxu0 0.0
    %2548 = vmatpush1.msra.mxu0 0.0
    %2549 = vmatprep.subr.mxu0 0.0
    %2550 = vmatpush1.msra.mxu0 0.0
    %2551 = vmatprep.subr.mxu0 0.0
    %2552 = vmatpush1.msra.mxu0 0.0
    %2553 = vmatprep.subr.mxu0 0.0
    %2554 = vmatpush1.msra.mxu0 0.0
    %2555 = vmatprep.subr.mxu0 0.0
    %2556 = vmatpush1.msra.mxu0 0.0
    %2557 = vmatprep.subr.mxu0 0.0
    %2558 = vmatpush1.msra.mxu0 0.0
    %2559 = vmatprep.subr.mxu0 0.0
    %2560 = vmatpush1.msra.mxu0 0.0
    %2561 = vmatprep.subr.mxu0 0.0
    %2562 = vmatpush1.msra.mxu0 %v317
    %2563 = vmatprep.subr.mxu0 0.0
    %2564 = vmatpush2.msra.mxu0 0.0
    %2565 = vmatprep.subr.mxu0 0.0
    %2566 = vmatpush2.msra.mxu0 0.0
    %2567 = vmatprep.subr.mxu0 0.0
    %2568 = vmatpush2.msra.mxu0 0.0
    %2569 = vmatprep.subr.mxu0 0.0
    %2570 = vmatpush2.msra.mxu0 0.0
    %2571 = vmatprep.subr.mxu0 0.0
    %2572 = vmatpush2.msra.mxu0 0.0
    %2573 = vmatprep.subr.mxu0 0.0
    %2574 = vmatpush2.msra.mxu0 0.0
    %2575 = vmatprep.subr.mxu0 0.0
    %2576 = vmatpush2.msra.mxu0 0.0
    %2577 = vmatprep.subr.mxu0 0.0
    %2578 = vmatpush2.msra.mxu0 0.0
    %2579 = vmatprep.subr.mxu0 0.0
    %2580 = vmatpush2.msra.mxu0 0.0
    %2581 = vmatprep.subr.mxu0 0.0
    %2582 = vmatpush2.msra.mxu0 0.0
    %2583 = vmatprep.subr.mxu0 0.0
    %2584 = vmatpush2.msra.mxu0 0.0
    %2585 = vmatprep.subr.mxu0 0.0
    %2586 = vmatpush2.msra.mxu0 0.0
    %2587 = vmatprep.subr.mxu0 0.0
    %2588 = vmatpush2.msra.mxu0 0.0
    %2589 = vmatprep.subr.mxu0 0.0
    %2590 = vmatpush2.msra.mxu0 0.0
    %2591 = vmatprep.subr.mxu0 0.0
    %2592 = vmatpush2.msra.mxu0 0.0
    %2593 = vmatprep.subr.mxu0 0.0
    %2594 = vmatpush2.msra.mxu0 0.0
    %2595 = vmatprep.mubr.f32.mxu0 0.0
    %2596 = vmatmul.mubr.f32.gmra.mxu0 %v2529
    %v2597 = vpop.f32.mrf.mxu0
    %v2598 = vadd.f32 0.0, %v2597
    %v2599 = vpop.f32.mrf.mxu0
    %2600 = vdwg.mxu0
    %v2602 = vsel %vm334, %v1721, 0
    %2604 = vmatprep.subr.mxu0 0.0
    %2605 = vmatpush1.msra.mxu0 0.0
    %2606 = vmatprep.subr.mxu0 0.0
    %2607 = vmatpush1.msra.mxu0 0.0
    %2608 = vmatprep.subr.mxu0 0.0
    %2609 = vmatpush1.msra.mxu0 0.0
    %2610 = vmatprep.subr.mxu0 0.0
    %2611 = vmatpush1.msra.mxu0 0.0
    %2612 = vmatprep.subr.mxu0 0.0
    %2613 = vmatpush1.msra.mxu0 0.0
    %2614 = vmatprep.subr.mxu0 0.0
    %2615 = vmatpush1.msra.mxu0 0.0
    %2616 = vmatprep.subr.mxu0 0.0
    %2617 = vmatpush1.msra.mxu0 0.0
    %2618 = vmatprep.subr.mxu0 0.0
    %2619 = vmatpush1.msra.mxu0 0.0
    %2620 = vmatprep.subr.mxu0 0.0
    %2621 = vmatpush1.msra.mxu0 0.0
    %2622 = vmatprep.subr.mxu0 0.0
    %2623 = vmatpush1.msra.mxu0 0.0
    %2624 = vmatprep.subr.mxu0 0.0
    %2625 = vmatpush1.msra.mxu0 0.0
    %2626 = vmatprep.subr.mxu0 0.0
    %2627 = vmatpush1.msra.mxu0 0.0
    %2628 = vmatprep.subr.mxu0 0.0
    %2629 = vmatpush1.msra.mxu0 0.0
    %2630 = vmatprep.subr.mxu0 0.0
    %2631 = vmatpush1.msra.mxu0 0.0
    %2632 = vmatprep.subr.mxu0 0.0
    %2633 = vmatpush1.msra.mxu0 0.0
    %2634 = vmatprep.subr.mxu0 0.0
    %2635 = vmatpush1.msra.mxu0 %v321
    %2636 = vmatprep.subr.mxu0 0.0
    %2637 = vmatpush2.msra.mxu0 0.0
    %2638 = vmatprep.subr.mxu0 0.0
    %2639 = vmatpush2.msra.mxu0 0.0
    %2640 = vmatprep.subr.mxu0 0.0
    %2641 = vmatpush2.msra.mxu0 0.0
    %2642 = vmatprep.subr.mxu0 0.0
    %2643 = vmatpush2.msra.mxu0 0.0
    %2644 = vmatprep.subr.mxu0 0.0
    %2645 = vmatpush2.msra.mxu0 0.0
    %2646 = vmatprep.subr.mxu0 0.0
    %2647 = vmatpush2.msra.mxu0 0.0
    %2648 = vmatprep.subr.mxu0 0.0
    %2649 = vmatpush2.msra.mxu0 0.0
    %2650 = vmatprep.subr.mxu0 0.0
    %2651 = vmatpush2.msra.mxu0 0.0
    %2652 = vmatprep.subr.mxu0 0.0
    %2653 = vmatpush2.msra.mxu0 0.0
    %2654 = vmatprep.subr.mxu0 0.0
    %2655 = vmatpush2.msra.mxu0 0.0
    %2656 = vmatprep.subr.mxu0 0.0
    %2657 = vmatpush2.msra.mxu0 0.0
    %2658 = vmatprep.subr.mxu0 0.0
    %2659 = vmatpush2.msra.mxu0 0.0
    %2660 = vmatprep.subr.mxu0 0.0
    %2661 = vmatpush2.msra.mxu0 0.0
    %2662 = vmatprep.subr.mxu0 0.0
    %2663 = vmatpush2.msra.mxu0 0.0
    %2664 = vmatprep.subr.mxu0 0.0
    %2665 = vmatpush2.msra.mxu0 0.0
    %2666 = vmatprep.subr.mxu0 0.0
    %2667 = vmatpush2.msra.mxu0 0.0
    %2668 = vmatprep.mubr.f32.mxu0 0.0
    %2669 = vmatmul.mubr.f32.gmra.mxu0 %v2602
    %v2670 = vpop.f32.mrf.mxu0
    %v2671 = vadd.f32 0.0, %v2670
    %v2672 = vpop.f32.mrf.mxu0
    %2673 = vdwg.mxu0
    %v2675 = vsel %vm334, %v1722, 0
    %2677 = vmatprep.subr.mxu0 0.0
    %2678 = vmatpush1.msra.mxu0 0.0
    %2679 = vmatprep.subr.mxu0 0.0
    %2680 = vmatpush1.msra.mxu0 0.0
    %2681 = vmatprep.subr.mxu0 0.0
    %2682 = vmatpush1.msra.mxu0 0.0
    %2683 = vmatprep.subr.mxu0 0.0
    %2684 = vmatpush1.msra.mxu0 0.0
    %2685 = vmatprep.subr.mxu0 0.0
    %2686 = vmatpush1.msra.mxu0 0.0
    %2687 = vmatprep.subr.mxu0 0.0
    %2688 = vmatpush1.msra.mxu0 0.0
    %2689 = vmatprep.subr.mxu0 0.0
    %2690 = vmatpush1.msra.mxu0 0.0
    %2691 = vmatprep.subr.mxu0 0.0
    %2692 = vmatpush1.msra.mxu0 0.0
    %2693 = vmatprep.subr.mxu0 0.0
    %2694 = vmatpush1.msra.mxu0 0.0
    %2695 = vmatprep.subr.mxu0 0.0
    %2696 = vmatpush1.msra.mxu0 0.0
    %2697 = vmatprep.subr.mxu0 0.0
    %2698 = vmatpush1.msra.mxu0 0.0
    %2699 = vmatprep.subr.mxu0 0.0
    %2700 = vmatpush1.msra.mxu0 0.0
    %2701 = vmatprep.subr.mxu0 0.0
    %2702 = vmatpush1.msra.mxu0 0.0
    %2703 = vmatprep.subr.mxu0 0.0
    %2704 = vmatpush1.msra.mxu0 0.0
    %2705 = vmatprep.subr.mxu0 0.0
    %2706 = vmatpush1.msra.mxu0 0.0
    %2707 = vmatprep.subr.mxu0 0.0
    %2708 = vmatpush1.msra.mxu0 %v323
    %2709 = vmatprep.subr.mxu0 0.0
    %2710 = vmatpush2.msra.mxu0 0.0
    %2711 = vmatprep.subr.mxu0 0.0
    %2712 = vmatpush2.msra.mxu0 0.0
    %2713 = vmatprep.subr.mxu0 0.0
    %2714 = vmatpush2.msra.mxu0 0.0
    %2715 = vmatprep.subr.mxu0 0.0
    %2716 = vmatpush2.msra.mxu0 0.0
    %2717 = vmatprep.subr.mxu0 0.0
    %2718 = vmatpush2.msra.mxu0 0.0
    %2719 = vmatprep.subr.mxu0 0.0
    %2720 = vmatpush2.msra.mxu0 0.0
    %2721 = vmatprep.subr.mxu0 0.0
    %2722 = vmatpush2.msra.mxu0 0.0
    %2723 = vmatprep.subr.mxu0 0.0
    %2724 = vmatpush2.msra.mxu0 0.0
    %2725 = vmatprep.subr.mxu0 0.0
    %2726 = vmatpush2.msra.mxu0 0.0
    %2727 = vmatprep.subr.mxu0 0.0
    %2728 = vmatpush2.msra.mxu0 0.0
    %2729 = vmatprep.subr.mxu0 0.0
    %2730 = vmatpush2.msra.mxu0 0.0
    %2731 = vmatprep.subr.mxu0 0.0
    %2732 = vmatpush2.msra.mxu0 0.0
    %2733 = vmatprep.subr.mxu0 0.0
    %2734 = vmatpush2.msra.mxu0 0.0
    %2735 = vmatprep.subr.mxu0 0.0
    %2736 = vmatpush2.msra.mxu0 0.0
    %2737 = vmatprep.subr.mxu0 0.0
    %2738 = vmatpush2.msra.mxu0 0.0
    %2739 = vmatprep.subr.mxu0 0.0
    %2740 = vmatpush2.msra.mxu0 0.0
    %2741 = vmatprep.mubr.f32.mxu0 0.0
    %2742 = vmatmul.mubr.f32.gmra.mxu0 %v2675
    %v2743 = vpop.f32.mrf.mxu0
    %v2744 = vadd.f32 0.0, %v2743
    %v2745 = vpop.f32.mrf.mxu0
    %2746 = vdwg.mxu0
    %v2748 = vsel %vm334, %v1723, 0
    %2750 = vmatprep.subr.mxu0 0.0
    %2751 = vmatpush1.msra.mxu0 0.0
    %2752 = vmatprep.subr.mxu0 0.0
    %2753 = vmatpush1.msra.mxu0 0.0
    %2754 = vmatprep.subr.mxu0 0.0
    %2755 = vmatpush1.msra.mxu0 0.0
    %2756 = vmatprep.subr.mxu0 0.0
    %2757 = vmatpush1.msra.mxu0 0.0
    %2758 = vmatprep.subr.mxu0 0.0
    %2759 = vmatpush1.msra.mxu0 0.0
    %2760 = vmatprep.subr.mxu0 0.0
    %2761 = vmatpush1.msra.mxu0 0.0
    %2762 = vmatprep.subr.mxu0 0.0
    %2763 = vmatpush1.msra.mxu0 0.0
    %2764 = vmatprep.subr.mxu0 0.0
    %2765 = vmatpush1.msra.mxu0 0.0
    %2766 = vmatprep.subr.mxu0 0.0
    %2767 = vmatpush1.msra.mxu0 0.0
    %2768 = vmatprep.subr.mxu0 0.0
    %2769 = vmatpush1.msra.mxu0 0.0
    %2770 = vmatprep.subr.mxu0 0.0
    %2771 = vmatpush1.msra.mxu0 0.0
    %2772 = vmatprep.subr.mxu0 0.0
    %2773 = vmatpush1.msra.mxu0 0.0
    %2774 = vmatprep.subr.mxu0 0.0
    %2775 = vmatpush1.msra.mxu0 0.0
    %2776 = vmatprep.subr.mxu0 0.0
    %2777 = vmatpush1.msra.mxu0 0.0
    %2778 = vmatprep.subr.mxu0 0.0
    %2779 = vmatpush1.msra.mxu0 0.0
    %2780 = vmatprep.subr.mxu0 0.0
    %2781 = vmatpush1.msra.mxu0 %v327
    %2782 = vmatprep.subr.mxu0 0.0
    %2783 = vmatpush2.msra.mxu0 0.0
    %2784 = vmatprep.subr.mxu0 0.0
    %2785 = vmatpush2.msra.mxu0 0.0
    %2786 = vmatprep.subr.mxu0 0.0
    %2787 = vmatpush2.msra.mxu0 0.0
    %2788 = vmatprep.subr.mxu0 0.0
    %2789 = vmatpush2.msra.mxu0 0.0
    %2790 = vmatprep.subr.mxu0 0.0
    %2791 = vmatpush2.msra.mxu0 0.0
    %2792 = vmatprep.subr.mxu0 0.0
    %2793 = vmatpush2.msra.mxu0 0.0
    %2794 = vmatprep.subr.mxu0 0.0
    %2795 = vmatpush2.msra.mxu0 0.0
    %2796 = vmatprep.subr.mxu0 0.0
    %2797 = vmatpush2.msra.mxu0 0.0
    %2798 = vmatprep.subr.mxu0 0.0
    %2799 = vmatpush2.msra.mxu0 0.0
    %2800 = vmatprep.subr.mxu0 0.0
    %2801 = vmatpush2.msra.mxu0 0.0
    %2802 = vmatprep.subr.mxu0 0.0
    %2803 = vmatpush2.msra.mxu0 0.0
    %2804 = vmatprep.subr.mxu0 0.0
    %2805 = vmatpush2.msra.mxu0 0.0
    %2806 = vmatprep.subr.mxu0 0.0
    %2807 = vmatpush2.msra.mxu0 0.0
    %2808 = vmatprep.subr.mxu0 0.0
    %2809 = vmatpush2.msra.mxu0 0.0
    %2810 = vmatprep.subr.mxu0 0.0
    %2811 = vmatpush2.msra.mxu0 0.0
    %2812 = vmatprep.subr.mxu0 0.0
    %2813 = vmatpush2.msra.mxu0 0.0
    %2814 = vmatprep.mubr.f32.mxu0 0.0
    %2815 = vmatmul.mubr.f32.gmra.mxu0 %v2748
    %v2816 = vpop.f32.mrf.mxu0
    %v2817 = vadd.f32 0.0, %v2816
    %v2818 = vpop.f32.mrf.mxu0
    %2819 = vdwg.mxu0
    %v2821 = vsel %vm334, %v1724, 0
    %2823 = vmatprep.subr.mxu0 0.0
    %2824 = vmatpush1.msra.mxu0 0.0
    %2825 = vmatprep.subr.mxu0 0.0
    %2826 = vmatpush1.msra.mxu0 0.0
    %2827 = vmatprep.subr.mxu0 0.0
    %2828 = vmatpush1.msra.mxu0 0.0
    %2829 = vmatprep.subr.mxu0 0.0
    %2830 = vmatpush1.msra.mxu0 0.0
    %2831 = vmatprep.subr.mxu0 0.0
    %2832 = vmatpush1.msra.mxu0 0.0
    %2833 = vmatprep.subr.mxu0 0.0
    %2834 = vmatpush1.msra.mxu0 0.0
    %2835 = vmatprep.subr.mxu0 0.0
    %2836 = vmatpush1.msra.mxu0 0.0
    %2837 = vmatprep.subr.mxu0 0.0
    %2838 = vmatpush1.msra.mxu0 0.0
    %2839 = vmatprep.subr.mxu0 0.0
    %2840 = vmatpush1.msra.mxu0 0.0
    %2841 = vmatprep.subr.mxu0 0.0
    %2842 = vmatpush1.msra.mxu0 0.0
    %2843 = vmatprep.subr.mxu0 0.0
    %2844 = vmatpush1.msra.mxu0 0.0
    %2845 = vmatprep.subr.mxu0 0.0
    %2846 = vmatpush1.msra.mxu0 0.0
    %2847 = vmatprep.subr.mxu0 0.0
    %2848 = vmatpush1.msra.mxu0 0.0
    %2849 = vmatprep.subr.mxu0 0.0
    %2850 = vmatpush1.msra.mxu0 0.0
    %2851 = vmatprep.subr.mxu0 0.0
    %2852 = vmatpush1.msra.mxu0 0.0
    %2853 = vmatprep.subr.mxu0 0.0
    %2854 = vmatpush1.msra.mxu0 %v329
    %2855 = vmatprep.subr.mxu0 0.0
    %2856 = vmatpush2.msra.mxu0 0.0
    %2857 = vmatprep.subr.mxu0 0.0
    %2858 = vmatpush2.msra.mxu0 0.0
    %2859 = vmatprep.subr.mxu0 0.0
    %2860 = vmatpush2.msra.mxu0 0.0
    %2861 = vmatprep.subr.mxu0 0.0
    %2862 = vmatpush2.msra.mxu0 0.0
    %2863 = vmatprep.subr.mxu0 0.0
    %2864 = vmatpush2.msra.mxu0 0.0
    %2865 = vmatprep.subr.mxu0 0.0
    %2866 = vmatpush2.msra.mxu0 0.0
    %2867 = vmatprep.subr.mxu0 0.0
    %2868 = vmatpush2.msra.mxu0 0.0
    %2869 = vmatprep.subr.mxu0 0.0
    %2870 = vmatpush2.msra.mxu0 0.0
    %2871 = vmatprep.subr.mxu0 0.0
    %2872 = vmatpush2.msra.mxu0 0.0
    %2873 = vmatprep.subr.mxu0 0.0
    %2874 = vmatpush2.msra.mxu0 0.0
    %2875 = vmatprep.subr.mxu0 0.0
    %2876 = vmatpush2.msra.mxu0 0.0
    %2877 = vmatprep.subr.mxu0 0.0
    %2878 = vmatpush2.msra.mxu0 0.0
    %2879 = vmatprep.subr.mxu0 0.0
    %2880 = vmatpush2.msra.mxu0 0.0
    %2881 = vmatprep.subr.mxu0 0.0
    %2882 = vmatpush2.msra.mxu0 0.0
    %2883 = vmatprep.subr.mxu0 0.0
    %2884 = vmatpush2.msra.mxu0 0.0
    %2885 = vmatprep.subr.mxu0 0.0
    %2886 = vmatpush2.msra.mxu0 0.0
    %2887 = vmatprep.mubr.f32.mxu0 0.0
    %2888 = vmatmul.mubr.f32.gmra.mxu0 %v2821
    %v2889 = vpop.f32.mrf.mxu0
    %v2890 = vadd.f32 0.0, %v2889
    %v2891 = vpop.f32.mrf.mxu0
    %2892 = vdwg.mxu0
    %2895 = vrot.lane.b32.xlu0 %v1941, 8
    %v2896 = vpop.permute.xlu0 %2895
    %2897 = vrot.lane.b32.xlu0 %v2014, 8
    %v2898 = vpop.permute.xlu0 %2897
    %2903 = vrot.lane.b32.xlu0 %v2087, 16
    %v2904 = vpop.permute.xlu0 %2903
    %2905 = vrot.lane.b32.xlu0 %v2160, 16
    %v2906 = vpop.permute.xlu0 %2905
    %2911 = vrot.lane.b32.xlu0 %v2233, 24
    %v2912 = vpop.permute.xlu0 %2911
    %2913 = vrot.lane.b32.xlu0 %v2306, 24
    %v2914 = vpop.permute.xlu0 %2913
    %2919 = vrot.lane.b32.xlu0 %v2379, 32
    %v2920 = vpop.permute.xlu0 %2919
    %2921 = vrot.lane.b32.xlu0 %v2452, 32
    %v2922 = vpop.permute.xlu0 %2921
    %2927 = vrot.lane.b32.xlu0 %v2525, 40
    %v2928 = vpop.permute.xlu0 %2927
    %2929 = vrot.lane.b32.xlu0 %v2598, 40
    %v2930 = vpop.permute.xlu0 %2929
    %2935 = vrot.lane.b32.xlu0 %v2671, 48
    %v2936 = vpop.permute.xlu0 %2935
    %2937 = vrot.lane.b32.xlu0 %v2744, 48
    %v2938 = vpop.permute.xlu0 %2937
    %2943 = vrot.lane.b32.xlu0 %v2817, 56
    %v2944 = vpop.permute.xlu0 %2943
    %2945 = vrot.lane.b32.xlu0 %v2890, 56
    %v2946 = vpop.permute.xlu0 %2945
    %v2949 = vsel %vm334, %v1795, %v2896
    %v2950 = vsel %vm334, %v1868, %v2898
    %vm2951 = vcmask 130048
    %v2952 = vsel %vm2951, %v2949, %v2904
    %v2953 = vsel %vm2951, %v2950, %v2906
    %vm2954 = vcmask 195584
    %v2955 = vsel %vm2954, %v2952, %v2912
    %v2956 = vsel %vm2954, %v2953, %v2914
    %vm2957 = vcmask 261120
    %v2958 = vsel %vm2957, %v2955, %v2920
    %v2959 = vsel %vm2957, %v2956, %v2922
    %vm2960 = vcmask 326656
    %v2961 = vsel %vm2960, %v2958, %v2928
    %v2962 = vsel %vm2960, %v2959, %v2930
    %vm2963 = vcmask 392192
    %v2964 = vsel %vm2963, %v2961, %v2936
    %v2965 = vsel %vm2963, %v2962, %v2938
    %vm2966 = vcmask 457728
    %v2967 = vsel %vm2966, %v2964, %v2944
    %v2968 = vsel %vm2966, %v2965, %v2946
    %v2969 = vld [vmem:[#allocation7] sm:$0xff]
    %v2970 = vld [vmem:[#allocation7 + $0x8] sm:$0xff]
    %v2971 = vld [vmem:[#allocation7 + $0x10] sm:$0xff]
    %v2972 = vld [vmem:[#allocation7 + $0x18] sm:$0xff]
    %v2973 = vld [vmem:[#allocation7 + $0x20] sm:$0xff]
    %v2974 = vld [vmem:[#allocation7 + $0x28] sm:$0xff]
    %v2975 = vld [vmem:[#allocation7 + $0x30] sm:$0xff]
    %v2976 = vld [vmem:[#allocation7 + $0x38] sm:$0xff]
    %v2977 = vld [vmem:[%s4] sm:$0x1]
    %v2979 = vlaneseq
    %v2980 = vshrl.u32 %v2979, 7
    %v2981 = vsub.s32 0, %v2980
    %v2982 = vrot.slane %v2977, %v2981
    %v2985 = vsel %vm144, %v2967, 0
    %v2988 = vsel %vm144, %v2968, 0
    %2990 = vmatprep.subr.mxu0 0.0
    %2991 = vmatpush1.msra.mxu0 0.0
    %2992 = vmatprep.subr.mxu0 0.0
    %2993 = vmatpush1.msra.mxu0 0.0
    %2994 = vmatprep.subr.mxu0 0.0
    %2995 = vmatpush1.msra.mxu0 0.0
    %2996 = vmatprep.subr.mxu0 0.0
    %2997 = vmatpush1.msra.mxu0 0.0
    %2998 = vmatprep.subr.mxu0 0.0
    %2999 = vmatpush1.msra.mxu0 0.0
    %3000 = vmatprep.subr.mxu0 0.0
    %3001 = vmatpush1.msra.mxu0 0.0
    %3002 = vmatprep.subr.mxu0 0.0
    %3003 = vmatpush1.msra.mxu0 0.0
    %3004 = vmatprep.subr.mxu0 0.0
    %3005 = vmatpush1.msra.mxu0 0.0
    %3006 = vmatprep.subr.mxu0 0.0
    %3007 = vmatpush1.msra.mxu0 %v2976
    %3008 = vmatprep.subr.mxu0 0.0
    %3009 = vmatpush1.msra.mxu0 %v2975
    %3010 = vmatprep.subr.mxu0 0.0
    %3011 = vmatpush1.msra.mxu0 %v2974
    %3012 = vmatprep.subr.mxu0 0.0
    %3013 = vmatpush1.msra.mxu0 %v2973
    %3014 = vmatprep.subr.mxu0 0.0
    %3015 = vmatpush1.msra.mxu0 %v2972
    %3016 = vmatprep.subr.mxu0 0.0
    %3017 = vmatpush1.msra.mxu0 %v2971
    %3018 = vmatprep.subr.mxu0 0.0
    %3019 = vmatpush1.msra.mxu0 %v2970
    %3020 = vmatprep.subr.mxu0 0.0
    %3021 = vmatpush1.msra.mxu0 %v2969
    %3022 = vmatprep.subr.mxu0 0.0
    %3023 = vmatpush2.msra.mxu0 0.0
    %3024 = vmatprep.subr.mxu0 0.0
    %3025 = vmatpush2.msra.mxu0 0.0
    %3026 = vmatprep.subr.mxu0 0.0
    %3027 = vmatpush2.msra.mxu0 0.0
    %3028 = vmatprep.subr.mxu0 0.0
    %3029 = vmatpush2.msra.mxu0 0.0
    %3030 = vmatprep.subr.mxu0 0.0
    %3031 = vmatpush2.msra.mxu0 0.0
    %3032 = vmatprep.subr.mxu0 0.0
    %3033 = vmatpush2.msra.mxu0 0.0
    %3034 = vmatprep.subr.mxu0 0.0
    %3035 = vmatpush2.msra.mxu0 0.0
    %3036 = vmatprep.subr.mxu0 0.0
    %3037 = vmatpush2.msra.mxu0 0.0
    %3038 = vmatprep.subr.mxu0 0.0
    %3039 = vmatpush2.msra.mxu0 0.0
    %3040 = vmatprep.subr.mxu0 0.0
    %3041 = vmatpush2.msra.mxu0 0.0
    %3042 = vmatprep.subr.mxu0 0.0
    %3043 = vmatpush2.msra.mxu0 0.0
    %3044 = vmatprep.subr.mxu0 0.0
    %3045 = vmatpush2.msra.mxu0 0.0
    %3046 = vmatprep.subr.mxu0 0.0
    %3047 = vmatpush2.msra.mxu0 0.0
    %3048 = vmatprep.subr.mxu0 0.0
    %3049 = vmatpush2.msra.mxu0 0.0
    %3050 = vmatprep.subr.mxu0 0.0
    %3051 = vmatpush2.msra.mxu0 0.0
    %3052 = vmatprep.subr.mxu0 0.0
    %3053 = vmatpush2.msra.mxu0 0.0
    %3054 = vmatprep.mubr.f32.mxu0 0.0
    %3055 = vmatmul.mubr.f32.gmra.mxu0 %v2985
    %v3056 = vpop.f32.mrf.mxu0
    %v3057 = vadd.f32 %v2982, %v3056
    %v3058 = vpop.f32.mrf.mxu0
    %3059 = vmatprep.mubr.f32.mxu0 0.0
    %3060 = vmatmul.mubr.f32.gmra.mxu0 %v2988
    %v3061 = vpop.f32.mrf.mxu0
    %v3062 = vadd.f32 %v2982, %v3061
    %v3063 = vpop.f32.mrf.mxu0
    %3064 = vdwg.mxu0
    %v3065 = vadd.f32 %v111, %v3057
    %v3066 = vadd.f32 %v114, %v3062
    %v3067 = vld [vmem:[%s5] sm:$0x1]
    %v3068 = vld [vmem:[%s6] sm:$0x1]
    %v3069 = vsel %vm144, %v3065, 0.0
    %v3070 = vsel %vm144, %v3066, 0.0
    %v3071 = vadd.f32 %v3069, %v3070
    %v3072 = vrot.slane %v3071, 4
    %v3073 = vadd.f32 %v3071, %v3072
    %v3074 = vrot.slane %v3073, 2
    %v3075 = vadd.f32 %v3073, %v3074
    %v3076 = vrot.slane %v3075, 1
    %v3077 = vadd.f32 %v3075, %v3076
    %v3078 = vrcp.pop 16.0
    %v3079 = vmul.f32 %v3077, %v3078
    %v3080 = vsub.f32 %v3065, %v3079
    %v3081 = vsub.f32 %v3066, %v3079
    %v3082 = vmul.f32 %v3080, %v3080
    %v3083 = vmul.f32 %v3081, %v3081
    %v3084 = vsel %vm144, %v3082, 0.0
    %v3085 = vsel %vm144, %v3083, 0.0
    %v3086 = vadd.f32 %v3084, %v3085
    %v3087 = vrot.slane %v3086, 4
    %v3088 = vadd.f32 %v3086, %v3087
    %v3089 = vrot.slane %v3088, 2
    %v3090 = vadd.f32 %v3088, %v3089
    %v3091 = vrot.slane %v3090, 1
    %v3092 = vadd.f32 %v3090, %v3091
    %v3093 = vmul.f32 %v3092, %v3078
    %v3094 = vadd.f32 %v3093, 1e-05
    %v3095 = vrsqrt.pop %v3094
    %v3096 = vmul.f32 %v3095, %v3067
    %v3097 = vlaneseq
    %v3098 = vshrl.u32 %v3097, 7
    %v3099 = vsub.s32 0, %v3098
    %v3100 = vrot.slane %v3096, %v3099
    %v3101 = vmul.f32 %v3080, %v3100
    %v3102 = vmul.f32 %v3081, %v3100
    %v3104 = vlaneseq
    %v3105 = vshrl.u32 %v3104, 7
    %v3106 = vsub.s32 0, %v3105
    %v3107 = vrot.slane %v3068, %v3106
    %v3109 = vadd.f32 %v3101, %v3107
    %v3110 = vadd.f32 %v3102, %v3107
    %v3111 = vld [vmem:[#allocation8] sm:$0xff]
    %v3112 = vld [vmem:[#allocation8 + $0x8] sm:$0xff]
    %v3113 = vld [vmem:[#allocation8 + $0x10] sm:$0xff]
    %v3114 = vld [vmem:[#allocation8 + $0x18] sm:$0xff]
    %v3115 = vld [vmem:[#allocation8 + $0x20] sm:$0xff]
    %v3116 = vld [vmem:[#allocation8 + $0x28] sm:$0xff]
    %v3117 = vld [vmem:[#allocation8 + $0x30] sm:$0xff]
    %v3118 = vld [vmem:[#allocation8 + $0x38] sm:$0xff]
    %v3119 = vld [vmem:[%s8] sm:$0x1]
    %v3121 = vlaneseq
    %v3122 = vshrl.u32 %v3121, 7
    %v3123 = vsub.s32 0, %v3122
    %v3124 = vrot.slane %v3119, %v3123
    %v3127 = vsel %vm144, %v3109, 0
    %v3130 = vsel %vm144, %v3110, 0
    %3132 = vmatprep.subr.mxu0 0.0
    %3133 = vmatpush1.msra.mxu0 0.0
    %3134 = vmatprep.subr.mxu0 0.0
    %3135 = vmatpush1.msra.mxu0 0.0
    %3136 = vmatprep.subr.mxu0 0.0
    %3137 = vmatpush1.msra.mxu0 0.0
    %3138 = vmatprep.subr.mxu0 0.0
    %3139 = vmatpush1.msra.mxu0 0.0
    %3140 = vmatprep.subr.mxu0 0.0
    %3141 = vmatpush1.msra.mxu0 0.0
    %3142 = vmatprep.subr.mxu0 0.0
    %3143 = vmatpush1.msra.mxu0 0.0
    %3144 = vmatprep.subr.mxu0 0.0
    %3145 = vmatpush1.msra.mxu0 0.0
    %3146 = vmatprep.subr.mxu0 0.0
    %3147 = vmatpush1.msra.mxu0 0.0
    %3148 = vmatprep.subr.mxu0 0.0
    %3149 = vmatpush1.msra.mxu0 %v3118
    %3150 = vmatprep.subr.mxu0 0.0
    %3151 = vmatpush1.msra.mxu0 %v3117
    %3152 = vmatprep.subr.mxu0 0.0
    %3153 = vmatpush1.msra.mxu0 %v3116
    %3154 = vmatprep.subr.mxu0 0.0
    %3155 = vmatpush1.msra.mxu0 %v3115
    %3156 = vmatprep.subr.mxu0 0.0
    %3157 = vmatpush1.msra.mxu0 %v3114
    %3158 = vmatprep.subr.mxu0 0.0
    %3159 = vmatpush1.msra.mxu0 %v3113
    %3160 = vmatprep.subr.mxu0 0.0
    %3161 = vmatpush1.msra.mxu0 %v3112
    %3162 = vmatprep.subr.mxu0 0.0
    %3163 = vmatpush1.msra.mxu0 %v3111
    %3164 = vmatprep.subr.mxu0 0.0
    %3165 = vmatpush2.msra.mxu0 0.0
    %3166 = vmatprep.subr.mxu0 0.0
    %3167 = vmatpush2.msra.mxu0 0.0
    %3168 = vmatprep.subr.mxu0 0.0
    %3169 = vmatpush2.msra.mxu0 0.0
    %3170 = vmatprep.subr.mxu0 0.0
    %3171 = vmatpush2.msra.mxu0 0.0
    %3172 = vmatprep.subr.mxu0 0.0
    %3173 = vmatpush2.msra.mxu0 0.0
    %3174 = vmatprep.subr.mxu0 0.0
    %3175 = vmatpush2.msra.mxu0 0.0
    %3176 = vmatprep.subr.mxu0 0.0
    %3177 = vmatpush2.msra.mxu0 0.0
    %3178 = vmatprep.subr.mxu0 0.0
    %3179 = vmatpush2.msra.mxu0 0.0
    %3180 = vmatprep.subr.mxu0 0.0
    %3181 = vmatpush2.msra.mxu0 0.0
    %3182 = vmatprep.subr.mxu0 0.0
    %3183 = vmatpush2.msra.mxu0 0.0
    %3184 = vmatprep.subr.mxu0 0.0
    %3185 = vmatpush2.msra.mxu0 0.0
    %3186 = vmatprep.subr.mxu0 0.0
    %3187 = vmatpush2.msra.mxu0 0.0
    %3188 = vmatprep.subr.mxu0 0.0
    %3189 = vmatpush2.msra.mxu0 0.0
    %3190 = vmatprep.subr.mxu0 0.0
    %3191 = vmatpush2.msra.mxu0 0.0
    %3192 = vmatprep.subr.mxu0 0.0
    %3193 = vmatpush2.msra.mxu0 0.0
    %3194 = vmatprep.subr.mxu0 0.0
    %3195 = vmatpush2.msra.mxu0 0.0
    %3196 = vmatprep.mubr.f32.mxu0 0.0
    %3197 = vmatmul.mubr.f32.gmra.mxu0 %v3127
    %v3198 = vpop.f32.mrf.mxu0
    %v3199 = vadd.f32 %v3124, %v3198
    %v3200 = vpop.f32.mrf.mxu0
    %3201 = vmatprep.mubr.f32.mxu0 0.0
    %3202 = vmatmul.mubr.f32.gmra.mxu0 %v3130
    %v3203 = vpop.f32.mrf.mxu0
    %v3204 = vadd.f32 %v3124, %v3203
    %v3205 = vpop.f32.mrf.mxu0
    %3206 = vdwg.mxu0
    %v3207 = vmax.f32 %v3199, 0.0
    %v3208 = vmax.f32 %v3204, 0.0
    %v3209 = vld [vmem:[#allocation10] sm:$0xff]
    %v3210 = vld [vmem:[#allocation10 + $0x8] sm:$0xff]
    %v3211 = vld [vmem:[#allocation10 + $0x10] sm:$0xff]
    %v3212 = vld [vmem:[#allocation10 + $0x18] sm:$0xff]
    %v3213 = vld [vmem:[#allocation10 + $0x20] sm:$0xff]
    %v3214 = vld [vmem:[#allocation10 + $0x28] sm:$0xff]
    %v3215 = vld [vmem:[#allocation10 + $0x30] sm:$0xff]
    %v3216 = vld [vmem:[#allocation10 + $0x38] sm:$0xff]
    %v3217 = vld [vmem:[%s10] sm:$0x1]
    %v3219 = vlaneseq
    %v3220 = vshrl.u32 %v3219, 7
    %v3221 = vsub.s32 0, %v3220
    %v3222 = vrot.slane %v3217, %v3221
    %v3225 = vsel %vm144, %v3207, 0
    %v3228 = vsel %vm144, %v3208, 0
    %3230 = vmatprep.subr.mxu0 0.0
    %3231 = vmatpush1.msra.mxu0 0.0
    %3232 = vmatprep.subr.mxu0 0.0
    %3233 = vmatpush1.msra.mxu0 0.0
    %3234 = vmatprep.subr.mxu0 0.0
    %3235 = vmatpush1.msra.mxu0 0.0
    %3236 = vmatprep.subr.mxu0 0.0
    %3237 = vmatpush1.msra.mxu0 0.0
    %3238 = vmatprep.subr.mxu0 0.0
    %3239 = vmatpush1.msra.mxu0 0.0
    %3240 = vmatprep.subr.mxu0 0.0
    %3241 = vmatpush1.msra.mxu0 0.0
    %3242 = vmatprep.subr.mxu0 0.0
    %3243 = vmatpush1.msra.mxu0 0.0
    %3244 = vmatprep.subr.mxu0 0.0
    %3245 = vmatpush1.msra.mxu0 0.0
    %3246 = vmatprep.subr.mxu0 0.0
    %3247 = vmatpush1.msra.mxu0 %v3216
    %3248 = vmatprep.subr.mxu0 0.0
    %3249 = vmatpush1.msra.mxu0 %v3215
    %3250 = vmatprep.subr.mxu0 0.0
    %3251 = vmatpush1.msra.mxu0 %v3214
    %3252 = vmatprep.subr.mxu0 0.0
    %3253 = vmatpush1.msra.mxu0 %v3213
    %3254 = vmatprep.subr.mxu0 0.0
    %3255 = vmatpush1.msra.mxu0 %v3212
    %3256 = vmatprep.subr.mxu0 0.0
    %3257 = vmatpush1.msra.mxu0 %v3211
    %3258 = vmatprep.subr.mxu0 0.0
    %3259 = vmatpush1.msra.mxu0 %v3210
    %3260 = vmatprep.subr.mxu0 0.0
    %3261 = vmatpush1.msra.mxu0 %v3209
    %3262 = vmatprep.subr.mxu0 0.0
    %3263 = vmatpush2.msra.mxu0 0.0
    %3264 = vmatprep.subr.mxu0 0.0
    %3265 = vmatpush2.msra.mxu0 0.0
    %3266 = vmatprep.subr.mxu0 0.0
    %3267 = vmatpush2.msra.mxu0 0.0
    %3268 = vmatprep.subr.mxu0 0.0
    %3269 = vmatpush2.msra.mxu0 0.0
    %3270 = vmatprep.subr.mxu0 0.0
    %3271 = vmatpush2.msra.mxu0 0.0
    %3272 = vmatprep.subr.mxu0 0.0
    %3273 = vmatpush2.msra.mxu0 0.0
    %3274 = vmatprep.subr.mxu0 0.0
    %3275 = vmatpush2.msra.mxu0 0.0
    %3276 = vmatprep.subr.mxu0 0.0
    %3277 = vmatpush2.msra.mxu0 0.0
    %3278 = vmatprep.subr.mxu0 0.0
    %3279 = vmatpush2.msra.mxu0 0.0
    %3280 = vmatprep.subr.mxu0 0.0
    %3281 = vmatpush2.msra.mxu0 0.0
    %3282 = vmatprep.subr.mxu0 0.0
    %3283 = vmatpush2.msra.mxu0 0.0
    %3284 = vmatprep.subr.mxu0 0.0
    %3285 = vmatpush2.msra.mxu0 0.0
    %3286 = vmatprep.subr.mxu0 0.0
    %3287 = vmatpush2.msra.mxu0 0.0
    %3288 = vmatprep.subr.mxu0 0.0
    %3289 = vmatpush2.msra.mxu0 0.0
    %3290 = vmatprep.subr.mxu0 0.0
    %3291 = vmatpush2.msra.mxu0 0.0
    %3292 = vmatprep.subr.mxu0 0.0
    %3293 = vmatpush2.msra.mxu0 0.0
    %3294 = vmatprep.mubr.f32.mxu0 0.0
    %3295 = vmatmul.mubr.f32.gmra.mxu0 %v3225
    %v3296 = vpop.f32.mrf.mxu0
    %v3297 = vadd.f32 %v3222, %v3296
    %v3298 = vpop.f32.mrf.mxu0
    %3299 = vmatprep.mubr.f32.mxu0 0.0
    %3300 = vmatmul.mubr.f32.gmra.mxu0 %v3228
    %v3301 = vpop.f32.mrf.mxu0
    %v3302 = vadd.f32 %v3222, %v3301
    %v3303 = vpop.f32.mrf.mxu0
    %3304 = vdwg.mxu0
    %v3305 = vadd.f32 %v3109, %v3297
    %v3306 = vadd.f32 %v3110, %v3302
    %v3307 = vld [vmem:[%s11] sm:$0x1]
    %v3308 = vld [vmem:[%s12] sm:$0x1]
    %v3309 = vsel %vm144, %v3305, 0.0
    %v3310 = vsel %vm144, %v3306, 0.0
    %v3311 = vadd.f32 %v3309, %v3310
    %v3312 = vrot.slane %v3311, 4
    %v3313 = vadd.f32 %v3311, %v3312
    %v3314 = vrot.slane %v3313, 2
    %v3315 = vadd.f32 %v3313, %v3314
    %v3316 = vrot.slane %v3315, 1
    %v3317 = vadd.f32 %v3315, %v3316
    %v3318 = vmul.f32 %v3317, %v3078
    %v3319 = vsub.f32 %v3305, %v3318
    %v3320 = vsub.f32 %v3306, %v3318
    %v3321 = vmul.f32 %v3319, %v3319
    %v3322 = vmul.f32 %v3320, %v3320
    %v3323 = vsel %vm144, %v3321, 0.0
    %v3324 = vsel %vm144, %v3322, 0.0
    %v3325 = vadd.f32 %v3323, %v3324
    %v3326 = vrot.slane %v3325, 4
    %v3327 = vadd.f32 %v3325, %v3326
    %v3328 = vrot.slane %v3327, 2
    %v3329 = vadd.f32 %v3327, %v3328
    %v3330 = vrot.slane %v3329, 1
    %v3331 = vadd.f32 %v3329, %v3330
    %v3332 = vmul.f32 %v3331, %v3078
    %v3333 = vadd.f32 %v3332, 1e-05
    %v3334 = vrsqrt.pop %v3333
    %v3335 = vmul.f32 %v3334, %v3307
    %v3336 = vlaneseq
    %v3337 = vshrl.u32 %v3336, 7
    %v3338 = vsub.s32 0, %v3337
    %v3339 = vrot.slane %v3335, %v3338
    %v3340 = vmul.f32 %v3319, %v3339
    %v3341 = vmul.f32 %v3320, %v3339
    %v3343 = vlaneseq
    %v3344 = vshrl.u32 %v3343, 7
    %v3345 = vsub.s32 0, %v3344
    %v3346 = vrot.slane %v3308, %v3345
    %v3348 = vadd.f32 %v3340, %v3346
    %v3349 = vadd.f32 %v3341, %v3346
    %3351 = vrot.lane.b32.xlu0 %v3349, 64
    %v3352 = vpop.permute.xlu0 %3351
    %v3354 = vsel %vm144, %v3348, %v3352
    %3355 = vst [vmem:[#allocation11] sm:$0xff] %v3354
    // Predicated region
    $region74: #{tpu_custom_call.1} parent=1 // pred_check
      _
    $region75: #{tpu_custom_call.1} parent=1 // pred_check_branch
      %3357 = sbr.rel (0) target = $region77
    $region76: #{tpu_custom_call.1} parent=1 // pred_region
      %s3359 = ssub.s32 128, 128
      %3360 = vsyncadd [#allocation4], %s3359
      %s3362 = sshll.u32 [#allocation11], 4
      %s3363 = int_to_ptr.vmem [resolvable:$true] %s3362
      %3365 = dma.vmem_to_hbm [thread:$0]  %s3363, 128, %s13, [#allocation4]
    $region77: #{tpu_custom_call.1} parent=1 // pred_fallthru
      _
    // Predicated region
    $region78: #{tpu_custom_call.1} parent=1 // pred_check
      _
    $region79: #{tpu_custom_call.1} parent=1 // pred_check_branch
      %3367 = sbr.rel (0) target = $region81
    $region80: #{tpu_custom_call.1} parent=1 // pred_region
      %3368 = dma.done [#allocation4], 128
    $region81: #{tpu_custom_call.1} parent=1 // pred_fallthru
      _
    %3369 = vsyncpa [#allocation3], 1
    %3370 = vsyncpa [#allocation6], 1
    %3371 = vsyncpa [#allocation9], 1
    %3372 = vsyncpa [#allocation4], 1

</llo_original>
